<compile_context>
chip_gen: v7x
topology: tpu7x:2x2x1
jax: 0.10.0
libtpu: 0.0.40
codegen_flags: <defaults>
</compile_context>

<pallas_src>
import functools

import jax
import jax.numpy as jnp
from jax.experimental import pallas as pl
from jax.experimental.pallas import tpu as pltpu

_BN_EPS = 1e-5

_CPARAMS = pltpu.CompilerParams(
    dimension_semantics=("parallel",),
    vmem_limit_bytes=32 * 1024 * 1024,
)


# ----------------------------- Pallas kernels -----------------------------

def _conv_bn_relu_kernel(xph_ref, w_ref, s_ref, b_ref, o_ref, acc_ref,
                         *, stride, Ho, Wo, Wc_in, Wc_out):
    """3x3 conv (stride via host phase decomposition) + folded BN + ReLU.

    xph_ref : (stride*stride, Hc*Wc_in, Cin)  flattened phase planes of the padded input
    w_ref   : (9, Cin, Np)                    per-tap weight matrices (bf16)
    s_ref/b_ref : (1, Np)                     folded BN scale / bias (f32)
    o_ref   : (1, (Ho+3)*Wc_out, Np)          conv output written directly in the
                                              zero-padded layout conv2 consumes
    acc_ref : (Ho*Wc_in, Np) f32 VMEM scratch accumulator
    """
    M = Ho * Wc_in
    acc_ref[...] = jnp.zeros_like(acc_ref)
    # 9 shifted matmuls; tap (kh, kw) is a contiguous row-window of one phase plane.
    for kh in range(3):
        for kw in range(3):
            pidx = (kh % stride) * stride + (kw % stride)
            start = (kh // stride) * Wc_in + (kw // stride)
            acc_ref[...] += jnp.dot(
                xph_ref[pidx, pl.ds(start, M), :],
                w_ref[kh * 3 + kw],
                preferred_element_type=jnp.float32)

    # Zero the whole output block (emulates conv2's spatial zero padding and zeroes the
    # padded lanes), then scatter the Wo valid columns of each output row into the
    # padded conv2-input layout.
    o_ref[...] = jnp.zeros(o_ref.shape, o_ref.dtype)
    sv = s_ref[...]
    bv = b_ref[...]
    for i in range(Ho):
        row = acc_ref[pl.ds(i * Wc_in, Wo), :]
        o_ref[0, pl.ds((i + 1) * Wc_out + 1, Wo), :] = (
            jnp.maximum(row * sv + bv, 0.0).astype(o_ref.dtype))


def _conv_bn_add_relu_kernel(y_ref, w_ref, s_ref, b_ref,
                             xd_ref, wd_ref, sd_ref, bd_ref,
                             o_ref, acc_ref, *, Ho, Wc):
    """3x3 conv (stride 1) + folded BN + fused identity/downsample(1x1 conv + BN)
    + residual add + ReLU.

    y_ref   : (1, (Ho+3)*Wc, Np)   zero-padded conv1 output (bf16)
    w_ref   : (9, Np, Np)          per-tap conv2 weights (bf16)
    xd_ref  : (1, Ho*Wc, Cd)       identity operand (strided input, or input itself)
    wd_ref  : (Cd, Np)             1x1 downsample weight (or identity matrix)
    o_ref   : (1, Ho*Wc, Np)
    acc_ref : (Ho*Wc, Np) f32 VMEM scratch accumulator
    """
    M = Ho * Wc
    acc_ref[...] = jnp.zeros_like(acc_ref)
    for kh in range(3):
        for kw in range(3):
            acc_ref[...] += jnp.dot(
                y_ref[0, pl.ds(kh * Wc + kw, M), :],
                w_ref[kh * 3 + kw],
                preferred_element_type=jnp.float32)

    out = acc_ref[...] * s_ref[...] + b_ref[...]
    ident = jnp.dot(xd_ref[0], wd_ref[...], preferred_element_type=jnp.float32)
    ident = ident * sd_ref[...] + bd_ref[...]
    o_ref[0] = jnp.maximum(out + ident, 0.0).astype(o_ref.dtype)


# ----------------------------- host-side helpers ---------------------------

def _build_phases(xn, stride, Ho):
    """Phase-decompose the zero-padded (pad=1) NHWC input for a strided 3x3 conv.

    Returns (B*stride*stride, Hc*Wc, C) where each plane is spatially flattened so a
    conv tap becomes a *contiguous* row-window inside the kernel. No 9x blowup.
    """
    B, H, W, C = xn.shape
    s = stride
    xpad = jnp.pad(xn, ((0, 0), (1, 1), (1, 1), (0, 0)))
    Hc = Ho + 3                      # enough rows for all tap offsets + flatten slack
    Wc = -(-(W + 2) // s)            # ceil((W+2)/s), common width for all phases
    planes = []
    for p in range(s):
        for q in range(s):
            pln = xpad[:, p::s, q::s, :]
            planes.append(jnp.pad(
                pln,
                ((0, 0), (0, Hc - pln.shape[1]), (0, Wc - pln.shape[2]), (0, 0))))
    ph = jnp.stack(planes, axis=1)   # (B, s*s, Hc, Wc, C)
    return ph.reshape(B * s * s, Hc * Wc, C), Wc


def _w_taps(w_oihw, cin_pad, cout_pad):
    """(Cout, Cin, 3, 3) -> (9, cin_pad, cout_pad) per-tap matrices (zero padded)."""
    Cout, Cin, KH, KW = w_oihw.shape
    taps = jnp.transpose(w_oihw, (2, 3, 1, 0)).reshape(KH * KW, Cin, Cout)
    return jnp.pad(taps, ((0, 0), (0, cin_pad - Cin), (0, cout_pad - Cout)))


def _fold_bn_pad(bn, np_out):
    s = bn["gamma"] / jnp.sqrt(bn["var"] + _BN_EPS)
    b = bn["beta"] - bn["mean"] * s
    c = s.shape[0]
    s = jnp.pad(s, (0, np_out - c), constant_values=1.0)
    b = jnp.pad(b, (0, np_out - c))
    return (s.reshape(1, np_out).astype(jnp.float32),
            b.reshape(1, np_out).astype(jnp.float32))


# ----------------------------- forward pass --------------------------------

def residual_block_forward(x_nchw, params, stride=1):
    xn = jnp.transpose(x_nchw, (0, 2, 3, 1)).astype(jnp.float32)   # NCHW -> NHWC
    B, H, W, Cin = xn.shape
    Cout = params["w1"].shape[0]
    Np = pl.cdiv(Cout, 128) * 128          # lane-dense output channel count
    s = stride
    Ho = (H - 1) // s + 1
    Wo = (W - 1) // s + 1
    Wc2 = Wo + 2                            # padded width of conv2's input layout
    L2 = (Ho + 3) * Wc2

    # ---- conv1 + bn1 + ReLU   (Dropout = identity in eval mode) ----
    xph, Wc1 = _build_phases(xn, s, Ho)
    xph = xph.astype(jnp.bfloat16)
    w1t = _w_taps(params["w1"], Cin, Np).astype(jnp.bfloat16)
    s1, b1 = _fold_bn_pad(params["bn1"], Np)
    Lc1 = xph.shape[1]

    conv1 = functools.partial(_conv_bn_relu_kernel, stride=s, Ho=Ho, Wo=Wo,
                              Wc_in=Wc1, Wc_out=Wc2)
    out1 = pl.pallas_call(
        conv1,
        grid=(B,),
        in_specs=[
            pl.BlockSpec((s * s, Lc1, Cin), lambda b: (b, 0, 0)),
            pl.BlockSpec((9, Cin, Np), lambda b: (0, 0, 0)),
            pl.BlockSpec((1, Np), lambda b: (0, 0)),
            pl.BlockSpec((1, Np), lambda b: (0, 0)),
        ],
        out_specs=pl.BlockSpec((1, L2, Np), lambda b: (b, 0, 0)),
        out_shape=jax.ShapeDtypeStruct((B, L2, Np), jnp.bfloat16),
        scratch_shapes=[pltpu.VMEM((Ho * Wc1, Np), jnp.float32)],
        compiler_params=_CPARAMS,
    )(xph, w1t, s1, b1)

    # ---- identity / downsample operands (fused into the conv2 kernel) ----
    if s != 1 or Cin != Cout:
        xd = xn[:, ::s, ::s, :]                                    # (B, Ho, Wo, Cin)
        wd = jnp.transpose(params["wd"][:, :, 0, 0], (1, 0))       # (Cin, Cout)
        sd, bd = _fold_bn_pad(params["bnd"], Np)
        id_dtype = jnp.bfloat16
    else:
        xd = xn                                                    # identity = x
        wd = jnp.eye(Cout, dtype=jnp.float32)
        sd = jnp.ones((1, Np), jnp.float32)
        bd = jnp.zeros((1, Np), jnp.float32)
        id_dtype = jnp.float32                                     # exact passthrough
    Cd = xd.shape[-1]
    xd = jnp.pad(xd, ((0, 0), (0, 0), (0, Wc2 - Wo), (0, 0)))
    xd = xd.reshape(B, Ho * Wc2, Cd).astype(id_dtype)
    wdm = jnp.pad(wd, ((0, 0), (0, Np - Cout))).astype(id_dtype)

    # ---- conv2 + bn2 + identity add + ReLU (single fused kernel) ----
    w2t = _w_taps(params["w2"], Np, Np).astype(jnp.bfloat16)
    s2, b2 = _fold_bn_pad(params["bn2"], Np)
    M2 = Ho * Wc2
    conv2 = functools.partial(_conv_bn_add_relu_kernel, Ho=Ho, Wc=Wc2)
    out2 = pl.pallas_call(
        conv2,
        grid=(B,),
        in_specs=[
            pl.BlockSpec((1, L2, Np), lambda b: (b, 0, 0)),
            pl.BlockSpec((9, Np, Np), lambda b: (0, 0, 0)),
            pl.BlockSpec((1, Np), lambda b: (0, 0)),
            pl.BlockSpec((1, Np), lambda b: (0, 0)),
            pl.BlockSpec((1, M2, Cd), lambda b: (b, 0, 0)),
            pl.BlockSpec((Cd, Np), lambda b: (0, 0)),
            pl.BlockSpec((1, Np), lambda b: (0, 0)),
            pl.BlockSpec((1, Np), lambda b: (0, 0)),
        ],
        out_specs=pl.BlockSpec((1, M2, Np), lambda b: (b, 0, 0)),
        out_shape=jax.ShapeDtypeStruct((B, M2, Np), jnp.float32),
        scratch_shapes=[pltpu.VMEM((M2, Np), jnp.float32)],
        compiler_params=_CPARAMS,
    )(out1, w2t, s2, b2, xd, wdm, sd, bd)

    # drop wrap/garbage columns and padded channels, back to NCHW
    out = out2.reshape(B, Ho, Wc2, Np)[:, :, :Wo, :Cout]
    return jnp.transpose(out, (0, 3, 1, 2))


# ----------------------------- reference (plain JAX, f32) ------------------

def _reference(x, params, stride):
    def conv(x, w, s, pad):
        return jax.lax.conv_general_dilated(
            x, w, (s, s), [(pad, pad), (pad, pad)],
            dimension_numbers=("NCHW", "OIHW", "NCHW"))

    def bn(x, p):
        sc = p["gamma"] / jnp.sqrt(p["var"] + _BN_EPS)
        sh = p["beta"] - p["mean"] * sc
        return x * sc[None, :, None, None] + sh[None, :, None, None]

    out = jnp.maximum(bn(conv(x, params["w1"], stride, 1), params["bn1"]), 0.0)
    out = bn(conv(out, params["w2"], 1, 1), params["bn2"])
    if "wd" in params:
        identity = bn(conv(x, params["wd"], stride, 0), params["bnd"])
    else:
        identity = x
    return jnp.maximum(out + identity, 0.0)


# ----------------------------- main ----------------------------------------

def _make_params(key, cin, cout, downsample):
    ks = jax.random.split(key, 8)

    def bn_params(k, c):
        k1, k2, k3, k4 = jax.random.split(k, 4)
        return {
            "gamma": 1.0 + 0.1 * jax.random.normal(k1, (c,), jnp.float32),
            "beta": 0.1 * jax.random.normal(k2, (c,), jnp.float32),
            "mean": 0.1 * jax.random.normal(k3, (c,), jnp.float32),
            "var": jax.random.uniform(k4, (c,), jnp.float32, 0.5, 1.5),
        }

    params = {
        "w1": 0.1 * jax.random.normal(ks[0], (cout, cin, 3, 3), jnp.float32),
        "bn1": bn_params(ks[1], cout),
        "w2": 0.1 * jax.random.normal(ks[2], (cout, cout, 3, 3), jnp.float32),
        "bn2": bn_params(ks[3], cout),
    }
    if downsample:
        params["wd"] = 0.1 * jax.random.normal(ks[4], (cout, cin, 1, 1), jnp.float32)
        params["bnd"] = bn_params(ks[5], cout)
    return params


if __name__ == "__main__":
    def run_case(key, B, Cin, H, W, Cout, stride):
        kx, kp = jax.random.split(key)
        x = jax.random.normal(kx, (B, Cin, H, W), jnp.float32)
        params = _make_params(kp, Cin, Cout,
                              downsample=(stride != 1 or Cin != Cout))
        fwd = jax.jit(functools.partial(residual_block_forward, stride=stride))
        out = jax.block_until_ready(fwd(x, params))
        ref = _reference(x, params, stride)
        assert out.shape == ref.shape, (out.shape, ref.shape)
        err = float(jnp.max(jnp.abs(out - ref)))
        # bf16 MXU operands with f32 accumulation -> loosened tolerance vs f32 reference
        assert jnp.allclose(out, ref, atol=2e-2, rtol=2e-2), err

    key = jax.random.PRNGKey(0)
    k1, k2 = jax.random.split(key)
    run_case(k1, 2, 4, 16, 16, 8, 2)   # stride-2 + channel change -> downsample path
    run_case(k2, 2, 8, 16, 16, 8, 1)   # stride-1, same channels -> plain identity path
    print("KERNEL_OK")
</pallas_src>

<mosaic_0001>
module attributes {stable_mosaic.version = 11 : i64} {
  func.func @_conv_bn_relu_kernel(%arg0: i32, %arg1: memref<4x99x4xbf16, #tpu.memory_space<vmem>>, %arg2: memref<9x4x128xbf16, #tpu.memory_space<vmem>>, %arg3: memref<1x128xf32, #tpu.memory_space<vmem>>, %arg4: memref<1x128xf32, #tpu.memory_space<vmem>>, %arg5: memref<1x110x128xbf16, #tpu.memory_space<vmem>>, %arg6: memref<72x128xf32, #tpu.memory_space<vmem>>) attributes {dimension_semantics = [#tpu.dimension_semantics<parallel>], iteration_bounds = array<i64: 2>, scalar_prefetch = 0 : i64, scratch_operands = 1 : i64, tpu.core_type = #tpu.core_type<tc>, window_params = [{transform_indices = @transform_0, window_bounds = array<i64: 4, 99, 4>}, {pipeline_mode = #tpu.pipeline_mode<synchronous>, transform_indices = @transform_1, window_bounds = array<i64: 9, 4, 128>}, {pipeline_mode = #tpu.pipeline_mode<synchronous>, transform_indices = @transform_2, window_bounds = array<i64: 1, 128>}, {pipeline_mode = #tpu.pipeline_mode<synchronous>, transform_indices = @transform_3, window_bounds = array<i64: 1, 128>}, {transform_indices = @transform_4, window_bounds = array<i64: 1, 110, 128>}]} {
    %cst = arith.constant 0.000000e+00 : f32
    %0 = vector.broadcast %cst : f32 to vector<72x128xf32>
    %c0 = arith.constant 0 : index
    %c0_0 = arith.constant 0 : index
    %1 = vector.load %arg6[%c0, %c0_0] : memref<72x128xf32, #tpu.memory_space<vmem>>, vector<72x128xf32>
    tpu.vector_store %arg6[%c0, %c0_0], %0 {strides = array<i32>} : memref<72x128xf32, #tpu.memory_space<vmem>>, vector<72x128xf32>,
    %c0_1 = arith.constant 0 : index
    %c0_2 = arith.constant 0 : index
    %2 = vector.load %arg6[%c0_1, %c0_2] : memref<72x128xf32, #tpu.memory_space<vmem>>, vector<72x128xf32>
    %c0_3 = arith.constant 0 : index
    %c0_4 = arith.constant 0 : index
    %c0_5 = arith.constant 0 : index
    %3 = vector.load %arg1[%c0_3, %c0_4, %c0_5] : memref<4x99x4xbf16, #tpu.memory_space<vmem>>, vector<1x72x4xbf16>
    %4 = vector.shape_cast %3 : vector<1x72x4xbf16> to vector<72x4xbf16>
    %c0_6 = arith.constant 0 : index
    %c0_7 = arith.constant 0 : index
    %c0_8 = arith.constant 0 : index
    %5 = vector.load %arg2[%c0_6, %c0_7, %c0_8] : memref<9x4x128xbf16, #tpu.memory_space<vmem>>, vector<1x4x128xbf16>
    %6 = vector.shape_cast %5 : vector<1x4x128xbf16> to vector<4x128xbf16>
    %cst_9 = arith.constant dense<0.000000e+00> : vector<72x128xf32>
    %7 = tpu.matmul %4, %6, %cst_9 {dimension_numbers = #tpu.dot_dimension_numbers<[1], [0], [0], [1], [0, 0, 1, 1], [], []>} : vector<72x4xbf16>, vector<4x128xbf16>, vector<72x128xf32> -> vector<72x128xf32>
    %8 = arith.addf %2, %7 : vector<72x128xf32>
    %c0_10 = arith.constant 0 : index
    %c0_11 = arith.constant 0 : index
    %9 = vector.load %arg6[%c0_10, %c0_11] : memref<72x128xf32, #tpu.memory_space<vmem>>, vector<72x128xf32>
    tpu.vector_store %arg6[%c0_10, %c0_11], %8 {strides = array<i32>} : memref<72x128xf32, #tpu.memory_space<vmem>>, vector<72x128xf32>,
    %c0_12 = arith.constant 0 : index
    %c0_13 = arith.constant 0 : index
    %10 = vector.load %arg6[%c0_12, %c0_13] : memref<72x128xf32, #tpu.memory_space<vmem>>, vector<72x128xf32>
    %c1 = arith.constant 1 : index
    %c0_14 = arith.constant 0 : index
    %c0_15 = arith.constant 0 : index
    %11 = vector.load %arg1[%c1, %c0_14, %c0_15] : memref<4x99x4xbf16, #tpu.memory_space<vmem>>, vector<1x72x4xbf16>
    %12 = vector.shape_cast %11 : vector<1x72x4xbf16> to vector<72x4xbf16>
    %c1_16 = arith.constant 1 : index
    %c0_17 = arith.constant 0 : index
    %c0_18 = arith.constant 0 : index
    %13 = vector.load %arg2[%c1_16, %c0_17, %c0_18] : memref<9x4x128xbf16, #tpu.memory_space<vmem>>, vector<1x4x128xbf16>
    %14 = vector.shape_cast %13 : vector<1x4x128xbf16> to vector<4x128xbf16>
    %cst_19 = arith.constant dense<0.000000e+00> : vector<72x128xf32>
    %15 = tpu.matmul %12, %14, %cst_19 {dimension_numbers = #tpu.dot_dimension_numbers<[1], [0], [0], [1], [0, 0, 1, 1], [], []>} : vector<72x4xbf16>, vector<4x128xbf16>, vector<72x128xf32> -> vector<72x128xf32>
    %16 = arith.addf %10, %15 : vector<72x128xf32>
    %c0_20 = arith.constant 0 : index
    %c0_21 = arith.constant 0 : index
    %17 = vector.load %arg6[%c0_20, %c0_21] : memref<72x128xf32, #tpu.memory_space<vmem>>, vector<72x128xf32>
    tpu.vector_store %arg6[%c0_20, %c0_21], %16 {strides = array<i32>} : memref<72x128xf32, #tpu.memory_space<vmem>>, vector<72x128xf32>,
    %c0_22 = arith.constant 0 : index
    %c0_23 = arith.constant 0 : index
    %18 = vector.load %arg6[%c0_22, %c0_23] : memref<72x128xf32, #tpu.memory_space<vmem>>, vector<72x128xf32>
    %c0_24 = arith.constant 0 : index
    %c1_25 = arith.constant 1 : index
    %c0_26 = arith.constant 0 : index
    %19 = vector.load %arg1[%c0_24, %c1_25, %c0_26] : memref<4x99x4xbf16, #tpu.memory_space<vmem>>, vector<1x72x4xbf16>
    %20 = vector.shape_cast %19 : vector<1x72x4xbf16> to vector<72x4xbf16>
    %c2 = arith.constant 2 : index
    %c0_27 = arith.constant 0 : index
    %c0_28 = arith.constant 0 : index
    %21 = vector.load %arg2[%c2, %c0_27, %c0_28] : memref<9x4x128xbf16, #tpu.memory_space<vmem>>, vector<1x4x128xbf16>
    %22 = vector.shape_cast %21 : vector<1x4x128xbf16> to vector<4x128xbf16>
    %cst_29 = arith.constant dense<0.000000e+00> : vector<72x128xf32>
    %23 = tpu.matmul %20, %22, %cst_29 {dimension_numbers = #tpu.dot_dimension_numbers<[1], [0], [0], [1], [0, 0, 1, 1], [], []>} : vector<72x4xbf16>, vector<4x128xbf16>, vector<72x128xf32> -> vector<72x128xf32>
    %24 = arith.addf %18, %23 : vector<72x128xf32>
    %c0_30 = arith.constant 0 : index
    %c0_31 = arith.constant 0 : index
    %25 = vector.load %arg6[%c0_30, %c0_31] : memref<72x128xf32, #tpu.memory_space<vmem>>, vector<72x128xf32>
    tpu.vector_store %arg6[%c0_30, %c0_31], %24 {strides = array<i32>} : memref<72x128xf32, #tpu.memory_space<vmem>>, vector<72x128xf32>,
    %c0_32 = arith.constant 0 : index
    %c0_33 = arith.constant 0 : index
    %26 = vector.load %arg6[%c0_32, %c0_33] : memref<72x128xf32, #tpu.memory_space<vmem>>, vector<72x128xf32>
    %c2_34 = arith.constant 2 : index
    %c0_35 = arith.constant 0 : index
    %c0_36 = arith.constant 0 : index
    %27 = vector.load %arg1[%c2_34, %c0_35, %c0_36] : memref<4x99x4xbf16, #tpu.memory_space<vmem>>, vector<1x72x4xbf16>
    %28 = vector.shape_cast %27 : vector<1x72x4xbf16> to vector<72x4xbf16>
    %c3 = arith.constant 3 : index
    %c0_37 = arith.constant 0 : index
    %c0_38 = arith.constant 0 : index
    %29 = vector.load %arg2[%c3, %c0_37, %c0_38] : memref<9x4x128xbf16, #tpu.memory_space<vmem>>, vector<1x4x128xbf16>
    %30 = vector.shape_cast %29 : vector<1x4x128xbf16> to vector<4x128xbf16>
    %cst_39 = arith.constant dense<0.000000e+00> : vector<72x128xf32>
    %31 = tpu.matmul %28, %30, %cst_39 {dimension_numbers = #tpu.dot_dimension_numbers<[1], [0], [0], [1], [0, 0, 1, 1], [], []>} : vector<72x4xbf16>, vector<4x128xbf16>, vector<72x128xf32> -> vector<72x128xf32>
    %32 = arith.addf %26, %31 : vector<72x128xf32>
    %c0_40 = arith.constant 0 : index
    %c0_41 = arith.constant 0 : index
    %33 = vector.load %arg6[%c0_40, %c0_41] : memref<72x128xf32, #tpu.memory_space<vmem>>, vector<72x128xf32>
    tpu.vector_store %arg6[%c0_40, %c0_41], %32 {strides = array<i32>} : memref<72x128xf32, #tpu.memory_space<vmem>>, vector<72x128xf32>,
    %c0_42 = arith.constant 0 : index
    %c0_43 = arith.constant 0 : index
    %34 = vector.load %arg6[%c0_42, %c0_43] : memref<72x128xf32, #tpu.memory_space<vmem>>, vector<72x128xf32>
    %c3_44 = arith.constant 3 : index
    %c0_45 = arith.constant 0 : index
    %c0_46 = arith.constant 0 : index
    %35 = vector.load %arg1[%c3_44, %c0_45, %c0_46] : memref<4x99x4xbf16, #tpu.memory_space<vmem>>, vector<1x72x4xbf16>
    %36 = vector.shape_cast %35 : vector<1x72x4xbf16> to vector<72x4xbf16>
    %c4 = arith.constant 4 : index
    %c0_47 = arith.constant 0 : index
    %c0_48 = arith.constant 0 : index
    %37 = vector.load %arg2[%c4, %c0_47, %c0_48] : memref<9x4x128xbf16, #tpu.memory_space<vmem>>, vector<1x4x128xbf16>
    %38 = vector.shape_cast %37 : vector<1x4x128xbf16> to vector<4x128xbf16>
    %cst_49 = arith.constant dense<0.000000e+00> : vector<72x128xf32>
    %39 = tpu.matmul %36, %38, %cst_49 {dimension_numbers = #tpu.dot_dimension_numbers<[1], [0], [0], [1], [0, 0, 1, 1], [], []>} : vector<72x4xbf16>, vector<4x128xbf16>, vector<72x128xf32> -> vector<72x128xf32>
    %40 = arith.addf %34, %39 : vector<72x128xf32>
    %c0_50 = arith.constant 0 : index
    %c0_51 = arith.constant 0 : index
    %41 = vector.load %arg6[%c0_50, %c0_51] : memref<72x128xf32, #tpu.memory_space<vmem>>, vector<72x128xf32>
    tpu.vector_store %arg6[%c0_50, %c0_51], %40 {strides = array<i32>} : memref<72x128xf32, #tpu.memory_space<vmem>>, vector<72x128xf32>,
    %c0_52 = arith.constant 0 : index
    %c0_53 = arith.constant 0 : index
    %42 = vector.load %arg6[%c0_52, %c0_53] : memref<72x128xf32, #tpu.memory_space<vmem>>, vector<72x128xf32>
    %c2_54 = arith.constant 2 : index
    %c1_55 = arith.constant 1 : index
    %c0_56 = arith.constant 0 : index
    %43 = vector.load %arg1[%c2_54, %c1_55, %c0_56] : memref<4x99x4xbf16, #tpu.memory_space<vmem>>, vector<1x72x4xbf16>
    %44 = vector.shape_cast %43 : vector<1x72x4xbf16> to vector<72x4xbf16>
    %c5 = arith.constant 5 : index
    %c0_57 = arith.constant 0 : index
    %c0_58 = arith.constant 0 : index
    %45 = vector.load %arg2[%c5, %c0_57, %c0_58] : memref<9x4x128xbf16, #tpu.memory_space<vmem>>, vector<1x4x128xbf16>
    %46 = vector.shape_cast %45 : vector<1x4x128xbf16> to vector<4x128xbf16>
    %cst_59 = arith.constant dense<0.000000e+00> : vector<72x128xf32>
    %47 = tpu.matmul %44, %46, %cst_59 {dimension_numbers = #tpu.dot_dimension_numbers<[1], [0], [0], [1], [0, 0, 1, 1], [], []>} : vector<72x4xbf16>, vector<4x128xbf16>, vector<72x128xf32> -> vector<72x128xf32>
    %48 = arith.addf %42, %47 : vector<72x128xf32>
    %c0_60 = arith.constant 0 : index
    %c0_61 = arith.constant 0 : index
    %49 = vector.load %arg6[%c0_60, %c0_61] : memref<72x128xf32, #tpu.memory_space<vmem>>, vector<72x128xf32>
    tpu.vector_store %arg6[%c0_60, %c0_61], %48 {strides = array<i32>} : memref<72x128xf32, #tpu.memory_space<vmem>>, vector<72x128xf32>,
    %c0_62 = arith.constant 0 : index
    %c0_63 = arith.constant 0 : index
    %50 = vector.load %arg6[%c0_62, %c0_63] : memref<72x128xf32, #tpu.memory_space<vmem>>, vector<72x128xf32>
    %c0_64 = arith.constant 0 : index
    %c9 = arith.constant 9 : index
    %c0_65 = arith.constant 0 : index
    %51 = vector.load %arg1[%c0_64, %c9, %c0_65] : memref<4x99x4xbf16, #tpu.memory_space<vmem>>, vector<1x72x4xbf16>
    %52 = vector.shape_cast %51 : vector<1x72x4xbf16> to vector<72x4xbf16>
    %c6 = arith.constant 6 : index
    %c0_66 = arith.constant 0 : index
    %c0_67 = arith.constant 0 : index
    %53 = vector.load %arg2[%c6, %c0_66, %c0_67] : memref<9x4x128xbf16, #tpu.memory_space<vmem>>, vector<1x4x128xbf16>
    %54 = vector.shape_cast %53 : vector<1x4x128xbf16> to vector<4x128xbf16>
    %cst_68 = arith.constant dense<0.000000e+00> : vector<72x128xf32>
    %55 = tpu.matmul %52, %54, %cst_68 {dimension_numbers = #tpu.dot_dimension_numbers<[1], [0], [0], [1], [0, 0, 1, 1], [], []>} : vector<72x4xbf16>, vector<4x128xbf16>, vector<72x128xf32> -> vector<72x128xf32>
    %56 = arith.addf %50, %55 : vector<72x128xf32>
    %c0_69 = arith.constant 0 : index
    %c0_70 = arith.constant 0 : index
    %57 = vector.load %arg6[%c0_69, %c0_70] : memref<72x128xf32, #tpu.memory_space<vmem>>, vector<72x128xf32>
    tpu.vector_store %arg6[%c0_69, %c0_70], %56 {strides = array<i32>} : memref<72x128xf32, #tpu.memory_space<vmem>>, vector<72x128xf32>,
    %c0_71 = arith.constant 0 : index
    %c0_72 = arith.constant 0 : index
    %58 = vector.load %arg6[%c0_71, %c0_72] : memref<72x128xf32, #tpu.memory_space<vmem>>, vector<72x128xf32>
    %c1_73 = arith.constant 1 : index
    %c9_74 = arith.constant 9 : index
    %c0_75 = arith.constant 0 : index
    %59 = vector.load %arg1[%c1_73, %c9_74, %c0_75] : memref<4x99x4xbf16, #tpu.memory_space<vmem>>, vector<1x72x4xbf16>
    %60 = vector.shape_cast %59 : vector<1x72x4xbf16> to vector<72x4xbf16>
    %c7 = arith.constant 7 : index
    %c0_76 = arith.constant 0 : index
    %c0_77 = arith.constant 0 : index
    %61 = vector.load %arg2[%c7, %c0_76, %c0_77] : memref<9x4x128xbf16, #tpu.memory_space<vmem>>, vector<1x4x128xbf16>
    %62 = vector.shape_cast %61 : vector<1x4x128xbf16> to vector<4x128xbf16>
    %cst_78 = arith.constant dense<0.000000e+00> : vector<72x128xf32>
    %63 = tpu.matmul %60, %62, %cst_78 {dimension_numbers = #tpu.dot_dimension_numbers<[1], [0], [0], [1], [0, 0, 1, 1], [], []>} : vector<72x4xbf16>, vector<4x128xbf16>, vector<72x128xf32> -> vector<72x128xf32>
    %64 = arith.addf %58, %63 : vector<72x128xf32>
    %c0_79 = arith.constant 0 : index
    %c0_80 = arith.constant 0 : index
    %65 = vector.load %arg6[%c0_79, %c0_80] : memref<72x128xf32, #tpu.memory_space<vmem>>, vector<72x128xf32>
    tpu.vector_store %arg6[%c0_79, %c0_80], %64 {strides = array<i32>} : memref<72x128xf32, #tpu.memory_space<vmem>>, vector<72x128xf32>,
    %c0_81 = arith.constant 0 : index
    %c0_82 = arith.constant 0 : index
    %66 = vector.load %arg6[%c0_81, %c0_82] : memref<72x128xf32, #tpu.memory_space<vmem>>, vector<72x128xf32>
    %c0_83 = arith.constant 0 : index
    %c10 = arith.constant 10 : index
    %c0_84 = arith.constant 0 : index
    %67 = vector.load %arg1[%c0_83, %c10, %c0_84] : memref<4x99x4xbf16, #tpu.memory_space<vmem>>, vector<1x72x4xbf16>
    %68 = vector.shape_cast %67 : vector<1x72x4xbf16> to vector<72x4xbf16>
    %c8 = arith.constant 8 : index
    %c0_85 = arith.constant 0 : index
    %c0_86 = arith.constant 0 : index
    %69 = vector.load %arg2[%c8, %c0_85, %c0_86] : memref<9x4x128xbf16, #tpu.memory_space<vmem>>, vector<1x4x128xbf16>
    %70 = vector.shape_cast %69 : vector<1x4x128xbf16> to vector<4x128xbf16>
    %cst_87 = arith.constant dense<0.000000e+00> : vector<72x128xf32>
    %71 = tpu.matmul %68, %70, %cst_87 {dimension_numbers = #tpu.dot_dimension_numbers<[1], [0], [0], [1], [0, 0, 1, 1], [], []>} : vector<72x4xbf16>, vector<4x128xbf16>, vector<72x128xf32> -> vector<72x128xf32>
    %72 = arith.addf %66, %71 : vector<72x128xf32>
    %c0_88 = arith.constant 0 : index
    %c0_89 = arith.constant 0 : index
    %73 = vector.load %arg6[%c0_88, %c0_89] : memref<72x128xf32, #tpu.memory_space<vmem>>, vector<72x128xf32>
    tpu.vector_store %arg6[%c0_88, %c0_89], %72 {strides = array<i32>} : memref<72x128xf32, #tpu.memory_space<vmem>>, vector<72x128xf32>,
    %cst_90 = arith.constant 0.000000e+00 : bf16
    %74 = vector.broadcast %cst_90 : bf16 to vector<1x110x128xbf16>
    %c0_91 = arith.constant 0 : index
    %c0_92 = arith.constant 0 : index
    %c0_93 = arith.constant 0 : index
    %75 = vector.load %arg5[%c0_91, %c0_92, %c0_93] : memref<1x110x128xbf16, #tpu.memory_space<vmem>>, vector<1x110x128xbf16>
    tpu.vector_store %arg5[%c0_91, %c0_92, %c0_93], %74 {strides = array<i32>} : memref<1x110x128xbf16, #tpu.memory_space<vmem>>, vector<1x110x128xbf16>,
    %c0_94 = arith.constant 0 : index
    %c0_95 = arith.constant 0 : index
    %76 = vector.load %arg3[%c0_94, %c0_95] : memref<1x128xf32, #tpu.memory_space<vmem>>, vector<1x128xf32>
    %c0_96 = arith.constant 0 : index
    %c0_97 = arith.constant 0 : index
    %77 = vector.load %arg4[%c0_96, %c0_97] : memref<1x128xf32, #tpu.memory_space<vmem>>, vector<1x128xf32>
    %c0_98 = arith.constant 0 : index
    %c0_99 = arith.constant 0 : index
    %78 = vector.load %arg6[%c0_98, %c0_99] : memref<72x128xf32, #tpu.memory_space<vmem>>, vector<8x128xf32>
    %79 = vector.broadcast %76 : vector<1x128xf32> to vector<8x128xf32>
    %80 = arith.mulf %78, %79 : vector<8x128xf32>
    %81 = vector.broadcast %77 : vector<1x128xf32> to vector<8x128xf32>
    %82 = arith.addf %80, %81 : vector<8x128xf32>
    %cst_100 = arith.constant 0.000000e+00 : f32
    %83 = vector.broadcast %cst_100 : f32 to vector<8x128xf32>
    %84 = arith.maximumf %82, %83 : vector<8x128xf32>
    %85 = arith.truncf %84 : vector<8x128xf32> to vector<8x128xbf16>
    %c0_101 = arith.constant 0 : index
    %c11 = arith.constant 11 : index
    %c0_102 = arith.constant 0 : index
    %86 = vector.load %arg5[%c0_101, %c11, %c0_102] : memref<1x110x128xbf16, #tpu.memory_space<vmem>>, vector<1x8x128xbf16>
    %87 = vector.shape_cast %86 : vector<1x8x128xbf16> to vector<8x128xbf16>
    %88 = vector.shape_cast %85 : vector<8x128xbf16> to vector<1x8x128xbf16>
    tpu.vector_store %arg5[%c0_101, %c11, %c0_102], %88 {strides = array<i32>} : memref<1x110x128xbf16, #tpu.memory_space<vmem>>, vector<1x8x128xbf16>,
    %c9_103 = arith.constant 9 : index
    %c0_104 = arith.constant 0 : index
    %89 = vector.load %arg6[%c9_103, %c0_104] : memref<72x128xf32, #tpu.memory_space<vmem>>, vector<8x128xf32>
    %90 = vector.broadcast %76 : vector<1x128xf32> to vector<8x128xf32>
    %91 = arith.mulf %89, %90 : vector<8x128xf32>
    %92 = vector.broadcast %77 : vector<1x128xf32> to vector<8x128xf32>
    %93 = arith.addf %91, %92 : vector<8x128xf32>
    %cst_105 = arith.constant 0.000000e+00 : f32
    %94 = vector.broadcast %cst_105 : f32 to vector<8x128xf32>
    %95 = arith.maximumf %93, %94 : vector<8x128xf32>
    %96 = arith.truncf %95 : vector<8x128xf32> to vector<8x128xbf16>
    %c0_106 = arith.constant 0 : index
    %c21 = arith.constant 21 : index
    %c0_107 = arith.constant 0 : index
    %97 = vector.load %arg5[%c0_106, %c21, %c0_107] : memref<1x110x128xbf16, #tpu.memory_space<vmem>>, vector<1x8x128xbf16>
    %98 = vector.shape_cast %97 : vector<1x8x128xbf16> to vector<8x128xbf16>
    %99 = vector.shape_cast %96 : vector<8x128xbf16> to vector<1x8x128xbf16>
    tpu.vector_store %arg5[%c0_106, %c21, %c0_107], %99 {strides = array<i32>} : memref<1x110x128xbf16, #tpu.memory_space<vmem>>, vector<1x8x128xbf16>,
    %c18 = arith.constant 18 : index
    %c0_108 = arith.constant 0 : index
    %100 = vector.load %arg6[%c18, %c0_108] : memref<72x128xf32, #tpu.memory_space<vmem>>, vector<8x128xf32>
    %101 = vector.broadcast %76 : vector<1x128xf32> to vector<8x128xf32>
    %102 = arith.mulf %100, %101 : vector<8x128xf32>
    %103 = vector.broadcast %77 : vector<1x128xf32> to vector<8x128xf32>
    %104 = arith.addf %102, %103 : vector<8x128xf32>
    %cst_109 = arith.constant 0.000000e+00 : f32
    %105 = vector.broadcast %cst_109 : f32 to vector<8x128xf32>
    %106 = arith.maximumf %104, %105 : vector<8x128xf32>
    %107 = arith.truncf %106 : vector<8x128xf32> to vector<8x128xbf16>
    %c0_110 = arith.constant 0 : index
    %c31 = arith.constant 31 : index
    %c0_111 = arith.constant 0 : index
    %108 = vector.load %arg5[%c0_110, %c31, %c0_111] : memref<1x110x128xbf16, #tpu.memory_space<vmem>>, vector<1x8x128xbf16>
    %109 = vector.shape_cast %108 : vector<1x8x128xbf16> to vector<8x128xbf16>
    %110 = vector.shape_cast %107 : vector<8x128xbf16> to vector<1x8x128xbf16>
    tpu.vector_store %arg5[%c0_110, %c31, %c0_111], %110 {strides = array<i32>} : memref<1x110x128xbf16, #tpu.memory_space<vmem>>, vector<1x8x128xbf16>,
    %c27 = arith.constant 27 : index
    %c0_112 = arith.constant 0 : index
    %111 = vector.load %arg6[%c27, %c0_112] : memref<72x128xf32, #tpu.memory_space<vmem>>, vector<8x128xf32>
    %112 = vector.broadcast %76 : vector<1x128xf32> to vector<8x128xf32>
    %113 = arith.mulf %111, %112 : vector<8x128xf32>
    %114 = vector.broadcast %77 : vector<1x128xf32> to vector<8x128xf32>
    %115 = arith.addf %113, %114 : vector<8x128xf32>
    %cst_113 = arith.constant 0.000000e+00 : f32
    %116 = vector.broadcast %cst_113 : f32 to vector<8x128xf32>
    %117 = arith.maximumf %115, %116 : vector<8x128xf32>
    %118 = arith.truncf %117 : vector<8x128xf32> to vector<8x128xbf16>
    %c0_114 = arith.constant 0 : index
    %c41 = arith.constant 41 : index
    %c0_115 = arith.constant 0 : index
    %119 = vector.load %arg5[%c0_114, %c41, %c0_115] : memref<1x110x128xbf16, #tpu.memory_space<vmem>>, vector<1x8x128xbf16>
    %120 = vector.shape_cast %119 : vector<1x8x128xbf16> to vector<8x128xbf16>
    %121 = vector.shape_cast %118 : vector<8x128xbf16> to vector<1x8x128xbf16>
    tpu.vector_store %arg5[%c0_114, %c41, %c0_115], %121 {strides = array<i32>} : memref<1x110x128xbf16, #tpu.memory_space<vmem>>, vector<1x8x128xbf16>,
    %c36 = arith.constant 36 : index
    %c0_116 = arith.constant 0 : index
    %122 = vector.load %arg6[%c36, %c0_116] : memref<72x128xf32, #tpu.memory_space<vmem>>, vector<8x128xf32>
    %123 = vector.broadcast %76 : vector<1x128xf32> to vector<8x128xf32>
    %124 = arith.mulf %122, %123 : vector<8x128xf32>
    %125 = vector.broadcast %77 : vector<1x128xf32> to vector<8x128xf32>
    %126 = arith.addf %124, %125 : vector<8x128xf32>
    %cst_117 = arith.constant 0.000000e+00 : f32
    %127 = vector.broadcast %cst_117 : f32 to vector<8x128xf32>
    %128 = arith.maximumf %126, %127 : vector<8x128xf32>
    %129 = arith.truncf %128 : vector<8x128xf32> to vector<8x128xbf16>
    %c0_118 = arith.constant 0 : index
    %c51 = arith.constant 51 : index
    %c0_119 = arith.constant 0 : index
    %130 = vector.load %arg5[%c0_118, %c51, %c0_119] : memref<1x110x128xbf16, #tpu.memory_space<vmem>>, vector<1x8x128xbf16>
    %131 = vector.shape_cast %130 : vector<1x8x128xbf16> to vector<8x128xbf16>
    %132 = vector.shape_cast %129 : vector<8x128xbf16> to vector<1x8x128xbf16>
    tpu.vector_store %arg5[%c0_118, %c51, %c0_119], %132 {strides = array<i32>} : memref<1x110x128xbf16, #tpu.memory_space<vmem>>, vector<1x8x128xbf16>,
    %c45 = arith.constant 45 : index
    %c0_120 = arith.constant 0 : index
    %133 = vector.load %arg6[%c45, %c0_120] : memref<72x128xf32, #tpu.memory_space<vmem>>, vector<8x128xf32>
    %134 = vector.broadcast %76 : vector<1x128xf32> to vector<8x128xf32>
    %135 = arith.mulf %133, %134 : vector<8x128xf32>
    %136 = vector.broadcast %77 : vector<1x128xf32> to vector<8x128xf32>
    %137 = arith.addf %135, %136 : vector<8x128xf32>
    %cst_121 = arith.constant 0.000000e+00 : f32
    %138 = vector.broadcast %cst_121 : f32 to vector<8x128xf32>
    %139 = arith.maximumf %137, %138 : vector<8x128xf32>
    %140 = arith.truncf %139 : vector<8x128xf32> to vector<8x128xbf16>
    %c0_122 = arith.constant 0 : index
    %c61 = arith.constant 61 : index
    %c0_123 = arith.constant 0 : index
    %141 = vector.load %arg5[%c0_122, %c61, %c0_123] : memref<1x110x128xbf16, #tpu.memory_space<vmem>>, vector<1x8x128xbf16>
    %142 = vector.shape_cast %141 : vector<1x8x128xbf16> to vector<8x128xbf16>
    %143 = vector.shape_cast %140 : vector<8x128xbf16> to vector<1x8x128xbf16>
    tpu.vector_store %arg5[%c0_122, %c61, %c0_123], %143 {strides = array<i32>} : memref<1x110x128xbf16, #tpu.memory_space<vmem>>, vector<1x8x128xbf16>,
    %c54 = arith.constant 54 : index
    %c0_124 = arith.constant 0 : index
    %144 = vector.load %arg6[%c54, %c0_124] : memref<72x128xf32, #tpu.memory_space<vmem>>, vector<8x128xf32>
    %145 = vector.broadcast %76 : vector<1x128xf32> to vector<8x128xf32>
    %146 = arith.mulf %144, %145 : vector<8x128xf32>
    %147 = vector.broadcast %77 : vector<1x128xf32> to vector<8x128xf32>
    %148 = arith.addf %146, %147 : vector<8x128xf32>
    %cst_125 = arith.constant 0.000000e+00 : f32
    %149 = vector.broadcast %cst_125 : f32 to vector<8x128xf32>
    %150 = arith.maximumf %148, %149 : vector<8x128xf32>
    %151 = arith.truncf %150 : vector<8x128xf32> to vector<8x128xbf16>
    %c0_126 = arith.constant 0 : index
    %c71 = arith.constant 71 : index
    %c0_127 = arith.constant 0 : index
    %152 = vector.load %arg5[%c0_126, %c71, %c0_127] : memref<1x110x128xbf16, #tpu.memory_space<vmem>>, vector<1x8x128xbf16>
    %153 = vector.shape_cast %152 : vector<1x8x128xbf16> to vector<8x128xbf16>
    %154 = vector.shape_cast %151 : vector<8x128xbf16> to vector<1x8x128xbf16>
    tpu.vector_store %arg5[%c0_126, %c71, %c0_127], %154 {strides = array<i32>} : memref<1x110x128xbf16, #tpu.memory_space<vmem>>, vector<1x8x128xbf16>,
    %c63 = arith.constant 63 : index
    %c0_128 = arith.constant 0 : index
    %155 = vector.load %arg6[%c63, %c0_128] : memref<72x128xf32, #tpu.memory_space<vmem>>, vector<8x128xf32>
    %156 = vector.broadcast %76 : vector<1x128xf32> to vector<8x128xf32>
    %157 = arith.mulf %155, %156 : vector<8x128xf32>
    %158 = vector.broadcast %77 : vector<1x128xf32> to vector<8x128xf32>
    %159 = arith.addf %157, %158 : vector<8x128xf32>
    %cst_129 = arith.constant 0.000000e+00 : f32
    %160 = vector.broadcast %cst_129 : f32 to vector<8x128xf32>
    %161 = arith.maximumf %159, %160 : vector<8x128xf32>
    %162 = arith.truncf %161 : vector<8x128xf32> to vector<8x128xbf16>
    %c0_130 = arith.constant 0 : index
    %c81 = arith.constant 81 : index
    %c0_131 = arith.constant 0 : index
    %163 = vector.load %arg5[%c0_130, %c81, %c0_131] : memref<1x110x128xbf16, #tpu.memory_space<vmem>>, vector<1x8x128xbf16>
    %164 = vector.shape_cast %163 : vector<1x8x128xbf16> to vector<8x128xbf16>
    %165 = vector.shape_cast %162 : vector<8x128xbf16> to vector<1x8x128xbf16>
    tpu.vector_store %arg5[%c0_130, %c81, %c0_131], %165 {strides = array<i32>} : memref<1x110x128xbf16, #tpu.memory_space<vmem>>, vector<1x8x128xbf16>,
    return
  }
  func.func @transform_0(%arg0: i32) -> (i32, i32, i32) {
    %c0_i32 = arith.constant 0 : i32
    %c0_i32_0 = arith.constant 0 : i32
    %c0_i32_1 = arith.constant 0 : i32
    return %arg0, %c0_i32, %c0_i32_0 : i32, i32, i32
  }
  func.func @transform_1(%arg0: i32) -> (i32, i32, i32) {
    %c0_i32 = arith.constant 0 : i32
    %c0_i32_0 = arith.constant 0 : i32
    %c0_i32_1 = arith.constant 0 : i32
    %c0_i32_2 = arith.constant 0 : i32
    return %c0_i32, %c0_i32_0, %c0_i32_1 : i32, i32, i32
  }
  func.func @transform_2(%arg0: i32) -> (i32, i32) {
    %c0_i32 = arith.constant 0 : i32
    %c0_i32_0 = arith.constant 0 : i32
    %c0_i32_1 = arith.constant 0 : i32
    return %c0_i32, %c0_i32_0 : i32, i32
  }
  func.func @transform_3(%arg0: i32) -> (i32, i32) {
    %c0_i32 = arith.constant 0 : i32
    %c0_i32_0 = arith.constant 0 : i32
    %c0_i32_1 = arith.constant 0 : i32
    return %c0_i32, %c0_i32_0 : i32, i32
  }
  func.func @transform_4(%arg0: i32) -> (i32, i32, i32) {
    %c0_i32 = arith.constant 0 : i32
    %c0_i32_0 = arith.constant 0 : i32
    %c0_i32_1 = arith.constant 0 : i32
    return %arg0, %c0_i32, %c0_i32_0 : i32, i32, i32
  }
}

module attributes {stable_mosaic.version = 11 : i64} {
  func.func @_conv_bn_add_relu_kernel(%arg0: i32, %arg1: memref<1x110x128xbf16, #tpu.memory_space<vmem>>, %arg2: memref<9x128x128xbf16, #tpu.memory_space<vmem>>, %arg3: memref<1x128xf32, #tpu.memory_space<vmem>>, %arg4: memref<1x128xf32, #tpu.memory_space<vmem>>, %arg5: memref<1x80x4xbf16, #tpu.memory_space<vmem>>, %arg6: memref<4x128xbf16, #tpu.memory_space<vmem>>, %arg7: memref<1x128xf32, #tpu.memory_space<vmem>>, %arg8: memref<1x128xf32, #tpu.memory_space<vmem>>, %arg9: memref<1x80x128xf32, #tpu.memory_space<vmem>>, %arg10: memref<80x128xf32, #tpu.memory_space<vmem>>) attributes {dimension_semantics = [#tpu.dimension_semantics<parallel>], iteration_bounds = array<i64: 2>, scalar_prefetch = 0 : i64, scratch_operands = 1 : i64, tpu.core_type = #tpu.core_type<tc>, window_params = [{transform_indices = @transform_0, window_bounds = array<i64: 1, 110, 128>}, {pipeline_mode = #tpu.pipeline_mode<synchronous>, transform_indices = @transform_1, window_bounds = array<i64: 9, 128, 128>}, {pipeline_mode = #tpu.pipeline_mode<synchronous>, transform_indices = @transform_2, window_bounds = array<i64: 1, 128>}, {pipeline_mode = #tpu.pipeline_mode<synchronous>, transform_indices = @transform_3, window_bounds = array<i64: 1, 128>}, {transform_indices = @transform_4, window_bounds = array<i64: 1, 80, 4>}, {pipeline_mode = #tpu.pipeline_mode<synchronous>, transform_indices = @transform_5, window_bounds = array<i64: 4, 128>}, {pipeline_mode = #tpu.pipeline_mode<synchronous>, transform_indices = @transform_6, window_bounds = array<i64: 1, 128>}, {pipeline_mode = #tpu.pipeline_mode<synchronous>, transform_indices = @transform_7, window_bounds = array<i64: 1, 128>}, {transform_indices = @transform_8, window_bounds = array<i64: 1, 80, 128>}]} {
    %cst = arith.constant 0.000000e+00 : f32
    %0 = vector.broadcast %cst : f32 to vector<80x128xf32>
    %c0 = arith.constant 0 : index
    %c0_0 = arith.constant 0 : index
    %1 = vector.load %arg10[%c0, %c0_0] : memref<80x128xf32, #tpu.memory_space<vmem>>, vector<80x128xf32>
    tpu.vector_store %arg10[%c0, %c0_0], %0 {strides = array<i32>} : memref<80x128xf32, #tpu.memory_space<vmem>>, vector<80x128xf32>,
    %c0_1 = arith.constant 0 : index
    %c0_2 = arith.constant 0 : index
    %2 = vector.load %arg10[%c0_1, %c0_2] : memref<80x128xf32, #tpu.memory_space<vmem>>, vector<80x128xf32>
    %c0_3 = arith.constant 0 : index
    %c0_4 = arith.constant 0 : index
    %c0_5 = arith.constant 0 : index
    %3 = vector.load %arg1[%c0_3, %c0_4, %c0_5] : memref<1x110x128xbf16, #tpu.memory_space<vmem>>, vector<1x80x128xbf16>
    %4 = vector.shape_cast %3 : vector<1x80x128xbf16> to vector<80x128xbf16>
    %c0_6 = arith.constant 0 : index
    %c0_7 = arith.constant 0 : index
    %c0_8 = arith.constant 0 : index
    %5 = vector.load %arg2[%c0_6, %c0_7, %c0_8] : memref<9x128x128xbf16, #tpu.memory_space<vmem>>, vector<1x128x128xbf16>
    %6 = vector.shape_cast %5 : vector<1x128x128xbf16> to vector<128x128xbf16>
    %cst_9 = arith.constant dense<0.000000e+00> : vector<80x128xf32>
    %7 = tpu.matmul %4, %6, %cst_9 {dimension_numbers = #tpu.dot_dimension_numbers<[1], [0], [0], [1], [0, 0, 1, 1], [], []>} : vector<80x128xbf16>, vector<128x128xbf16>, vector<80x128xf32> -> vector<80x128xf32>
    %8 = arith.addf %2, %7 : vector<80x128xf32>
    %c0_10 = arith.constant 0 : index
    %c0_11 = arith.constant 0 : index
    %9 = vector.load %arg10[%c0_10, %c0_11] : memref<80x128xf32, #tpu.memory_space<vmem>>, vector<80x128xf32>
    tpu.vector_store %arg10[%c0_10, %c0_11], %8 {strides = array<i32>} : memref<80x128xf32, #tpu.memory_space<vmem>>, vector<80x128xf32>,
    %c0_12 = arith.constant 0 : index
    %c0_13 = arith.constant 0 : index
    %10 = vector.load %arg10[%c0_12, %c0_13] : memref<80x128xf32, #tpu.memory_space<vmem>>, vector<80x128xf32>
    %c0_14 = arith.constant 0 : index
    %c1 = arith.constant 1 : index
    %c0_15 = arith.constant 0 : index
    %11 = vector.load %arg1[%c0_14, %c1, %c0_15] : memref<1x110x128xbf16, #tpu.memory_space<vmem>>, vector<1x80x128xbf16>
    %12 = vector.shape_cast %11 : vector<1x80x128xbf16> to vector<80x128xbf16>
    %c1_16 = arith.constant 1 : index
    %c0_17 = arith.constant 0 : index
    %c0_18 = arith.constant 0 : index
    %13 = vector.load %arg2[%c1_16, %c0_17, %c0_18] : memref<9x128x128xbf16, #tpu.memory_space<vmem>>, vector<1x128x128xbf16>
    %14 = vector.shape_cast %13 : vector<1x128x128xbf16> to vector<128x128xbf16>
    %cst_19 = arith.constant dense<0.000000e+00> : vector<80x128xf32>
    %15 = tpu.matmul %12, %14, %cst_19 {dimension_numbers = #tpu.dot_dimension_numbers<[1], [0], [0], [1], [0, 0, 1, 1], [], []>} : vector<80x128xbf16>, vector<128x128xbf16>, vector<80x128xf32> -> vector<80x128xf32>
    %16 = arith.addf %10, %15 : vector<80x128xf32>
    %c0_20 = arith.constant 0 : index
    %c0_21 = arith.constant 0 : index
    %17 = vector.load %arg10[%c0_20, %c0_21] : memref<80x128xf32, #tpu.memory_space<vmem>>, vector<80x128xf32>
    tpu.vector_store %arg10[%c0_20, %c0_21], %16 {strides = array<i32>} : memref<80x128xf32, #tpu.memory_space<vmem>>, vector<80x128xf32>,
    %c0_22 = arith.constant 0 : index
    %c0_23 = arith.constant 0 : index
    %18 = vector.load %arg10[%c0_22, %c0_23] : memref<80x128xf32, #tpu.memory_space<vmem>>, vector<80x128xf32>
    %c0_24 = arith.constant 0 : index
    %c2 = arith.constant 2 : index
    %c0_25 = arith.constant 0 : index
    %19 = vector.load %arg1[%c0_24, %c2, %c0_25] : memref<1x110x128xbf16, #tpu.memory_space<vmem>>, vector<1x80x128xbf16>
    %20 = vector.shape_cast %19 : vector<1x80x128xbf16> to vector<80x128xbf16>
    %c2_26 = arith.constant 2 : index
    %c0_27 = arith.constant 0 : index
    %c0_28 = arith.constant 0 : index
    %21 = vector.load %arg2[%c2_26, %c0_27, %c0_28] : memref<9x128x128xbf16, #tpu.memory_space<vmem>>, vector<1x128x128xbf16>
    %22 = vector.shape_cast %21 : vector<1x128x128xbf16> to vector<128x128xbf16>
    %cst_29 = arith.constant dense<0.000000e+00> : vector<80x128xf32>
    %23 = tpu.matmul %20, %22, %cst_29 {dimension_numbers = #tpu.dot_dimension_numbers<[1], [0], [0], [1], [0, 0, 1, 1], [], []>} : vector<80x128xbf16>, vector<128x128xbf16>, vector<80x128xf32> -> vector<80x128xf32>
    %24 = arith.addf %18, %23 : vector<80x128xf32>
    %c0_30 = arith.constant 0 : index
    %c0_31 = arith.constant 0 : index
    %25 = vector.load %arg10[%c0_30, %c0_31] : memref<80x128xf32, #tpu.memory_space<vmem>>, vector<80x128xf32>
    tpu.vector_store %arg10[%c0_30, %c0_31], %24 {strides = array<i32>} : memref<80x128xf32, #tpu.memory_space<vmem>>, vector<80x128xf32>,
    %c0_32 = arith.constant 0 : index
    %c0_33 = arith.constant 0 : index
    %26 = vector.load %arg10[%c0_32, %c0_33] : memref<80x128xf32, #tpu.memory_space<vmem>>, vector<80x128xf32>
    %c0_34 = arith.constant 0 : index
    %c10 = arith.constant 10 : index
    %c0_35 = arith.constant 0 : index
    %27 = vector.load %arg1[%c0_34, %c10, %c0_35] : memref<1x110x128xbf16, #tpu.memory_space<vmem>>, vector<1x80x128xbf16>
    %28 = vector.shape_cast %27 : vector<1x80x128xbf16> to vector<80x128xbf16>
    %c3 = arith.constant 3 : index
    %c0_36 = arith.constant 0 : index
    %c0_37 = arith.constant 0 : index
    %29 = vector.load %arg2[%c3, %c0_36, %c0_37] : memref<9x128x128xbf16, #tpu.memory_space<vmem>>, vector<1x128x128xbf16>
    %30 = vector.shape_cast %29 : vector<1x128x128xbf16> to vector<128x128xbf16>
    %cst_38 = arith.constant dense<0.000000e+00> : vector<80x128xf32>
    %31 = tpu.matmul %28, %30, %cst_38 {dimension_numbers = #tpu.dot_dimension_numbers<[1], [0], [0], [1], [0, 0, 1, 1], [], []>} : vector<80x128xbf16>, vector<128x128xbf16>, vector<80x128xf32> -> vector<80x128xf32>
    %32 = arith.addf %26, %31 : vector<80x128xf32>
    %c0_39 = arith.constant 0 : index
    %c0_40 = arith.constant 0 : index
    %33 = vector.load %arg10[%c0_39, %c0_40] : memref<80x128xf32, #tpu.memory_space<vmem>>, vector<80x128xf32>
    tpu.vector_store %arg10[%c0_39, %c0_40], %32 {strides = array<i32>} : memref<80x128xf32, #tpu.memory_space<vmem>>, vector<80x128xf32>,
    %c0_41 = arith.constant 0 : index
    %c0_42 = arith.constant 0 : index
    %34 = vector.load %arg10[%c0_41, %c0_42] : memref<80x128xf32, #tpu.memory_space<vmem>>, vector<80x128xf32>
    %c0_43 = arith.constant 0 : index
    %c11 = arith.constant 11 : index
    %c0_44 = arith.constant 0 : index
    %35 = vector.load %arg1[%c0_43, %c11, %c0_44] : memref<1x110x128xbf16, #tpu.memory_space<vmem>>, vector<1x80x128xbf16>
    %36 = vector.shape_cast %35 : vector<1x80x128xbf16> to vector<80x128xbf16>
    %c4 = arith.constant 4 : index
    %c0_45 = arith.constant 0 : index
    %c0_46 = arith.constant 0 : index
    %37 = vector.load %arg2[%c4, %c0_45, %c0_46] : memref<9x128x128xbf16, #tpu.memory_space<vmem>>, vector<1x128x128xbf16>
    %38 = vector.shape_cast %37 : vector<1x128x128xbf16> to vector<128x128xbf16>
    %cst_47 = arith.constant dense<0.000000e+00> : vector<80x128xf32>
    %39 = tpu.matmul %36, %38, %cst_47 {dimension_numbers = #tpu.dot_dimension_numbers<[1], [0], [0], [1], [0, 0, 1, 1], [], []>} : vector<80x128xbf16>, vector<128x128xbf16>, vector<80x128xf32> -> vector<80x128xf32>
    %40 = arith.addf %34, %39 : vector<80x128xf32>
    %c0_48 = arith.constant 0 : index
    %c0_49 = arith.constant 0 : index
    %41 = vector.load %arg10[%c0_48, %c0_49] : memref<80x128xf32, #tpu.memory_space<vmem>>, vector<80x128xf32>
    tpu.vector_store %arg10[%c0_48, %c0_49], %40 {strides = array<i32>} : memref<80x128xf32, #tpu.memory_space<vmem>>, vector<80x128xf32>,
    %c0_50 = arith.constant 0 : index
    %c0_51 = arith.constant 0 : index
    %42 = vector.load %arg10[%c0_50, %c0_51] : memref<80x128xf32, #tpu.memory_space<vmem>>, vector<80x128xf32>
    %c0_52 = arith.constant 0 : index
    %c12 = arith.constant 12 : index
    %c0_53 = arith.constant 0 : index
    %43 = vector.load %arg1[%c0_52, %c12, %c0_53] : memref<1x110x128xbf16, #tpu.memory_space<vmem>>, vector<1x80x128xbf16>
    %44 = vector.shape_cast %43 : vector<1x80x128xbf16> to vector<80x128xbf16>
    %c5 = arith.constant 5 : index
    %c0_54 = arith.constant 0 : index
    %c0_55 = arith.constant 0 : index
    %45 = vector.load %arg2[%c5, %c0_54, %c0_55] : memref<9x128x128xbf16, #tpu.memory_space<vmem>>, vector<1x128x128xbf16>
    %46 = vector.shape_cast %45 : vector<1x128x128xbf16> to vector<128x128xbf16>
    %cst_56 = arith.constant dense<0.000000e+00> : vector<80x128xf32>
    %47 = tpu.matmul %44, %46, %cst_56 {dimension_numbers = #tpu.dot_dimension_numbers<[1], [0], [0], [1], [0, 0, 1, 1], [], []>} : vector<80x128xbf16>, vector<128x128xbf16>, vector<80x128xf32> -> vector<80x128xf32>
    %48 = arith.addf %42, %47 : vector<80x128xf32>
    %c0_57 = arith.constant 0 : index
    %c0_58 = arith.constant 0 : index
    %49 = vector.load %arg10[%c0_57, %c0_58] : memref<80x128xf32, #tpu.memory_space<vmem>>, vector<80x128xf32>
    tpu.vector_store %arg10[%c0_57, %c0_58], %48 {strides = array<i32>} : memref<80x128xf32, #tpu.memory_space<vmem>>, vector<80x128xf32>,
    %c0_59 = arith.constant 0 : index
    %c0_60 = arith.constant 0 : index
    %50 = vector.load %arg10[%c0_59, %c0_60] : memref<80x128xf32, #tpu.memory_space<vmem>>, vector<80x128xf32>
    %c0_61 = arith.constant 0 : index
    %c20 = arith.constant 20 : index
    %c0_62 = arith.constant 0 : index
    %51 = vector.load %arg1[%c0_61, %c20, %c0_62] : memref<1x110x128xbf16, #tpu.memory_space<vmem>>, vector<1x80x128xbf16>
    %52 = vector.shape_cast %51 : vector<1x80x128xbf16> to vector<80x128xbf16>
    %c6 = arith.constant 6 : index
    %c0_63 = arith.constant 0 : index
    %c0_64 = arith.constant 0 : index
    %53 = vector.load %arg2[%c6, %c0_63, %c0_64] : memref<9x128x128xbf16, #tpu.memory_space<vmem>>, vector<1x128x128xbf16>
    %54 = vector.shape_cast %53 : vector<1x128x128xbf16> to vector<128x128xbf16>
    %cst_65 = arith.constant dense<0.000000e+00> : vector<80x128xf32>
    %55 = tpu.matmul %52, %54, %cst_65 {dimension_numbers = #tpu.dot_dimension_numbers<[1], [0], [0], [1], [0, 0, 1, 1], [], []>} : vector<80x128xbf16>, vector<128x128xbf16>, vector<80x128xf32> -> vector<80x128xf32>
    %56 = arith.addf %50, %55 : vector<80x128xf32>
    %c0_66 = arith.constant 0 : index
    %c0_67 = arith.constant 0 : index
    %57 = vector.load %arg10[%c0_66, %c0_67] : memref<80x128xf32, #tpu.memory_space<vmem>>, vector<80x128xf32>
    tpu.vector_store %arg10[%c0_66, %c0_67], %56 {strides = array<i32>} : memref<80x128xf32, #tpu.memory_space<vmem>>, vector<80x128xf32>,
    %c0_68 = arith.constant 0 : index
    %c0_69 = arith.constant 0 : index
    %58 = vector.load %arg10[%c0_68, %c0_69] : memref<80x128xf32, #tpu.memory_space<vmem>>, vector<80x128xf32>
    %c0_70 = arith.constant 0 : index
    %c21 = arith.constant 21 : index
    %c0_71 = arith.constant 0 : index
    %59 = vector.load %arg1[%c0_70, %c21, %c0_71] : memref<1x110x128xbf16, #tpu.memory_space<vmem>>, vector<1x80x128xbf16>
    %60 = vector.shape_cast %59 : vector<1x80x128xbf16> to vector<80x128xbf16>
    %c7 = arith.constant 7 : index
    %c0_72 = arith.constant 0 : index
    %c0_73 = arith.constant 0 : index
    %61 = vector.load %arg2[%c7, %c0_72, %c0_73] : memref<9x128x128xbf16, #tpu.memory_space<vmem>>, vector<1x128x128xbf16>
    %62 = vector.shape_cast %61 : vector<1x128x128xbf16> to vector<128x128xbf16>
    %cst_74 = arith.constant dense<0.000000e+00> : vector<80x128xf32>
    %63 = tpu.matmul %60, %62, %cst_74 {dimension_numbers = #tpu.dot_dimension_numbers<[1], [0], [0], [1], [0, 0, 1, 1], [], []>} : vector<80x128xbf16>, vector<128x128xbf16>, vector<80x128xf32> -> vector<80x128xf32>
    %64 = arith.addf %58, %63 : vector<80x128xf32>
    %c0_75 = arith.constant 0 : index
    %c0_76 = arith.constant 0 : index
    %65 = vector.load %arg10[%c0_75, %c0_76] : memref<80x128xf32, #tpu.memory_space<vmem>>, vector<80x128xf32>
    tpu.vector_store %arg10[%c0_75, %c0_76], %64 {strides = array<i32>} : memref<80x128xf32, #tpu.memory_space<vmem>>, vector<80x128xf32>,
    %c0_77 = arith.constant 0 : index
    %c0_78 = arith.constant 0 : index
    %66 = vector.load %arg10[%c0_77, %c0_78] : memref<80x128xf32, #tpu.memory_space<vmem>>, vector<80x128xf32>
    %c0_79 = arith.constant 0 : index
    %c22 = arith.constant 22 : index
    %c0_80 = arith.constant 0 : index
    %67 = vector.load %arg1[%c0_79, %c22, %c0_80] : memref<1x110x128xbf16, #tpu.memory_space<vmem>>, vector<1x80x128xbf16>
    %68 = vector.shape_cast %67 : vector<1x80x128xbf16> to vector<80x128xbf16>
    %c8 = arith.constant 8 : index
    %c0_81 = arith.constant 0 : index
    %c0_82 = arith.constant 0 : index
    %69 = vector.load %arg2[%c8, %c0_81, %c0_82] : memref<9x128x128xbf16, #tpu.memory_space<vmem>>, vector<1x128x128xbf16>
    %70 = vector.shape_cast %69 : vector<1x128x128xbf16> to vector<128x128xbf16>
    %cst_83 = arith.constant dense<0.000000e+00> : vector<80x128xf32>
    %71 = tpu.matmul %68, %70, %cst_83 {dimension_numbers = #tpu.dot_dimension_numbers<[1], [0], [0], [1], [0, 0, 1, 1], [], []>} : vector<80x128xbf16>, vector<128x128xbf16>, vector<80x128xf32> -> vector<80x128xf32>
    %72 = arith.addf %66, %71 : vector<80x128xf32>
    %c0_84 = arith.constant 0 : index
    %c0_85 = arith.constant 0 : index
    %73 = vector.load %arg10[%c0_84, %c0_85] : memref<80x128xf32, #tpu.memory_space<vmem>>, vector<80x128xf32>
    tpu.vector_store %arg10[%c0_84, %c0_85], %72 {strides = array<i32>} : memref<80x128xf32, #tpu.memory_space<vmem>>, vector<80x128xf32>,
    %c0_86 = arith.constant 0 : index
    %c0_87 = arith.constant 0 : index
    %74 = vector.load %arg10[%c0_86, %c0_87] : memref<80x128xf32, #tpu.memory_space<vmem>>, vector<80x128xf32>
    %c0_88 = arith.constant 0 : index
    %c0_89 = arith.constant 0 : index
    %75 = vector.load %arg3[%c0_88, %c0_89] : memref<1x128xf32, #tpu.memory_space<vmem>>, vector<1x128xf32>
    %76 = vector.broadcast %75 : vector<1x128xf32> to vector<80x128xf32>
    %77 = arith.mulf %74, %76 : vector<80x128xf32>
    %c0_90 = arith.constant 0 : index
    %c0_91 = arith.constant 0 : index
    %78 = vector.load %arg4[%c0_90, %c0_91] : memref<1x128xf32, #tpu.memory_space<vmem>>, vector<1x128xf32>
    %79 = vector.broadcast %78 : vector<1x128xf32> to vector<80x128xf32>
    %80 = arith.addf %77, %79 : vector<80x128xf32>
    %c0_92 = arith.constant 0 : index
    %c0_93 = arith.constant 0 : index
    %c0_94 = arith.constant 0 : index
    %81 = vector.load %arg5[%c0_92, %c0_93, %c0_94] : memref<1x80x4xbf16, #tpu.memory_space<vmem>>, vector<1x80x4xbf16>
    %82 = vector.shape_cast %81 : vector<1x80x4xbf16> to vector<80x4xbf16>
    %c0_95 = arith.constant 0 : index
    %c0_96 = arith.constant 0 : index
    %83 = vector.load %arg6[%c0_95, %c0_96] : memref<4x128xbf16, #tpu.memory_space<vmem>>, vector<4x128xbf16>
    %cst_97 = arith.constant dense<0.000000e+00> : vector<80x128xf32>
    %84 = tpu.matmul %82, %83, %cst_97 {dimension_numbers = #tpu.dot_dimension_numbers<[1], [0], [0], [1], [0, 0, 1, 1], [], []>} : vector<80x4xbf16>, vector<4x128xbf16>, vector<80x128xf32> -> vector<80x128xf32>
    %c0_98 = arith.constant 0 : index
    %c0_99 = arith.constant 0 : index
    %85 = vector.load %arg7[%c0_98, %c0_99] : memref<1x128xf32, #tpu.memory_space<vmem>>, vector<1x128xf32>
    %86 = vector.broadcast %85 : vector<1x128xf32> to vector<80x128xf32>
    %87 = arith.mulf %84, %86 : vector<80x128xf32>
    %c0_100 = arith.constant 0 : index
    %c0_101 = arith.constant 0 : index
    %88 = vector.load %arg8[%c0_100, %c0_101] : memref<1x128xf32, #tpu.memory_space<vmem>>, vector<1x128xf32>
    %89 = vector.broadcast %88 : vector<1x128xf32> to vector<80x128xf32>
    %90 = arith.addf %87, %89 : vector<80x128xf32>
    %91 = arith.addf %80, %90 : vector<80x128xf32>
    %cst_102 = arith.constant 0.000000e+00 : f32
    %92 = vector.broadcast %cst_102 : f32 to vector<80x128xf32>
    %93 = arith.maximumf %91, %92 : vector<80x128xf32>
    %c0_103 = arith.constant 0 : index
    %c0_104 = arith.constant 0 : index
    %c0_105 = arith.constant 0 : index
    %94 = vector.load %arg9[%c0_103, %c0_104, %c0_105] : memref<1x80x128xf32, #tpu.memory_space<vmem>>, vector<1x80x128xf32>
    %95 = vector.shape_cast %94 : vector<1x80x128xf32> to vector<80x128xf32>
    %96 = vector.shape_cast %93 : vector<80x128xf32> to vector<1x80x128xf32>
    tpu.vector_store %arg9[%c0_103, %c0_104, %c0_105], %96 {strides = array<i32>} : memref<1x80x128xf32, #tpu.memory_space<vmem>>, vector<1x80x128xf32>,
    return
  }
  func.func @transform_0(%arg0: i32) -> (i32, i32, i32) {
    %c0_i32 = arith.constant 0 : i32
    %c0_i32_0 = arith.constant 0 : i32
    %c0_i32_1 = arith.constant 0 : i32
    return %arg0, %c0_i32, %c0_i32_0 : i32, i32, i32
  }
  func.func @transform_1(%arg0: i32) -> (i32, i32, i32) {
    %c0_i32 = arith.constant 0 : i32
    %c0_i32_0 = arith.constant 0 : i32
    %c0_i32_1 = arith.constant 0 : i32
    %c0_i32_2 = arith.constant 0 : i32
    return %c0_i32, %c0_i32_0, %c0_i32_1 : i32, i32, i32
  }
  func.func @transform_2(%arg0: i32) -> (i32, i32) {
    %c0_i32 = arith.constant 0 : i32
    %c0_i32_0 = arith.constant 0 : i32
    %c0_i32_1 = arith.constant 0 : i32
    return %c0_i32, %c0_i32_0 : i32, i32
  }
  func.func @transform_3(%arg0: i32) -> (i32, i32) {
    %c0_i32 = arith.constant 0 : i32
    %c0_i32_0 = arith.constant 0 : i32
    %c0_i32_1 = arith.constant 0 : i32
    return %c0_i32, %c0_i32_0 : i32, i32
  }
  func.func @transform_4(%arg0: i32) -> (i32, i32, i32) {
    %c0_i32 = arith.constant 0 : i32
    %c0_i32_0 = arith.constant 0 : i32
    %c0_i32_1 = arith.constant 0 : i32
    return %arg0, %c0_i32, %c0_i32_0 : i32, i32, i32
  }
  func.func @transform_5(%arg0: i32) -> (i32, i32) {
    %c0_i32 = arith.constant 0 : i32
    %c0_i32_0 = arith.constant 0 : i32
    %c0_i32_1 = arith.constant 0 : i32
    return %c0_i32, %c0_i32_0 : i32, i32
  }
  func.func @transform_6(%arg0: i32) -> (i32, i32) {
    %c0_i32 = arith.constant 0 : i32
    %c0_i32_0 = arith.constant 0 : i32
    %c0_i32_1 = arith.constant 0 : i32
    return %c0_i32, %c0_i32_0 : i32, i32
  }
  func.func @transform_7(%arg0: i32) -> (i32, i32) {
    %c0_i32 = arith.constant 0 : i32
    %c0_i32_0 = arith.constant 0 : i32
    %c0_i32_1 = arith.constant 0 : i32
    return %c0_i32, %c0_i32_0 : i32, i32
  }
  func.func @transform_8(%arg0: i32) -> (i32, i32, i32) {
    %c0_i32 = arith.constant 0 : i32
    %c0_i32_0 = arith.constant 0 : i32
    %c0_i32_1 = arith.constant 0 : i32
    return %arg0, %c0_i32, %c0_i32_0 : i32, i32, i32
  }
}

</mosaic_0001>

<llo_original>
// kernel: residual_block_forward.2
$region0: #{residual_block_forward.2}
  #allocation0 [shape = 'u32[]', space=smem, size = 0x4, offset = 0x4, fixed_abs, tag = 'smem constant byte address 0x4 - core index']
  #allocation1 [shape = 'u32[144,128]{1,0:T(1,128)}', space=vmem, size = 0x12000, scoped, tag = 'internal scratch']
  #allocation2 [shape = 'f32[72,128]{1,0:T(8,128)}', space=vmem, size = 0x9000, scoped, tag = 'scratch operand']
  %s0 = inlined_call_operand.vmem [shape: bf16[8,99,4], index: 0, kind: input, shape index: {}]
  %s1 = inlined_call_operand.vmem [shape: bf16[9,4,128], index: 1, kind: input, shape index: {}]
  %s2 = inlined_call_operand.vmem [shape: f32[1,128], index: 2, kind: input, shape index: {}]
  %s3 = inlined_call_operand.vmem [shape: f32[1,128], index: 3, kind: input, shape index: {}]
  %s4 = inlined_call_operand.vmem [shape: bf16[2,110,128], index: 4, kind: output, shape index: {}]
  %s5 = sld [smem:[#allocation0]]
  $region49: #{residual_block_forward.2} parent=0
    _
  %s7 = ssub.s32 1, %s5
  %s8 = scalar_select 0, %s7, %s5
  loop: start=0, step=1, limit=4
  $region2: #{residual_block_forward.2} parent=0 // loop_pre_header
    _
  $region3: #{residual_block_forward.2} parent=0 // loop_header
    %s10 = sphi 0, %s14
    %p11 = scmp.ge.s32.totalorder %s10, 4
    %s20 = sphi 0, %s22
    %s23 = sphi 0, %s20
    %s24 = sphi 0, %s23
    %s40 = sphi 0, %s24
    %s44 = sphi 0, %s44
    %s46 = sphi 0, %s44
    %s47 = sphi 0, %s46
    %s61 = sphi 0, %s47
    %s65 = sphi 0, %s65
    %s67 = sphi 0, %s65
    %s68 = sphi 0, %s67
    %s82 = sphi 0, %s68
    %s86 = sphi 0, %s86
    %s88 = sphi 0, %s86
    %s89 = sphi 0, %s88
    %s103 = sphi 0, %s89
    %s109 = sphi 0, %s111
    %s112 = sphi 0, %s109
    %s113 = sphi 0, %s112
    %s129 = sphi 0, %s113
  $region4: #{residual_block_forward.2} parent=0 // loop_header_branch
    %13 = sbr.rel (%p11) target = $region8
  $region5: #{residual_block_forward.2} parent=0 // loop_body
    %s15 = ssub.s32 %s10, 1
    %s16 = ssub.s32 %s10, 2
    %s17 = sadd.s32 %s10, 1
    %s18 = ssub.s32 %s10, %s17
    %p19 = scmp.eq.s32.totalorder %s18, 0
    %s21 = sadd.s32 %s20, 1
    %s22 = scalar_select %p19, %s20, %s21
    %p25 = pneg %p19
    %p26 = scmp.eq.s32.totalorder %s10, 1
    %p27 = por %p25, %p26
    %p28 = scmp.ne.s32.totalorder %s20, %s23
    %p29 = scmp.eq.s32.totalorder %s10, 0
    %p30 = por %p28, %p29
    %p31 = scmp.ne.s32.totalorder %s20, %s23
    %p32 = scmp.eq.s32.totalorder %s15, 1
    %p33 = por %p31, %p32
    %p34 = scmp.ne.s32.totalorder %s23, %s24
    %p35 = scmp.eq.s32.totalorder %s15, 0
    %p36 = por %p34, %p35
    %p37 = scmp.ne.s32.totalorder %s23, %s24
    %p38 = scmp.eq.s32.totalorder %s16, 1
    %p39 = por %p37, %p38
    %p41 = scmp.ne.s32.totalorder %s24, %s40
    %p42 = scmp.eq.s32.totalorder %s16, 0
    %p43 = por %p41, %p42
    %s45 = sadd.s32 %s44, 1
    %p48 = scmp.eq.s32.totalorder %s10, 1
    %p49 = scmp.ne.s32.totalorder %s44, %s46
    %p50 = scmp.eq.s32.totalorder %s10, 0
    %p51 = por %p49, %p50
    %p52 = scmp.ne.s32.totalorder %s44, %s46
    %p53 = scmp.eq.s32.totalorder %s15, 1
    %p54 = por %p52, %p53
    %p55 = scmp.ne.s32.totalorder %s46, %s47
    %p56 = scmp.eq.s32.totalorder %s15, 0
    %p57 = por %p55, %p56
    %p58 = scmp.ne.s32.totalorder %s46, %s47
    %p59 = scmp.eq.s32.totalorder %s16, 1
    %p60 = por %p58, %p59
    %p62 = scmp.ne.s32.totalorder %s47, %s61
    %p63 = scmp.eq.s32.totalorder %s16, 0
    %p64 = por %p62, %p63
    %s66 = sadd.s32 %s65, 1
    %p69 = scmp.eq.s32.totalorder %s10, 1
    %p70 = scmp.ne.s32.totalorder %s65, %s67
    %p71 = scmp.eq.s32.totalorder %s10, 0
    %p72 = por %p70, %p71
    %p73 = scmp.ne.s32.totalorder %s65, %s67
    %p74 = scmp.eq.s32.totalorder %s15, 1
    %p75 = por %p73, %p74
    %p76 = scmp.ne.s32.totalorder %s67, %s68
    %p77 = scmp.eq.s32.totalorder %s15, 0
    %p78 = por %p76, %p77
    %p79 = scmp.ne.s32.totalorder %s67, %s68
    %p80 = scmp.eq.s32.totalorder %s16, 1
    %p81 = por %p79, %p80
    %p83 = scmp.ne.s32.totalorder %s68, %s82
    %p84 = scmp.eq.s32.totalorder %s16, 0
    %p85 = por %p83, %p84
    %s87 = sadd.s32 %s86, 1
    %p90 = scmp.eq.s32.totalorder %s10, 1
    %p91 = scmp.ne.s32.totalorder %s86, %s88
    %p92 = scmp.eq.s32.totalorder %s10, 0
    %p93 = por %p91, %p92
    %p94 = scmp.ne.s32.totalorder %s86, %s88
    %p95 = scmp.eq.s32.totalorder %s15, 1
    %p96 = por %p94, %p95
    %p97 = scmp.ne.s32.totalorder %s88, %s89
    %p98 = scmp.eq.s32.totalorder %s15, 0
    %p99 = por %p97, %p98
    %p100 = scmp.ne.s32.totalorder %s88, %s89
    %p101 = scmp.eq.s32.totalorder %s16, 1
    %p102 = por %p100, %p101
    %p104 = scmp.ne.s32.totalorder %s89, %s103
    %p105 = scmp.eq.s32.totalorder %s16, 0
    %p106 = por %p104, %p105
    %s107 = ssub.s32 %s10, %s17
    %p108 = scmp.eq.s32.totalorder %s107, 0
    %s110 = sadd.s32 %s109, 1
    %s111 = scalar_select %p108, %s109, %s110
    %p114 = pneg %p108
    %p115 = scmp.eq.s32.totalorder %s10, 1
    %p116 = por %p114, %p115
    %p117 = scmp.ne.s32.totalorder %s109, %s112
    %p118 = scmp.eq.s32.totalorder %s10, 0
    %p119 = por %p117, %p118
    %p120 = scmp.ne.s32.totalorder %s109, %s112
    %p121 = scmp.eq.s32.totalorder %s15, 1
    %p122 = por %p120, %p121
    %p123 = scmp.ne.s32.totalorder %s112, %s113
    %p124 = scmp.eq.s32.totalorder %s15, 0
    %p125 = por %p123, %p124
    %p126 = scmp.ne.s32.totalorder %s112, %s113
    %p127 = scmp.eq.s32.totalorder %s16, 1
    %p128 = por %p126, %p127
    %p130 = scmp.ne.s32.totalorder %s113, %s129
    %p131 = scmp.eq.s32.totalorder %s16, 0
    %p132 = por %p130, %p131
    %p133 = scmp.le.s32.totalorder 1, %s10
    %p134 = scmp.lt.s32.totalorder %s10, 3
    %p135 = pnand %p133, %p134
    %p136 = pneg %p135
    // Predicated region
    $region9: #{residual_block_forward.2} parent=5 // pred_check
      _
    $region10: #{residual_block_forward.2} parent=5 // pred_check_branch
      %138 = sbr.rel (%p135) target = $region12
    $region11: #{residual_block_forward.2} parent=5 // pred_region
      %s139 = ssub.s32 %s10, 1
      // Predicated region
      $region13: #{residual_block_forward.2} parent=11 // pred_check
        %p140 = pneg %p57
      $region14: #{residual_block_forward.2} parent=11 // pred_check_branch
        %142 = sbr.rel (%p140) target = $region16
      $region15: #{residual_block_forward.2} parent=11 // pred_region
        _
      $region16: #{residual_block_forward.2} parent=11 // pred_fallthru
        _
      // Predicated region
      $region17: #{residual_block_forward.2} parent=11 // pred_check
        %p143 = pneg %p78
      $region18: #{residual_block_forward.2} parent=11 // pred_check_branch
        %145 = sbr.rel (%p143) target = $region20
      $region19: #{residual_block_forward.2} parent=11 // pred_region
        _
      $region20: #{residual_block_forward.2} parent=11 // pred_fallthru
        _
      // Predicated region
      $region21: #{residual_block_forward.2} parent=11 // pred_check
        %p146 = pneg %p99
      $region22: #{residual_block_forward.2} parent=11 // pred_check_branch
        %148 = sbr.rel (%p146) target = $region24
      $region23: #{residual_block_forward.2} parent=11 // pred_region
        _
      $region24: #{residual_block_forward.2} parent=11 // pred_fallthru
        _
    $region12: #{residual_block_forward.2} parent=5 // pred_fallthru
      _
    %p149 = scmp.lt.s32.totalorder %s10, 2
    // Predicated region
    $region25: #{residual_block_forward.2} parent=5 // pred_check
      %p150 = pneg %p149
    $region26: #{residual_block_forward.2} parent=5 // pred_check_branch
      %152 = sbr.rel (%p150) target = $region28
    $region27: #{residual_block_forward.2} parent=5 // pred_region
      // Predicated region
      $region29: #{residual_block_forward.2} parent=27 // pred_check
        %p153 = pneg %p30
      $region30: #{residual_block_forward.2} parent=27 // pred_check_branch
        %155 = sbr.rel (%p153) target = $region32
      $region31: #{residual_block_forward.2} parent=27 // pred_region
        %s156 = smul.u32 4, %s10
        %p157 = scmp.lt.s32.totalorder %s156, 7
        %s158 = scalar_select %p157, %s156, 7
        %s159 = smul.addr %s158, 13
        %s160 = smul.addr %s159, 4
        %s161 = scalar_lea.vmem %s0, %s160
        %s162 = smul.u32 4, %s10
      $region32: #{residual_block_forward.2} parent=27 // pred_fallthru
        _
    $region28: #{residual_block_forward.2} parent=5 // pred_fallthru
      _
    %p163 = scmp.le.s32.totalorder 1, %s10
    %p164 = scmp.lt.s32.totalorder %s10, 3
    %p165 = pnand %p163, %p164
    %p166 = pneg %p165
    // Predicated region
    $region33: #{residual_block_forward.2} parent=5 // pred_check
      _
    $region34: #{residual_block_forward.2} parent=5 // pred_check_branch
      %168 = sbr.rel (%p165) target = $region36
    $region35: #{residual_block_forward.2} parent=5 // pred_region
      %s169 = ssub.s32 %s10, 1
      %s170 = smul.u32 4, %s15
      %p171 = scmp.lt.s32.totalorder %s170, 7
      %s172 = scalar_select %p171, %s170, 7
      %s173 = smul.addr %s172, 13
      %s174 = smul.addr %s173, 4
      %s175 = scalar_lea.vmem %s0, %s174
      %p176 = pneg %p36
      %p177 = pneg %p33
      %p178 = pneg %p57
      %p179 = pneg %p54
      %p180 = pneg %p78
      %p181 = pneg %p75
      %p182 = pneg %p99
      %p183 = pneg %p96
      %p184 = pneg %p125
      %p185 = pneg %p122
      %p186 = scmp.lt.s32.totalorder %s15, 1
      %s187 = scalar_select %p186, %s15, 1
      %s188 = smul.addr %s187, 14
      %s189 = smul.addr %s188, 4
      %s190 = scalar_lea.vmem %s4, %s189
      %s191 = smul.u32 4, %s15
      %p192 = scmp.lt.s32.totalorder %s191, 7
      %s193 = scalar_select %p192, %s191, 7
      %s194 = smul.addr %s193, 13
      %s195 = smul.addr %s194, 4
      %s196 = scalar_lea.vmem %s0, %s195
      %s197 = smul.u32 4, %s15
      %p198 = scmp.lt.s32.totalorder %s15, 1
      %s199 = scalar_select %p198, %s15, 1
      %s200 = smul.addr %s199, 14
      %s201 = smul.addr %s200, 4
      %s202 = scalar_lea.vmem %s4, %s201
      %204 = vst [vmem:[#allocation2] sm:$0xff] 0.0
      %205 = vst [vmem:[#allocation2 + $0x8] sm:$0xff] 0.0
      %206 = vst [vmem:[#allocation2 + $0x10] sm:$0xff] 0.0
      %207 = vst [vmem:[#allocation2 + $0x18] sm:$0xff] 0.0
      %208 = vst [vmem:[#allocation2 + $0x20] sm:$0xff] 0.0
      %209 = vst [vmem:[#allocation2 + $0x28] sm:$0xff] 0.0
      %210 = vst [vmem:[#allocation2 + $0x30] sm:$0xff] 0.0
      %211 = vst [vmem:[#allocation2 + $0x38] sm:$0xff] 0.0
      %212 = vst [vmem:[#allocation2 + $0x40] sm:$0xff] 0.0
      %v213 = vld [vmem:[#allocation2] sm:$0xff]
      %v214 = vld [vmem:[#allocation2 + $0x8] sm:$0xff]
      %v215 = vld [vmem:[#allocation2 + $0x10] sm:$0xff]
      %v216 = vld [vmem:[#allocation2 + $0x18] sm:$0xff]
      %v217 = vld [vmem:[#allocation2 + $0x20] sm:$0xff]
      %v218 = vld [vmem:[#allocation2 + $0x28] sm:$0xff]
      %v219 = vld [vmem:[#allocation2 + $0x30] sm:$0xff]
      %v220 = vld [vmem:[#allocation2 + $0x38] sm:$0xff]
      %v221 = vld [vmem:[#allocation2 + $0x40] sm:$0xff]
      %v222 = vld [vmem:[%s196] sm:$0xf]
      %v223 = vld [vmem:[%s196 + $0x4] sm:$0xf]
      %v224 = vld [vmem:[%s196 + $0x8] sm:$0xf]
      %v225 = vld [vmem:[%s196 + $0xc] sm:$0xf]
      %v226 = vld [vmem:[%s196 + $0x10] sm:$0xf]
      %v227 = vld [vmem:[%s196 + $0x14] sm:$0xf]
      %v228 = vld [vmem:[%s196 + $0x18] sm:$0xf]
      %v229 = vld [vmem:[%s196 + $0x1c] sm:$0xf]
      %v230 = vld [vmem:[%s196 + $0x20] sm:$0xf]
      %v231 = vld [vmem:[%s1] sm:$0x3]
      %v241 = vunpack.c.l.b16 %v222
      %v242 = vunpack.c.l.b16 %v223
      %v243 = vunpack.c.l.b16 %v224
      %v244 = vunpack.c.l.b16 %v225
      %v245 = vunpack.c.l.b16 %v226
      %v246 = vunpack.c.l.b16 %v227
      %v247 = vunpack.c.l.b16 %v228
      %v248 = vunpack.c.l.b16 %v229
      %v249 = vunpack.c.l.b16 %v230
      %v250 = vpack.c.b16 %v242, %v241
      %v251 = vpack.c.b16 %v244, %v243
      %v252 = vpack.c.b16 %v246, %v245
      %v253 = vpack.c.b16 %v248, %v247
      %v254 = vpack.c.b16 %v249, %v249
      %vm255 = vcmask 31744
      %v257 = vsel %vm255, %v250, 0
      %v260 = vsel %vm255, %v251, 0
      %v263 = vsel %vm255, %v252, 0
      %v266 = vsel %vm255, %v253, 0
      %v269 = vsel %vm255, %v254, 0
      %vm271 = vcmask 1041408
      %v273 = vsel %vm271, %v231, 0
      %275 = vmatprep.subr.bf16.mxu0 0
      %276 = vmatpush1.bf16.msra.mxu0 %v273
      %277 = vmatprep.subr.bf16.mxu0 0
      %278 = vmatpush1.bf16.msra.mxu0 0
      %279 = vmatprep.subr.bf16.mxu0 0
      %280 = vmatpush1.bf16.msra.mxu0 0
      %281 = vmatprep.subr.bf16.mxu0 0
      %282 = vmatpush1.bf16.msra.mxu0 0
      %283 = vmatprep.subr.bf16.mxu0 0
      %284 = vmatpush1.bf16.msra.mxu0 0
      %285 = vmatprep.subr.bf16.mxu0 0
      %286 = vmatpush1.bf16.msra.mxu0 0
      %287 = vmatprep.subr.bf16.mxu0 0
      %288 = vmatpush1.bf16.msra.mxu0 0
      %289 = vmatprep.subr.bf16.mxu0 0
      %290 = vmatpush1.bf16.msra.mxu0 0
      %291 = vmatprep.subr.bf16.mxu0 0
      %292 = vmatpush1.bf16.msra.mxu0 0
      %293 = vmatprep.subr.bf16.mxu0 0
      %294 = vmatpush1.bf16.msra.mxu0 0
      %295 = vmatprep.subr.bf16.mxu0 0
      %296 = vmatpush1.bf16.msra.mxu0 0
      %297 = vmatprep.subr.bf16.mxu0 0
      %298 = vmatpush1.bf16.msra.mxu0 0
      %299 = vmatprep.subr.bf16.mxu0 0
      %300 = vmatpush1.bf16.msra.mxu0 0
      %301 = vmatprep.subr.bf16.mxu0 0
      %302 = vmatpush1.bf16.msra.mxu0 0
      %303 = vmatprep.subr.bf16.mxu0 0
      %304 = vmatpush1.bf16.msra.mxu0 0
      %305 = vmatprep.subr.bf16.mxu0 0
      %306 = vmatpush1.bf16.msra.mxu0 0
      %307 = vmatprep.mubr.bf16.mxu0 0
      %308 = vmatmul.mubr.bf16.gmra.mrb[0].mxu0 %v257
      %v309 = vpop.f32.mrb[0].mxu0
      %v310 = vadd.f32 0.0, %v309
      %v311 = vpop.f32.mrb[0].mxu0
      %v312 = vpop.f32.mrb[0].mxu0
      %v313 = vadd.f32 0.0, %v312
      %v314 = vpop.f32.mrb[0].mxu0
      %315 = vmatprep.mubr.bf16.mxu0 0
      %316 = vmatmul.mubr.bf16.gmra.mrb[0].mxu0 %v260
      %v317 = vpop.f32.mrb[0].mxu0
      %v318 = vadd.f32 0.0, %v317
      %v319 = vpop.f32.mrb[0].mxu0
      %v320 = vpop.f32.mrb[0].mxu0
      %v321 = vadd.f32 0.0, %v320
      %v322 = vpop.f32.mrb[0].mxu0
      %323 = vmatprep.mubr.bf16.mxu0 0
      %324 = vmatmul.mubr.bf16.gmra.mrb[0].mxu0 %v263
      %v325 = vpop.f32.mrb[0].mxu0
      %v326 = vadd.f32 0.0, %v325
      %v327 = vpop.f32.mrb[0].mxu0
      %v328 = vpop.f32.mrb[0].mxu0
      %v329 = vadd.f32 0.0, %v328
      %v330 = vpop.f32.mrb[0].mxu0
      %331 = vmatprep.mubr.bf16.mxu0 0
      %332 = vmatmul.mubr.bf16.gmra.mrb[0].mxu0 %v266
      %v333 = vpop.f32.mrb[0].mxu0
      %v334 = vadd.f32 0.0, %v333
      %v335 = vpop.f32.mrb[0].mxu0
      %v336 = vpop.f32.mrb[0].mxu0
      %v337 = vadd.f32 0.0, %v336
      %v338 = vpop.f32.mrb[0].mxu0
      %339 = vmatprep.mubr.bf16.mxu0 0
      %340 = vmatmul.mubr.bf16.gmra.mrb[0].mxu0 %v269
      %v341 = vpop.f32.mrb[0].mxu0
      %v342 = vadd.f32 0.0, %v341
      %v343 = vpop.f32.mrb[0].mxu0
      %v344 = vpop.f32.mrb[0].mxu0
      %v345 = vpop.f32.mrb[0].mxu0
      %346 = vdwg.mxu0
      %v347 = vadd.f32 %v213, %v310
      %v348 = vadd.f32 %v214, %v313
      %v349 = vadd.f32 %v215, %v318
      %v350 = vadd.f32 %v216, %v321
      %v351 = vadd.f32 %v217, %v326
      %v352 = vadd.f32 %v218, %v329
      %v353 = vadd.f32 %v219, %v334
      %v354 = vadd.f32 %v220, %v337
      %v355 = vadd.f32 %v221, %v342
      %356 = vst [vmem:[#allocation2] sm:$0xff] %v347
      %357 = vst [vmem:[#allocation2 + $0x8] sm:$0xff] %v348
      %358 = vst [vmem:[#allocation2 + $0x10] sm:$0xff] %v349
      %359 = vst [vmem:[#allocation2 + $0x18] sm:$0xff] %v350
      %360 = vst [vmem:[#allocation2 + $0x20] sm:$0xff] %v351
      %361 = vst [vmem:[#allocation2 + $0x28] sm:$0xff] %v352
      %362 = vst [vmem:[#allocation2 + $0x30] sm:$0xff] %v353
      %363 = vst [vmem:[#allocation2 + $0x38] sm:$0xff] %v354
      %364 = vst [vmem:[#allocation2 + $0x40] sm:$0xff] %v355
      %v365 = vld [vmem:[#allocation2] sm:$0xff]
      %v366 = vld [vmem:[#allocation2 + $0x8] sm:$0xff]
      %v367 = vld [vmem:[#allocation2 + $0x10] sm:$0xff]
      %v368 = vld [vmem:[#allocation2 + $0x18] sm:$0xff]
      %v369 = vld [vmem:[#allocation2 + $0x20] sm:$0xff]
      %v370 = vld [vmem:[#allocation2 + $0x28] sm:$0xff]
      %v371 = vld [vmem:[#allocation2 + $0x30] sm:$0xff]
      %v372 = vld [vmem:[#allocation2 + $0x38] sm:$0xff]
      %v373 = vld [vmem:[#allocation2 + $0x40] sm:$0xff]
      %s374 = scalar_lea.vmem %s196, 52
      %v375 = vld [vmem:[%s374] sm:$0xf]
      %v376 = vld [vmem:[%s374 + $0x4] sm:$0xf]
      %v377 = vld [vmem:[%s374 + $0x8] sm:$0xf]
      %v378 = vld [vmem:[%s374 + $0xc] sm:$0xf]
      %v379 = vld [vmem:[%s374 + $0x10] sm:$0xf]
      %v380 = vld [vmem:[%s374 + $0x14] sm:$0xf]
      %v381 = vld [vmem:[%s374 + $0x18] sm:$0xf]
      %v382 = vld [vmem:[%s374 + $0x1c] sm:$0xf]
      %v383 = vld [vmem:[%s374 + $0x20] sm:$0xf]
      %s384 = scalar_lea.vmem %s1, 2
      %v385 = vld [vmem:[%s384] sm:$0x3]
      %v395 = vunpack.c.l.b16 %v375
      %v396 = vunpack.c.l.b16 %v376
      %v397 = vunpack.c.l.b16 %v377
      %v398 = vunpack.c.l.b16 %v378
      %v399 = vunpack.c.l.b16 %v379
      %v400 = vunpack.c.l.b16 %v380
      %v401 = vunpack.c.l.b16 %v381
      %v402 = vunpack.c.l.b16 %v382
      %v403 = vunpack.c.l.b16 %v383
      %v404 = vpack.c.b16 %v396, %v395
      %v405 = vpack.c.b16 %v398, %v397
      %v406 = vpack.c.b16 %v400, %v399
      %v407 = vpack.c.b16 %v402, %v401
      %v408 = vpack.c.b16 %v403, %v403
      %v410 = vsel %vm255, %v404, 0
      %v413 = vsel %vm255, %v405, 0
      %v416 = vsel %vm255, %v406, 0
      %v419 = vsel %vm255, %v407, 0
      %v422 = vsel %vm255, %v408, 0
      %v425 = vsel %vm271, %v385, 0
      %427 = vmatprep.subr.bf16.mxu0 0
      %428 = vmatpush1.bf16.msra.mxu0 %v425
      %429 = vmatprep.subr.bf16.mxu0 0
      %430 = vmatpush1.bf16.msra.mxu0 0
      %431 = vmatprep.subr.bf16.mxu0 0
      %432 = vmatpush1.bf16.msra.mxu0 0
      %433 = vmatprep.subr.bf16.mxu0 0
      %434 = vmatpush1.bf16.msra.mxu0 0
      %435 = vmatprep.subr.bf16.mxu0 0
      %436 = vmatpush1.bf16.msra.mxu0 0
      %437 = vmatprep.subr.bf16.mxu0 0
      %438 = vmatpush1.bf16.msra.mxu0 0
      %439 = vmatprep.subr.bf16.mxu0 0
      %440 = vmatpush1.bf16.msra.mxu0 0
      %441 = vmatprep.subr.bf16.mxu0 0
      %442 = vmatpush1.bf16.msra.mxu0 0
      %443 = vmatprep.subr.bf16.mxu0 0
      %444 = vmatpush1.bf16.msra.mxu0 0
      %445 = vmatprep.subr.bf16.mxu0 0
      %446 = vmatpush1.bf16.msra.mxu0 0
      %447 = vmatprep.subr.bf16.mxu0 0
      %448 = vmatpush1.bf16.msra.mxu0 0
      %449 = vmatprep.subr.bf16.mxu0 0
      %450 = vmatpush1.bf16.msra.mxu0 0
      %451 = vmatprep.subr.bf16.mxu0 0
      %452 = vmatpush1.bf16.msra.mxu0 0
      %453 = vmatprep.subr.bf16.mxu0 0
      %454 = vmatpush1.bf16.msra.mxu0 0
      %455 = vmatprep.subr.bf16.mxu0 0
      %456 = vmatpush1.bf16.msra.mxu0 0
      %457 = vmatprep.subr.bf16.mxu0 0
      %458 = vmatpush1.bf16.msra.mxu0 0
      %459 = vmatprep.mubr.bf16.mxu0 0
      %460 = vmatmul.mubr.bf16.gmra.mrb[0].mxu0 %v410
      %v461 = vpop.f32.mrb[0].mxu0
      %v462 = vadd.f32 0.0, %v461
      %v463 = vpop.f32.mrb[0].mxu0
      %v464 = vpop.f32.mrb[0].mxu0
      %v465 = vadd.f32 0.0, %v464
      %v466 = vpop.f32.mrb[0].mxu0
      %467 = vmatprep.mubr.bf16.mxu0 0
      %468 = vmatmul.mubr.bf16.gmra.mrb[0].mxu0 %v413
      %v469 = vpop.f32.mrb[0].mxu0
      %v470 = vadd.f32 0.0, %v469
      %v471 = vpop.f32.mrb[0].mxu0
      %v472 = vpop.f32.mrb[0].mxu0
      %v473 = vadd.f32 0.0, %v472
      %v474 = vpop.f32.mrb[0].mxu0
      %475 = vmatprep.mubr.bf16.mxu0 0
      %476 = vmatmul.mubr.bf16.gmra.mrb[0].mxu0 %v416
      %v477 = vpop.f32.mrb[0].mxu0
      %v478 = vadd.f32 0.0, %v477
      %v479 = vpop.f32.mrb[0].mxu0
      %v480 = vpop.f32.mrb[0].mxu0
      %v481 = vadd.f32 0.0, %v480
      %v482 = vpop.f32.mrb[0].mxu0
      %483 = vmatprep.mubr.bf16.mxu0 0
      %484 = vmatmul.mubr.bf16.gmra.mrb[0].mxu0 %v419
      %v485 = vpop.f32.mrb[0].mxu0
      %v486 = vadd.f32 0.0, %v485
      %v487 = vpop.f32.mrb[0].mxu0
      %v488 = vpop.f32.mrb[0].mxu0
      %v489 = vadd.f32 0.0, %v488
      %v490 = vpop.f32.mrb[0].mxu0
      %491 = vmatprep.mubr.bf16.mxu0 0
      %492 = vmatmul.mubr.bf16.gmra.mrb[0].mxu0 %v422
      %v493 = vpop.f32.mrb[0].mxu0
      %v494 = vadd.f32 0.0, %v493
      %v495 = vpop.f32.mrb[0].mxu0
      %v496 = vpop.f32.mrb[0].mxu0
      %v497 = vpop.f32.mrb[0].mxu0
      %498 = vdwg.mxu0
      %v499 = vadd.f32 %v365, %v462
      %v500 = vadd.f32 %v366, %v465
      %v501 = vadd.f32 %v367, %v470
      %v502 = vadd.f32 %v368, %v473
      %v503 = vadd.f32 %v369, %v478
      %v504 = vadd.f32 %v370, %v481
      %v505 = vadd.f32 %v371, %v486
      %v506 = vadd.f32 %v372, %v489
      %v507 = vadd.f32 %v373, %v494
      %508 = vst [vmem:[#allocation2] sm:$0xff] %v499
      %509 = vst [vmem:[#allocation2 + $0x8] sm:$0xff] %v500
      %510 = vst [vmem:[#allocation2 + $0x10] sm:$0xff] %v501
      %511 = vst [vmem:[#allocation2 + $0x18] sm:$0xff] %v502
      %512 = vst [vmem:[#allocation2 + $0x20] sm:$0xff] %v503
      %513 = vst [vmem:[#allocation2 + $0x28] sm:$0xff] %v504
      %514 = vst [vmem:[#allocation2 + $0x30] sm:$0xff] %v505
      %515 = vst [vmem:[#allocation2 + $0x38] sm:$0xff] %v506
      %516 = vst [vmem:[#allocation2 + $0x40] sm:$0xff] %v507
      %v517 = vld [vmem:[#allocation2] sm:$0xff]
      %v518 = vld [vmem:[#allocation2 + $0x8] sm:$0xff]
      %v519 = vld [vmem:[#allocation2 + $0x10] sm:$0xff]
      %v520 = vld [vmem:[#allocation2 + $0x18] sm:$0xff]
      %v521 = vld [vmem:[#allocation2 + $0x20] sm:$0xff]
      %v522 = vld [vmem:[#allocation2 + $0x28] sm:$0xff]
      %v523 = vld [vmem:[#allocation2 + $0x30] sm:$0xff]
      %v524 = vld [vmem:[#allocation2 + $0x38] sm:$0xff]
      %v525 = vld [vmem:[#allocation2 + $0x40] sm:$0xff]
      %v526 = vld [vmem:[%s196] sm:$0xf]
      %v527 = vld [vmem:[%s196 + $0x4] sm:$0xf]
      %v528 = vld [vmem:[%s196 + $0x8] sm:$0xf]
      %v529 = vld [vmem:[%s196 + $0xc] sm:$0xf]
      %v530 = vld [vmem:[%s196 + $0x10] sm:$0xf]
      %v531 = vld [vmem:[%s196 + $0x14] sm:$0xf]
      %v532 = vld [vmem:[%s196 + $0x18] sm:$0xf]
      %v533 = vld [vmem:[%s196 + $0x1c] sm:$0xf]
      %v534 = vld [vmem:[%s196 + $0x20] sm:$0xf]
      %v535 = vld [vmem:[%s196 + $0x24] sm:$0x1]
      %s536 = scalar_lea.vmem %s1, 4
      %v537 = vld [vmem:[%s536] sm:$0x3]
      %v548 = vunpack.c.l.b16 %v526
      %v549 = vunpack.c.l.b16 %v527
      %v550 = vunpack.c.l.b16 %v528
      %v551 = vunpack.c.l.b16 %v529
      %v552 = vunpack.c.l.b16 %v530
      %v553 = vunpack.c.l.b16 %v531
      %v554 = vunpack.c.l.b16 %v532
      %v555 = vunpack.c.l.b16 %v533
      %v556 = vunpack.c.l.b16 %v534
      %v557 = vunpack.c.l.b16 %v535
      %v558 = vpack.c.b16 %v549, %v548
      %v559 = vpack.c.b16 %v551, %v550
      %v560 = vpack.c.b16 %v553, %v552
      %v561 = vpack.c.b16 %v555, %v554
      %v562 = vpack.c.b16 %v557, %v556
      %vm563 = vsmask.f32 7424
      %v565 = vshrl.u32 %v558, 16
      %v567 = vshll.u32 %v558, 16
      %v569 = vrot.slane %v567, 1
      %v570 = vor.u32 %v565, %v569
      %v572 = vshll.u32 %v559, 16
      %v574 = vrot.slane %v572, 1
      %v575 = vsel %vm563, %v570, %v574
      %v576 = vshrl.u32 %v559, 16
      %v578 = vor.u32 %v576, %v574
      %v580 = vshll.u32 %v560, 16
      %v582 = vrot.slane %v580, 1
      %v583 = vsel %vm563, %v578, %v582
      %v584 = vshrl.u32 %v560, 16
      %v586 = vor.u32 %v584, %v582
      %v588 = vshll.u32 %v561, 16
      %v590 = vrot.slane %v588, 1
      %v591 = vsel %vm563, %v586, %v590
      %v592 = vshrl.u32 %v561, 16
      %v594 = vor.u32 %v592, %v590
      %v596 = vshll.u32 %v562, 16
      %v598 = vrot.slane %v596, 1
      %v599 = vsel %vm563, %v594, %v598
      %v600 = vshrl.u32 %v562, 16
      %v602 = vor.u32 %v600, %v598
      %v604 = vsel %vm255, %v575, 0
      %v607 = vsel %vm255, %v583, 0
      %v610 = vsel %vm255, %v591, 0
      %v613 = vsel %vm255, %v599, 0
      %v616 = vsel %vm255, %v602, 0
      %v619 = vsel %vm271, %v537, 0
      %621 = vmatprep.subr.bf16.mxu0 0
      %622 = vmatpush1.bf16.msra.mxu0 %v619
      %623 = vmatprep.subr.bf16.mxu0 0
      %624 = vmatpush1.bf16.msra.mxu0 0
      %625 = vmatprep.subr.bf16.mxu0 0
      %626 = vmatpush1.bf16.msra.mxu0 0
      %627 = vmatprep.subr.bf16.mxu0 0
      %628 = vmatpush1.bf16.msra.mxu0 0
      %629 = vmatprep.subr.bf16.mxu0 0
      %630 = vmatpush1.bf16.msra.mxu0 0
      %631 = vmatprep.subr.bf16.mxu0 0
      %632 = vmatpush1.bf16.msra.mxu0 0
      %633 = vmatprep.subr.bf16.mxu0 0
      %634 = vmatpush1.bf16.msra.mxu0 0
      %635 = vmatprep.subr.bf16.mxu0 0
      %636 = vmatpush1.bf16.msra.mxu0 0
      %637 = vmatprep.subr.bf16.mxu0 0
      %638 = vmatpush1.bf16.msra.mxu0 0
      %639 = vmatprep.subr.bf16.mxu0 0
      %640 = vmatpush1.bf16.msra.mxu0 0
      %641 = vmatprep.subr.bf16.mxu0 0
      %642 = vmatpush1.bf16.msra.mxu0 0
      %643 = vmatprep.subr.bf16.mxu0 0
      %644 = vmatpush1.bf16.msra.mxu0 0
      %645 = vmatprep.subr.bf16.mxu0 0
      %646 = vmatpush1.bf16.msra.mxu0 0
      %647 = vmatprep.subr.bf16.mxu0 0
      %648 = vmatpush1.bf16.msra.mxu0 0
      %649 = vmatprep.subr.bf16.mxu0 0
      %650 = vmatpush1.bf16.msra.mxu0 0
      %651 = vmatprep.subr.bf16.mxu0 0
      %652 = vmatpush1.bf16.msra.mxu0 0
      %653 = vmatprep.mubr.bf16.mxu0 0
      %654 = vmatmul.mubr.bf16.gmra.mrb[0].mxu0 %v604
      %v655 = vpop.f32.mrb[0].mxu0
      %v656 = vadd.f32 0.0, %v655
      %v657 = vpop.f32.mrb[0].mxu0
      %v658 = vpop.f32.mrb[0].mxu0
      %v659 = vadd.f32 0.0, %v658
      %v660 = vpop.f32.mrb[0].mxu0
      %661 = vmatprep.mubr.bf16.mxu0 0
      %662 = vmatmul.mubr.bf16.gmra.mrb[0].mxu0 %v607
      %v663 = vpop.f32.mrb[0].mxu0
      %v664 = vadd.f32 0.0, %v663
      %v665 = vpop.f32.mrb[0].mxu0
      %v666 = vpop.f32.mrb[0].mxu0
      %v667 = vadd.f32 0.0, %v666
      %v668 = vpop.f32.mrb[0].mxu0
      %669 = vmatprep.mubr.bf16.mxu0 0
      %670 = vmatmul.mubr.bf16.gmra.mrb[0].mxu0 %v610
      %v671 = vpop.f32.mrb[0].mxu0
      %v672 = vadd.f32 0.0, %v671
      %v673 = vpop.f32.mrb[0].mxu0
      %v674 = vpop.f32.mrb[0].mxu0
      %v675 = vadd.f32 0.0, %v674
      %v676 = vpop.f32.mrb[0].mxu0
      %677 = vmatprep.mubr.bf16.mxu0 0
      %678 = vmatmul.mubr.bf16.gmra.mrb[0].mxu0 %v613
      %v679 = vpop.f32.mrb[0].mxu0
      %v680 = vadd.f32 0.0, %v679
      %v681 = vpop.f32.mrb[0].mxu0
      %v682 = vpop.f32.mrb[0].mxu0
      %v683 = vadd.f32 0.0, %v682
      %v684 = vpop.f32.mrb[0].mxu0
      %685 = vmatprep.mubr.bf16.mxu0 0
      %686 = vmatmul.mubr.bf16.gmra.mrb[0].mxu0 %v616
      %v687 = vpop.f32.mrb[0].mxu0
      %v688 = vadd.f32 0.0, %v687
      %v689 = vpop.f32.mrb[0].mxu0
      %v690 = vpop.f32.mrb[0].mxu0
      %v691 = vpop.f32.mrb[0].mxu0
      %692 = vdwg.mxu0
      %v693 = vadd.f32 %v517, %v656
      %v694 = vadd.f32 %v518, %v659
      %v695 = vadd.f32 %v519, %v664
      %v696 = vadd.f32 %v520, %v667
      %v697 = vadd.f32 %v521, %v672
      %v698 = vadd.f32 %v522, %v675
      %v699 = vadd.f32 %v523, %v680
      %v700 = vadd.f32 %v524, %v683
      %v701 = vadd.f32 %v525, %v688
      %702 = vst [vmem:[#allocation2] sm:$0xff] %v693
      %703 = vst [vmem:[#allocation2 + $0x8] sm:$0xff] %v694
      %704 = vst [vmem:[#allocation2 + $0x10] sm:$0xff] %v695
      %705 = vst [vmem:[#allocation2 + $0x18] sm:$0xff] %v696
      %706 = vst [vmem:[#allocation2 + $0x20] sm:$0xff] %v697
      %707 = vst [vmem:[#allocation2 + $0x28] sm:$0xff] %v698
      %708 = vst [vmem:[#allocation2 + $0x30] sm:$0xff] %v699
      %709 = vst [vmem:[#allocation2 + $0x38] sm:$0xff] %v700
      %710 = vst [vmem:[#allocation2 + $0x40] sm:$0xff] %v701
      %v711 = vld [vmem:[#allocation2] sm:$0xff]
      %v712 = vld [vmem:[#allocation2 + $0x8] sm:$0xff]
      %v713 = vld [vmem:[#allocation2 + $0x10] sm:$0xff]
      %v714 = vld [vmem:[#allocation2 + $0x18] sm:$0xff]
      %v715 = vld [vmem:[#allocation2 + $0x20] sm:$0xff]
      %v716 = vld [vmem:[#allocation2 + $0x28] sm:$0xff]
      %v717 = vld [vmem:[#allocation2 + $0x30] sm:$0xff]
      %v718 = vld [vmem:[#allocation2 + $0x38] sm:$0xff]
      %v719 = vld [vmem:[#allocation2 + $0x40] sm:$0xff]
      %s720 = scalar_lea.vmem %s196, 104
      %v721 = vld [vmem:[%s720] sm:$0xf]
      %v722 = vld [vmem:[%s720 + $0x4] sm:$0xf]
      %v723 = vld [vmem:[%s720 + $0x8] sm:$0xf]
      %v724 = vld [vmem:[%s720 + $0xc] sm:$0xf]
      %v725 = vld [vmem:[%s720 + $0x10] sm:$0xf]
      %v726 = vld [vmem:[%s720 + $0x14] sm:$0xf]
      %v727 = vld [vmem:[%s720 + $0x18] sm:$0xf]
      %v728 = vld [vmem:[%s720 + $0x1c] sm:$0xf]
      %v729 = vld [vmem:[%s720 + $0x20] sm:$0xf]
      %s730 = scalar_lea.vmem %s1, 6
      %v731 = vld [vmem:[%s730] sm:$0x3]
      %v741 = vunpack.c.l.b16 %v721
      %v742 = vunpack.c.l.b16 %v722
      %v743 = vunpack.c.l.b16 %v723
      %v744 = vunpack.c.l.b16 %v724
      %v745 = vunpack.c.l.b16 %v725
      %v746 = vunpack.c.l.b16 %v726
      %v747 = vunpack.c.l.b16 %v727
      %v748 = vunpack.c.l.b16 %v728
      %v749 = vunpack.c.l.b16 %v729
      %v750 = vpack.c.b16 %v742, %v741
      %v751 = vpack.c.b16 %v744, %v743
      %v752 = vpack.c.b16 %v746, %v745
      %v753 = vpack.c.b16 %v748, %v747
      %v754 = vpack.c.b16 %v749, %v749
      %v756 = vsel %vm255, %v750, 0
      %v759 = vsel %vm255, %v751, 0
      %v762 = vsel %vm255, %v752, 0
      %v765 = vsel %vm255, %v753, 0
      %v768 = vsel %vm255, %v754, 0
      %v771 = vsel %vm271, %v731, 0
      %773 = vmatprep.subr.bf16.mxu0 0
      %774 = vmatpush1.bf16.msra.mxu0 %v771
      %775 = vmatprep.subr.bf16.mxu0 0
      %776 = vmatpush1.bf16.msra.mxu0 0
      %777 = vmatprep.subr.bf16.mxu0 0
      %778 = vmatpush1.bf16.msra.mxu0 0
      %779 = vmatprep.subr.bf16.mxu0 0
      %780 = vmatpush1.bf16.msra.mxu0 0
      %781 = vmatprep.subr.bf16.mxu0 0
      %782 = vmatpush1.bf16.msra.mxu0 0
      %783 = vmatprep.subr.bf16.mxu0 0
      %784 = vmatpush1.bf16.msra.mxu0 0
      %785 = vmatprep.subr.bf16.mxu0 0
      %786 = vmatpush1.bf16.msra.mxu0 0
      %787 = vmatprep.subr.bf16.mxu0 0
      %788 = vmatpush1.bf16.msra.mxu0 0
      %789 = vmatprep.subr.bf16.mxu0 0
      %790 = vmatpush1.bf16.msra.mxu0 0
      %791 = vmatprep.subr.bf16.mxu0 0
      %792 = vmatpush1.bf16.msra.mxu0 0
      %793 = vmatprep.subr.bf16.mxu0 0
      %794 = vmatpush1.bf16.msra.mxu0 0
      %795 = vmatprep.subr.bf16.mxu0 0
      %796 = vmatpush1.bf16.msra.mxu0 0
      %797 = vmatprep.subr.bf16.mxu0 0
      %798 = vmatpush1.bf16.msra.mxu0 0
      %799 = vmatprep.subr.bf16.mxu0 0
      %800 = vmatpush1.bf16.msra.mxu0 0
      %801 = vmatprep.subr.bf16.mxu0 0
      %802 = vmatpush1.bf16.msra.mxu0 0
      %803 = vmatprep.subr.bf16.mxu0 0
      %804 = vmatpush1.bf16.msra.mxu0 0
      %805 = vmatprep.mubr.bf16.mxu0 0
      %806 = vmatmul.mubr.bf16.gmra.mrb[0].mxu0 %v756
      %v807 = vpop.f32.mrb[0].mxu0
      %v808 = vadd.f32 0.0, %v807
      %v809 = vpop.f32.mrb[0].mxu0
      %v810 = vpop.f32.mrb[0].mxu0
      %v811 = vadd.f32 0.0, %v810
      %v812 = vpop.f32.mrb[0].mxu0
      %813 = vmatprep.mubr.bf16.mxu0 0
      %814 = vmatmul.mubr.bf16.gmra.mrb[0].mxu0 %v759
      %v815 = vpop.f32.mrb[0].mxu0
      %v816 = vadd.f32 0.0, %v815
      %v817 = vpop.f32.mrb[0].mxu0
      %v818 = vpop.f32.mrb[0].mxu0
      %v819 = vadd.f32 0.0, %v818
      %v820 = vpop.f32.mrb[0].mxu0
      %821 = vmatprep.mubr.bf16.mxu0 0
      %822 = vmatmul.mubr.bf16.gmra.mrb[0].mxu0 %v762
      %v823 = vpop.f32.mrb[0].mxu0
      %v824 = vadd.f32 0.0, %v823
      %v825 = vpop.f32.mrb[0].mxu0
      %v826 = vpop.f32.mrb[0].mxu0
      %v827 = vadd.f32 0.0, %v826
      %v828 = vpop.f32.mrb[0].mxu0
      %829 = vmatprep.mubr.bf16.mxu0 0
      %830 = vmatmul.mubr.bf16.gmra.mrb[0].mxu0 %v765
      %v831 = vpop.f32.mrb[0].mxu0
      %v832 = vadd.f32 0.0, %v831
      %v833 = vpop.f32.mrb[0].mxu0
      %v834 = vpop.f32.mrb[0].mxu0
      %v835 = vadd.f32 0.0, %v834
      %v836 = vpop.f32.mrb[0].mxu0
      %837 = vmatprep.mubr.bf16.mxu0 0
      %838 = vmatmul.mubr.bf16.gmra.mrb[0].mxu0 %v768
      %v839 = vpop.f32.mrb[0].mxu0
      %v840 = vadd.f32 0.0, %v839
      %v841 = vpop.f32.mrb[0].mxu0
      %v842 = vpop.f32.mrb[0].mxu0
      %v843 = vpop.f32.mrb[0].mxu0
      %844 = vdwg.mxu0
      %v845 = vadd.f32 %v711, %v808
      %v846 = vadd.f32 %v712, %v811
      %v847 = vadd.f32 %v713, %v816
      %v848 = vadd.f32 %v714, %v819
      %v849 = vadd.f32 %v715, %v824
      %v850 = vadd.f32 %v716, %v827
      %v851 = vadd.f32 %v717, %v832
      %v852 = vadd.f32 %v718, %v835
      %v853 = vadd.f32 %v719, %v840
      %854 = vst [vmem:[#allocation2] sm:$0xff] %v845
      %855 = vst [vmem:[#allocation2 + $0x8] sm:$0xff] %v846
      %856 = vst [vmem:[#allocation2 + $0x10] sm:$0xff] %v847
      %857 = vst [vmem:[#allocation2 + $0x18] sm:$0xff] %v848
      %858 = vst [vmem:[#allocation2 + $0x20] sm:$0xff] %v849
      %859 = vst [vmem:[#allocation2 + $0x28] sm:$0xff] %v850
      %860 = vst [vmem:[#allocation2 + $0x30] sm:$0xff] %v851
      %861 = vst [vmem:[#allocation2 + $0x38] sm:$0xff] %v852
      %862 = vst [vmem:[#allocation2 + $0x40] sm:$0xff] %v853
      %v863 = vld [vmem:[#allocation2] sm:$0xff]
      %v864 = vld [vmem:[#allocation2 + $0x8] sm:$0xff]
      %v865 = vld [vmem:[#allocation2 + $0x10] sm:$0xff]
      %v866 = vld [vmem:[#allocation2 + $0x18] sm:$0xff]
      %v867 = vld [vmem:[#allocation2 + $0x20] sm:$0xff]
      %v868 = vld [vmem:[#allocation2 + $0x28] sm:$0xff]
      %v869 = vld [vmem:[#allocation2 + $0x30] sm:$0xff]
      %v870 = vld [vmem:[#allocation2 + $0x38] sm:$0xff]
      %v871 = vld [vmem:[#allocation2 + $0x40] sm:$0xff]
      %s872 = scalar_lea.vmem %s196, 156
      %v873 = vld [vmem:[%s872] sm:$0xf]
      %v874 = vld [vmem:[%s872 + $0x4] sm:$0xf]
      %v875 = vld [vmem:[%s872 + $0x8] sm:$0xf]
      %v876 = vld [vmem:[%s872 + $0xc] sm:$0xf]
      %v877 = vld [vmem:[%s872 + $0x10] sm:$0xf]
      %v878 = vld [vmem:[%s872 + $0x14] sm:$0xf]
      %v879 = vld [vmem:[%s872 + $0x18] sm:$0xf]
      %v880 = vld [vmem:[%s872 + $0x1c] sm:$0xf]
      %v881 = vld [vmem:[%s872 + $0x20] sm:$0xf]
      %s882 = scalar_lea.vmem %s1, 8
      %v883 = vld [vmem:[%s882] sm:$0x3]
      %v893 = vunpack.c.l.b16 %v873
      %v894 = vunpack.c.l.b16 %v874
      %v895 = vunpack.c.l.b16 %v875
      %v896 = vunpack.c.l.b16 %v876
      %v897 = vunpack.c.l.b16 %v877
      %v898 = vunpack.c.l.b16 %v878
      %v899 = vunpack.c.l.b16 %v879
      %v900 = vunpack.c.l.b16 %v880
      %v901 = vunpack.c.l.b16 %v881
      %v902 = vpack.c.b16 %v894, %v893
      %v903 = vpack.c.b16 %v896, %v895
      %v904 = vpack.c.b16 %v898, %v897
      %v905 = vpack.c.b16 %v900, %v899
      %v906 = vpack.c.b16 %v901, %v901
      %v908 = vsel %vm255, %v902, 0
      %v911 = vsel %vm255, %v903, 0
      %v914 = vsel %vm255, %v904, 0
      %v917 = vsel %vm255, %v905, 0
      %v920 = vsel %vm255, %v906, 0
      %v923 = vsel %vm271, %v883, 0
      %925 = vmatprep.subr.bf16.mxu0 0
      %926 = vmatpush1.bf16.msra.mxu0 %v923
      %927 = vmatprep.subr.bf16.mxu0 0
      %928 = vmatpush1.bf16.msra.mxu0 0
      %929 = vmatprep.subr.bf16.mxu0 0
      %930 = vmatpush1.bf16.msra.mxu0 0
      %931 = vmatprep.subr.bf16.mxu0 0
      %932 = vmatpush1.bf16.msra.mxu0 0
      %933 = vmatprep.subr.bf16.mxu0 0
      %934 = vmatpush1.bf16.msra.mxu0 0
      %935 = vmatprep.subr.bf16.mxu0 0
      %936 = vmatpush1.bf16.msra.mxu0 0
      %937 = vmatprep.subr.bf16.mxu0 0
      %938 = vmatpush1.bf16.msra.mxu0 0
      %939 = vmatprep.subr.bf16.mxu0 0
      %940 = vmatpush1.bf16.msra.mxu0 0
      %941 = vmatprep.subr.bf16.mxu0 0
      %942 = vmatpush1.bf16.msra.mxu0 0
      %943 = vmatprep.subr.bf16.mxu0 0
      %944 = vmatpush1.bf16.msra.mxu0 0
      %945 = vmatprep.subr.bf16.mxu0 0
      %946 = vmatpush1.bf16.msra.mxu0 0
      %947 = vmatprep.subr.bf16.mxu0 0
      %948 = vmatpush1.bf16.msra.mxu0 0
      %949 = vmatprep.subr.bf16.mxu0 0
      %950 = vmatpush1.bf16.msra.mxu0 0
      %951 = vmatprep.subr.bf16.mxu0 0
      %952 = vmatpush1.bf16.msra.mxu0 0
      %953 = vmatprep.subr.bf16.mxu0 0
      %954 = vmatpush1.bf16.msra.mxu0 0
      %955 = vmatprep.subr.bf16.mxu0 0
      %956 = vmatpush1.bf16.msra.mxu0 0
      %957 = vmatprep.mubr.bf16.mxu0 0
      %958 = vmatmul.mubr.bf16.gmra.mrb[0].mxu0 %v908
      %v959 = vpop.f32.mrb[0].mxu0
      %v960 = vadd.f32 0.0, %v959
      %v961 = vpop.f32.mrb[0].mxu0
      %v962 = vpop.f32.mrb[0].mxu0
      %v963 = vadd.f32 0.0, %v962
      %v964 = vpop.f32.mrb[0].mxu0
      %965 = vmatprep.mubr.bf16.mxu0 0
      %966 = vmatmul.mubr.bf16.gmra.mrb[0].mxu0 %v911
      %v967 = vpop.f32.mrb[0].mxu0
      %v968 = vadd.f32 0.0, %v967
      %v969 = vpop.f32.mrb[0].mxu0
      %v970 = vpop.f32.mrb[0].mxu0
      %v971 = vadd.f32 0.0, %v970
      %v972 = vpop.f32.mrb[0].mxu0
      %973 = vmatprep.mubr.bf16.mxu0 0
      %974 = vmatmul.mubr.bf16.gmra.mrb[0].mxu0 %v914
      %v975 = vpop.f32.mrb[0].mxu0
      %v976 = vadd.f32 0.0, %v975
      %v977 = vpop.f32.mrb[0].mxu0
      %v978 = vpop.f32.mrb[0].mxu0
      %v979 = vadd.f32 0.0, %v978
      %v980 = vpop.f32.mrb[0].mxu0
      %981 = vmatprep.mubr.bf16.mxu0 0
      %982 = vmatmul.mubr.bf16.gmra.mrb[0].mxu0 %v917
      %v983 = vpop.f32.mrb[0].mxu0
      %v984 = vadd.f32 0.0, %v983
      %v985 = vpop.f32.mrb[0].mxu0
      %v986 = vpop.f32.mrb[0].mxu0
      %v987 = vadd.f32 0.0, %v986
      %v988 = vpop.f32.mrb[0].mxu0
      %989 = vmatprep.mubr.bf16.mxu0 0
      %990 = vmatmul.mubr.bf16.gmra.mrb[0].mxu0 %v920
      %v991 = vpop.f32.mrb[0].mxu0
      %v992 = vadd.f32 0.0, %v991
      %v993 = vpop.f32.mrb[0].mxu0
      %v994 = vpop.f32.mrb[0].mxu0
      %v995 = vpop.f32.mrb[0].mxu0
      %996 = vdwg.mxu0
      %v997 = vadd.f32 %v863, %v960
      %v998 = vadd.f32 %v864, %v963
      %v999 = vadd.f32 %v865, %v968
      %v1000 = vadd.f32 %v866, %v971
      %v1001 = vadd.f32 %v867, %v976
      %v1002 = vadd.f32 %v868, %v979
      %v1003 = vadd.f32 %v869, %v984
      %v1004 = vadd.f32 %v870, %v987
      %v1005 = vadd.f32 %v871, %v992
      %1006 = vst [vmem:[#allocation2] sm:$0xff] %v997
      %1007 = vst [vmem:[#allocation2 + $0x8] sm:$0xff] %v998
      %1008 = vst [vmem:[#allocation2 + $0x10] sm:$0xff] %v999
      %1009 = vst [vmem:[#allocation2 + $0x18] sm:$0xff] %v1000
      %1010 = vst [vmem:[#allocation2 + $0x20] sm:$0xff] %v1001
      %1011 = vst [vmem:[#allocation2 + $0x28] sm:$0xff] %v1002
      %1012 = vst [vmem:[#allocation2 + $0x30] sm:$0xff] %v1003
      %1013 = vst [vmem:[#allocation2 + $0x38] sm:$0xff] %v1004
      %1014 = vst [vmem:[#allocation2 + $0x40] sm:$0xff] %v1005
      %v1015 = vld [vmem:[#allocation2] sm:$0xff]
      %v1016 = vld [vmem:[#allocation2 + $0x8] sm:$0xff]
      %v1017 = vld [vmem:[#allocation2 + $0x10] sm:$0xff]
      %v1018 = vld [vmem:[#allocation2 + $0x18] sm:$0xff]
      %v1019 = vld [vmem:[#allocation2 + $0x20] sm:$0xff]
      %v1020 = vld [vmem:[#allocation2 + $0x28] sm:$0xff]
      %v1021 = vld [vmem:[#allocation2 + $0x30] sm:$0xff]
      %v1022 = vld [vmem:[#allocation2 + $0x38] sm:$0xff]
      %v1023 = vld [vmem:[#allocation2 + $0x40] sm:$0xff]
      %v1024 = vld [vmem:[%s720] sm:$0xf]
      %v1025 = vld [vmem:[%s720 + $0x4] sm:$0xf]
      %v1026 = vld [vmem:[%s720 + $0x8] sm:$0xf]
      %v1027 = vld [vmem:[%s720 + $0xc] sm:$0xf]
      %v1028 = vld [vmem:[%s720 + $0x10] sm:$0xf]
      %v1029 = vld [vmem:[%s720 + $0x14] sm:$0xf]
      %v1030 = vld [vmem:[%s720 + $0x18] sm:$0xf]
      %v1031 = vld [vmem:[%s720 + $0x1c] sm:$0xf]
      %v1032 = vld [vmem:[%s720 + $0x20] sm:$0xf]
      %v1033 = vld [vmem:[%s720 + $0x24] sm:$0x1]
      %s1034 = scalar_lea.vmem %s1, 10
      %v1035 = vld [vmem:[%s1034] sm:$0x3]
      %v1046 = vunpack.c.l.b16 %v1024
      %v1047 = vunpack.c.l.b16 %v1025
      %v1048 = vunpack.c.l.b16 %v1026
      %v1049 = vunpack.c.l.b16 %v1027
      %v1050 = vunpack.c.l.b16 %v1028
      %v1051 = vunpack.c.l.b16 %v1029
      %v1052 = vunpack.c.l.b16 %v1030
      %v1053 = vunpack.c.l.b16 %v1031
      %v1054 = vunpack.c.l.b16 %v1032
      %v1055 = vunpack.c.l.b16 %v1033
      %v1056 = vpack.c.b16 %v1047, %v1046
      %v1057 = vpack.c.b16 %v1049, %v1048
      %v1058 = vpack.c.b16 %v1051, %v1050
      %v1059 = vpack.c.b16 %v1053, %v1052
      %v1060 = vpack.c.b16 %v1055, %v1054
      %v1062 = vshrl.u32 %v1056, 16
      %v1064 = vshll.u32 %v1056, 16
      %v1066 = vrot.slane %v1064, 1
      %v1067 = vor.u32 %v1062, %v1066
      %v1069 = vshll.u32 %v1057, 16
      %v1071 = vrot.slane %v1069, 1
      %v1072 = vsel %vm563, %v1067, %v1071
      %v1073 = vshrl.u32 %v1057, 16
      %v1075 = vor.u32 %v1073, %v1071
      %v1077 = vshll.u32 %v1058, 16
      %v1079 = vrot.slane %v1077, 1
      %v1080 = vsel %vm563, %v1075, %v1079
      %v1081 = vshrl.u32 %v1058, 16
      %v1083 = vor.u32 %v1081, %v1079
      %v1085 = vshll.u32 %v1059, 16
      %v1087 = vrot.slane %v1085, 1
      %v1088 = vsel %vm563, %v1083, %v1087
      %v1089 = vshrl.u32 %v1059, 16
      %v1091 = vor.u32 %v1089, %v1087
      %v1093 = vshll.u32 %v1060, 16
      %v1095 = vrot.slane %v1093, 1
      %v1096 = vsel %vm563, %v1091, %v1095
      %v1097 = vshrl.u32 %v1060, 16
      %v1099 = vor.u32 %v1097, %v1095
      %v1101 = vsel %vm255, %v1072, 0
      %v1104 = vsel %vm255, %v1080, 0
      %v1107 = vsel %vm255, %v1088, 0
      %v1110 = vsel %vm255, %v1096, 0
      %v1113 = vsel %vm255, %v1099, 0
      %v1116 = vsel %vm271, %v1035, 0
      %1118 = vmatprep.subr.bf16.mxu0 0
      %1119 = vmatpush1.bf16.msra.mxu0 %v1116
      %1120 = vmatprep.subr.bf16.mxu0 0
      %1121 = vmatpush1.bf16.msra.mxu0 0
      %1122 = vmatprep.subr.bf16.mxu0 0
      %1123 = vmatpush1.bf16.msra.mxu0 0
      %1124 = vmatprep.subr.bf16.mxu0 0
      %1125 = vmatpush1.bf16.msra.mxu0 0
      %1126 = vmatprep.subr.bf16.mxu0 0
      %1127 = vmatpush1.bf16.msra.mxu0 0
      %1128 = vmatprep.subr.bf16.mxu0 0
      %1129 = vmatpush1.bf16.msra.mxu0 0
      %1130 = vmatprep.subr.bf16.mxu0 0
      %1131 = vmatpush1.bf16.msra.mxu0 0
      %1132 = vmatprep.subr.bf16.mxu0 0
      %1133 = vmatpush1.bf16.msra.mxu0 0
      %1134 = vmatprep.subr.bf16.mxu0 0
      %1135 = vmatpush1.bf16.msra.mxu0 0
      %1136 = vmatprep.subr.bf16.mxu0 0
      %1137 = vmatpush1.bf16.msra.mxu0 0
      %1138 = vmatprep.subr.bf16.mxu0 0
      %1139 = vmatpush1.bf16.msra.mxu0 0
      %1140 = vmatprep.subr.bf16.mxu0 0
      %1141 = vmatpush1.bf16.msra.mxu0 0
      %1142 = vmatprep.subr.bf16.mxu0 0
      %1143 = vmatpush1.bf16.msra.mxu0 0
      %1144 = vmatprep.subr.bf16.mxu0 0
      %1145 = vmatpush1.bf16.msra.mxu0 0
      %1146 = vmatprep.subr.bf16.mxu0 0
      %1147 = vmatpush1.bf16.msra.mxu0 0
      %1148 = vmatprep.subr.bf16.mxu0 0
      %1149 = vmatpush1.bf16.msra.mxu0 0
      %1150 = vmatprep.mubr.bf16.mxu0 0
      %1151 = vmatmul.mubr.bf16.gmra.mrb[0].mxu0 %v1101
      %v1152 = vpop.f32.mrb[0].mxu0
      %v1153 = vadd.f32 0.0, %v1152
      %v1154 = vpop.f32.mrb[0].mxu0
      %v1155 = vpop.f32.mrb[0].mxu0
      %v1156 = vadd.f32 0.0, %v1155
      %v1157 = vpop.f32.mrb[0].mxu0
      %1158 = vmatprep.mubr.bf16.mxu0 0
      %1159 = vmatmul.mubr.bf16.gmra.mrb[0].mxu0 %v1104
      %v1160 = vpop.f32.mrb[0].mxu0
      %v1161 = vadd.f32 0.0, %v1160
      %v1162 = vpop.f32.mrb[0].mxu0
      %v1163 = vpop.f32.mrb[0].mxu0
      %v1164 = vadd.f32 0.0, %v1163
      %v1165 = vpop.f32.mrb[0].mxu0
      %1166 = vmatprep.mubr.bf16.mxu0 0
      %1167 = vmatmul.mubr.bf16.gmra.mrb[0].mxu0 %v1107
      %v1168 = vpop.f32.mrb[0].mxu0
      %v1169 = vadd.f32 0.0, %v1168
      %v1170 = vpop.f32.mrb[0].mxu0
      %v1171 = vpop.f32.mrb[0].mxu0
      %v1172 = vadd.f32 0.0, %v1171
      %v1173 = vpop.f32.mrb[0].mxu0
      %1174 = vmatprep.mubr.bf16.mxu0 0
      %1175 = vmatmul.mubr.bf16.gmra.mrb[0].mxu0 %v1110
      %v1176 = vpop.f32.mrb[0].mxu0
      %v1177 = vadd.f32 0.0, %v1176
      %v1178 = vpop.f32.mrb[0].mxu0
      %v1179 = vpop.f32.mrb[0].mxu0
      %v1180 = vadd.f32 0.0, %v1179
      %v1181 = vpop.f32.mrb[0].mxu0
      %1182 = vmatprep.mubr.bf16.mxu0 0
      %1183 = vmatmul.mubr.bf16.gmra.mrb[0].mxu0 %v1113
      %v1184 = vpop.f32.mrb[0].mxu0
      %v1185 = vadd.f32 0.0, %v1184
      %v1186 = vpop.f32.mrb[0].mxu0
      %v1187 = vpop.f32.mrb[0].mxu0
      %v1188 = vpop.f32.mrb[0].mxu0
      %1189 = vdwg.mxu0
      %v1190 = vadd.f32 %v1015, %v1153
      %v1191 = vadd.f32 %v1016, %v1156
      %v1192 = vadd.f32 %v1017, %v1161
      %v1193 = vadd.f32 %v1018, %v1164
      %v1194 = vadd.f32 %v1019, %v1169
      %v1195 = vadd.f32 %v1020, %v1172
      %v1196 = vadd.f32 %v1021, %v1177
      %v1197 = vadd.f32 %v1022, %v1180
      %v1198 = vadd.f32 %v1023, %v1185
      %1199 = vst [vmem:[#allocation2] sm:$0xff] %v1190
      %1200 = vst [vmem:[#allocation2 + $0x8] sm:$0xff] %v1191
      %1201 = vst [vmem:[#allocation2 + $0x10] sm:$0xff] %v1192
      %1202 = vst [vmem:[#allocation2 + $0x18] sm:$0xff] %v1193
      %1203 = vst [vmem:[#allocation2 + $0x20] sm:$0xff] %v1194
      %1204 = vst [vmem:[#allocation2 + $0x28] sm:$0xff] %v1195
      %1205 = vst [vmem:[#allocation2 + $0x30] sm:$0xff] %v1196
      %1206 = vst [vmem:[#allocation2 + $0x38] sm:$0xff] %v1197
      %1207 = vst [vmem:[#allocation2 + $0x40] sm:$0xff] %v1198
      %v1208 = vld [vmem:[#allocation2] sm:$0xff]
      %v1209 = vld [vmem:[#allocation2 + $0x8] sm:$0xff]
      %v1210 = vld [vmem:[#allocation2 + $0x10] sm:$0xff]
      %v1211 = vld [vmem:[#allocation2 + $0x18] sm:$0xff]
      %v1212 = vld [vmem:[#allocation2 + $0x20] sm:$0xff]
      %v1213 = vld [vmem:[#allocation2 + $0x28] sm:$0xff]
      %v1214 = vld [vmem:[#allocation2 + $0x30] sm:$0xff]
      %v1215 = vld [vmem:[#allocation2 + $0x38] sm:$0xff]
      %v1216 = vld [vmem:[#allocation2 + $0x40] sm:$0xff]
      %v1217 = vld [vmem:[%s196 + $0x4] sm:$0xf]
      %v1218 = vld [vmem:[%s196 + $0x8] sm:$0xf]
      %v1219 = vld [vmem:[%s196 + $0xc] sm:$0xf]
      %v1220 = vld [vmem:[%s196 + $0x10] sm:$0xf]
      %v1221 = vld [vmem:[%s196 + $0x14] sm:$0xf]
      %v1222 = vld [vmem:[%s196 + $0x18] sm:$0xf]
      %v1223 = vld [vmem:[%s196 + $0x1c] sm:$0xf]
      %v1224 = vld [vmem:[%s196 + $0x20] sm:$0xf]
      %v1225 = vld [vmem:[%s196 + $0x24] sm:$0xf]
      %v1226 = vld [vmem:[%s196 + $0x28] sm:$0x1]
      %s1227 = scalar_lea.vmem %s1, 12
      %v1228 = vld [vmem:[%s1227] sm:$0x3]
      %v1239 = vunpack.c.l.b16 %v1217
      %v1240 = vunpack.c.l.b16 %v1218
      %v1241 = vunpack.c.l.b16 %v1219
      %v1242 = vunpack.c.l.b16 %v1220
      %v1243 = vunpack.c.l.b16 %v1221
      %v1244 = vunpack.c.l.b16 %v1222
      %v1245 = vunpack.c.l.b16 %v1223
      %v1246 = vunpack.c.l.b16 %v1224
      %v1247 = vunpack.c.l.b16 %v1225
      %v1248 = vunpack.c.l.b16 %v1226
      %v1249 = vpack.c.b16 %v1240, %v1239
      %v1250 = vpack.c.b16 %v1242, %v1241
      %v1251 = vpack.c.b16 %v1244, %v1243
      %v1252 = vpack.c.b16 %v1246, %v1245
      %v1253 = vpack.c.b16 %v1248, %v1247
      %v1255 = vshrl.u32 %v1249, 16
      %v1257 = vshll.u32 %v1249, 16
      %v1259 = vrot.slane %v1257, 1
      %v1260 = vor.u32 %v1255, %v1259
      %v1262 = vshll.u32 %v1250, 16
      %v1264 = vrot.slane %v1262, 1
      %v1265 = vsel %vm563, %v1260, %v1264
      %v1266 = vshrl.u32 %v1250, 16
      %v1268 = vor.u32 %v1266, %v1264
      %v1270 = vshll.u32 %v1251, 16
      %v1272 = vrot.slane %v1270, 1
      %v1273 = vsel %vm563, %v1268, %v1272
      %v1274 = vshrl.u32 %v1251, 16
      %v1276 = vor.u32 %v1274, %v1272
      %v1278 = vshll.u32 %v1252, 16
      %v1280 = vrot.slane %v1278, 1
      %v1281 = vsel %vm563, %v1276, %v1280
      %v1282 = vshrl.u32 %v1252, 16
      %v1284 = vor.u32 %v1282, %v1280
      %v1286 = vshll.u32 %v1253, 16
      %v1288 = vrot.slane %v1286, 1
      %v1289 = vsel %vm563, %v1284, %v1288
      %v1290 = vshrl.u32 %v1253, 16
      %v1292 = vor.u32 %v1290, %v1288
      %v1294 = vsel %vm255, %v1265, 0
      %v1297 = vsel %vm255, %v1273, 0
      %v1300 = vsel %vm255, %v1281, 0
      %v1303 = vsel %vm255, %v1289, 0
      %v1306 = vsel %vm255, %v1292, 0
      %v1309 = vsel %vm271, %v1228, 0
      %1311 = vmatprep.subr.bf16.mxu0 0
      %1312 = vmatpush1.bf16.msra.mxu0 %v1309
      %1313 = vmatprep.subr.bf16.mxu0 0
      %1314 = vmatpush1.bf16.msra.mxu0 0
      %1315 = vmatprep.subr.bf16.mxu0 0
      %1316 = vmatpush1.bf16.msra.mxu0 0
      %1317 = vmatprep.subr.bf16.mxu0 0
      %1318 = vmatpush1.bf16.msra.mxu0 0
      %1319 = vmatprep.subr.bf16.mxu0 0
      %1320 = vmatpush1.bf16.msra.mxu0 0
      %1321 = vmatprep.subr.bf16.mxu0 0
      %1322 = vmatpush1.bf16.msra.mxu0 0
      %1323 = vmatprep.subr.bf16.mxu0 0
      %1324 = vmatpush1.bf16.msra.mxu0 0
      %1325 = vmatprep.subr.bf16.mxu0 0
      %1326 = vmatpush1.bf16.msra.mxu0 0
      %1327 = vmatprep.subr.bf16.mxu0 0
      %1328 = vmatpush1.bf16.msra.mxu0 0
      %1329 = vmatprep.subr.bf16.mxu0 0
      %1330 = vmatpush1.bf16.msra.mxu0 0
      %1331 = vmatprep.subr.bf16.mxu0 0
      %1332 = vmatpush1.bf16.msra.mxu0 0
      %1333 = vmatprep.subr.bf16.mxu0 0
      %1334 = vmatpush1.bf16.msra.mxu0 0
      %1335 = vmatprep.subr.bf16.mxu0 0
      %1336 = vmatpush1.bf16.msra.mxu0 0
      %1337 = vmatprep.subr.bf16.mxu0 0
      %1338 = vmatpush1.bf16.msra.mxu0 0
      %1339 = vmatprep.subr.bf16.mxu0 0
      %1340 = vmatpush1.bf16.msra.mxu0 0
      %1341 = vmatprep.subr.bf16.mxu0 0
      %1342 = vmatpush1.bf16.msra.mxu0 0
      %1343 = vmatprep.mubr.bf16.mxu0 0
      %1344 = vmatmul.mubr.bf16.gmra.mrb[0].mxu0 %v1294
      %v1345 = vpop.f32.mrb[0].mxu0
      %v1346 = vadd.f32 0.0, %v1345
      %v1347 = vpop.f32.mrb[0].mxu0
      %v1348 = vpop.f32.mrb[0].mxu0
      %v1349 = vadd.f32 0.0, %v1348
      %v1350 = vpop.f32.mrb[0].mxu0
      %1351 = vmatprep.mubr.bf16.mxu0 0
      %1352 = vmatmul.mubr.bf16.gmra.mrb[0].mxu0 %v1297
      %v1353 = vpop.f32.mrb[0].mxu0
      %v1354 = vadd.f32 0.0, %v1353
      %v1355 = vpop.f32.mrb[0].mxu0
      %v1356 = vpop.f32.mrb[0].mxu0
      %v1357 = vadd.f32 0.0, %v1356
      %v1358 = vpop.f32.mrb[0].mxu0
      %1359 = vmatprep.mubr.bf16.mxu0 0
      %1360 = vmatmul.mubr.bf16.gmra.mrb[0].mxu0 %v1300
      %v1361 = vpop.f32.mrb[0].mxu0
      %v1362 = vadd.f32 0.0, %v1361
      %v1363 = vpop.f32.mrb[0].mxu0
      %v1364 = vpop.f32.mrb[0].mxu0
      %v1365 = vadd.f32 0.0, %v1364
      %v1366 = vpop.f32.mrb[0].mxu0
      %1367 = vmatprep.mubr.bf16.mxu0 0
      %1368 = vmatmul.mubr.bf16.gmra.mrb[0].mxu0 %v1303
      %v1369 = vpop.f32.mrb[0].mxu0
      %v1370 = vadd.f32 0.0, %v1369
      %v1371 = vpop.f32.mrb[0].mxu0
      %v1372 = vpop.f32.mrb[0].mxu0
      %v1373 = vadd.f32 0.0, %v1372
      %v1374 = vpop.f32.mrb[0].mxu0
      %1375 = vmatprep.mubr.bf16.mxu0 0
      %1376 = vmatmul.mubr.bf16.gmra.mrb[0].mxu0 %v1306
      %v1377 = vpop.f32.mrb[0].mxu0
      %v1378 = vadd.f32 0.0, %v1377
      %v1379 = vpop.f32.mrb[0].mxu0
      %v1380 = vpop.f32.mrb[0].mxu0
      %v1381 = vpop.f32.mrb[0].mxu0
      %1382 = vdwg.mxu0
      %v1383 = vadd.f32 %v1208, %v1346
      %v1384 = vadd.f32 %v1209, %v1349
      %v1385 = vadd.f32 %v1210, %v1354
      %v1386 = vadd.f32 %v1211, %v1357
      %v1387 = vadd.f32 %v1212, %v1362
      %v1388 = vadd.f32 %v1213, %v1365
      %v1389 = vadd.f32 %v1214, %v1370
      %v1390 = vadd.f32 %v1215, %v1373
      %v1391 = vadd.f32 %v1216, %v1378
      %1392 = vst [vmem:[#allocation2] sm:$0xff] %v1383
      %1393 = vst [vmem:[#allocation2 + $0x8] sm:$0xff] %v1384
      %1394 = vst [vmem:[#allocation2 + $0x10] sm:$0xff] %v1385
      %1395 = vst [vmem:[#allocation2 + $0x18] sm:$0xff] %v1386
      %1396 = vst [vmem:[#allocation2 + $0x20] sm:$0xff] %v1387
      %1397 = vst [vmem:[#allocation2 + $0x28] sm:$0xff] %v1388
      %1398 = vst [vmem:[#allocation2 + $0x30] sm:$0xff] %v1389
      %1399 = vst [vmem:[#allocation2 + $0x38] sm:$0xff] %v1390
      %1400 = vst [vmem:[#allocation2 + $0x40] sm:$0xff] %v1391
      %v1401 = vld [vmem:[#allocation2] sm:$0xff]
      %v1402 = vld [vmem:[#allocation2 + $0x8] sm:$0xff]
      %v1403 = vld [vmem:[#allocation2 + $0x10] sm:$0xff]
      %v1404 = vld [vmem:[#allocation2 + $0x18] sm:$0xff]
      %v1405 = vld [vmem:[#allocation2 + $0x20] sm:$0xff]
      %v1406 = vld [vmem:[#allocation2 + $0x28] sm:$0xff]
      %v1407 = vld [vmem:[#allocation2 + $0x30] sm:$0xff]
      %v1408 = vld [vmem:[#allocation2 + $0x38] sm:$0xff]
      %v1409 = vld [vmem:[#allocation2 + $0x40] sm:$0xff]
      %v1410 = vld [vmem:[%s374 + $0x4] sm:$0xf]
      %v1411 = vld [vmem:[%s374 + $0x8] sm:$0xf]
      %v1412 = vld [vmem:[%s374 + $0xc] sm:$0xf]
      %v1413 = vld [vmem:[%s374 + $0x10] sm:$0xf]
      %v1414 = vld [vmem:[%s374 + $0x14] sm:$0xf]
      %v1415 = vld [vmem:[%s374 + $0x18] sm:$0xf]
      %v1416 = vld [vmem:[%s374 + $0x1c] sm:$0xf]
      %v1417 = vld [vmem:[%s374 + $0x20] sm:$0xf]
      %v1418 = vld [vmem:[%s374 + $0x24] sm:$0xf]
      %v1419 = vld [vmem:[%s374 + $0x28] sm:$0x1]
      %s1420 = scalar_lea.vmem %s1, 14
      %v1421 = vld [vmem:[%s1420] sm:$0x3]
      %v1432 = vunpack.c.l.b16 %v1410
      %v1433 = vunpack.c.l.b16 %v1411
      %v1434 = vunpack.c.l.b16 %v1412
      %v1435 = vunpack.c.l.b16 %v1413
      %v1436 = vunpack.c.l.b16 %v1414
      %v1437 = vunpack.c.l.b16 %v1415
      %v1438 = vunpack.c.l.b16 %v1416
      %v1439 = vunpack.c.l.b16 %v1417
      %v1440 = vunpack.c.l.b16 %v1418
      %v1441 = vunpack.c.l.b16 %v1419
      %v1442 = vpack.c.b16 %v1433, %v1432
      %v1443 = vpack.c.b16 %v1435, %v1434
      %v1444 = vpack.c.b16 %v1437, %v1436
      %v1445 = vpack.c.b16 %v1439, %v1438
      %v1446 = vpack.c.b16 %v1441, %v1440
      %v1448 = vshrl.u32 %v1442, 16
      %v1450 = vshll.u32 %v1442, 16
      %v1452 = vrot.slane %v1450, 1
      %v1453 = vor.u32 %v1448, %v1452
      %v1455 = vshll.u32 %v1443, 16
      %v1457 = vrot.slane %v1455, 1
      %v1458 = vsel %vm563, %v1453, %v1457
      %v1459 = vshrl.u32 %v1443, 16
      %v1461 = vor.u32 %v1459, %v1457
      %v1463 = vshll.u32 %v1444, 16
      %v1465 = vrot.slane %v1463, 1
      %v1466 = vsel %vm563, %v1461, %v1465
      %v1467 = vshrl.u32 %v1444, 16
      %v1469 = vor.u32 %v1467, %v1465
      %v1471 = vshll.u32 %v1445, 16
      %v1473 = vrot.slane %v1471, 1
      %v1474 = vsel %vm563, %v1469, %v1473
      %v1475 = vshrl.u32 %v1445, 16
      %v1477 = vor.u32 %v1475, %v1473
      %v1479 = vshll.u32 %v1446, 16
      %v1481 = vrot.slane %v1479, 1
      %v1482 = vsel %vm563, %v1477, %v1481
      %v1483 = vshrl.u32 %v1446, 16
      %v1485 = vor.u32 %v1483, %v1481
      %v1487 = vsel %vm255, %v1458, 0
      %v1490 = vsel %vm255, %v1466, 0
      %v1493 = vsel %vm255, %v1474, 0
      %v1496 = vsel %vm255, %v1482, 0
      %v1499 = vsel %vm255, %v1485, 0
      %v1502 = vsel %vm271, %v1421, 0
      %1504 = vmatprep.subr.bf16.mxu0 0
      %1505 = vmatpush1.bf16.msra.mxu0 %v1502
      %1506 = vmatprep.subr.bf16.mxu0 0
      %1507 = vmatpush1.bf16.msra.mxu0 0
      %1508 = vmatprep.subr.bf16.mxu0 0
      %1509 = vmatpush1.bf16.msra.mxu0 0
      %1510 = vmatprep.subr.bf16.mxu0 0
      %1511 = vmatpush1.bf16.msra.mxu0 0
      %1512 = vmatprep.subr.bf16.mxu0 0
      %1513 = vmatpush1.bf16.msra.mxu0 0
      %1514 = vmatprep.subr.bf16.mxu0 0
      %1515 = vmatpush1.bf16.msra.mxu0 0
      %1516 = vmatprep.subr.bf16.mxu0 0
      %1517 = vmatpush1.bf16.msra.mxu0 0
      %1518 = vmatprep.subr.bf16.mxu0 0
      %1519 = vmatpush1.bf16.msra.mxu0 0
      %1520 = vmatprep.subr.bf16.mxu0 0
      %1521 = vmatpush1.bf16.msra.mxu0 0
      %1522 = vmatprep.subr.bf16.mxu0 0
      %1523 = vmatpush1.bf16.msra.mxu0 0
      %1524 = vmatprep.subr.bf16.mxu0 0
      %1525 = vmatpush1.bf16.msra.mxu0 0
      %1526 = vmatprep.subr.bf16.mxu0 0
      %1527 = vmatpush1.bf16.msra.mxu0 0
      %1528 = vmatprep.subr.bf16.mxu0 0
      %1529 = vmatpush1.bf16.msra.mxu0 0
      %1530 = vmatprep.subr.bf16.mxu0 0
      %1531 = vmatpush1.bf16.msra.mxu0 0
      %1532 = vmatprep.subr.bf16.mxu0 0
      %1533 = vmatpush1.bf16.msra.mxu0 0
      %1534 = vmatprep.subr.bf16.mxu0 0
      %1535 = vmatpush1.bf16.msra.mxu0 0
      %1536 = vmatprep.mubr.bf16.mxu0 0
      %1537 = vmatmul.mubr.bf16.gmra.mrb[0].mxu0 %v1487
      %v1538 = vpop.f32.mrb[0].mxu0
      %v1539 = vadd.f32 0.0, %v1538
      %v1540 = vpop.f32.mrb[0].mxu0
      %v1541 = vpop.f32.mrb[0].mxu0
      %v1542 = vadd.f32 0.0, %v1541
      %v1543 = vpop.f32.mrb[0].mxu0
      %1544 = vmatprep.mubr.bf16.mxu0 0
      %1545 = vmatmul.mubr.bf16.gmra.mrb[0].mxu0 %v1490
      %v1546 = vpop.f32.mrb[0].mxu0
      %v1547 = vadd.f32 0.0, %v1546
      %v1548 = vpop.f32.mrb[0].mxu0
      %v1549 = vpop.f32.mrb[0].mxu0
      %v1550 = vadd.f32 0.0, %v1549
      %v1551 = vpop.f32.mrb[0].mxu0
      %1552 = vmatprep.mubr.bf16.mxu0 0
      %1553 = vmatmul.mubr.bf16.gmra.mrb[0].mxu0 %v1493
      %v1554 = vpop.f32.mrb[0].mxu0
      %v1555 = vadd.f32 0.0, %v1554
      %v1556 = vpop.f32.mrb[0].mxu0
      %v1557 = vpop.f32.mrb[0].mxu0
      %v1558 = vadd.f32 0.0, %v1557
      %v1559 = vpop.f32.mrb[0].mxu0
      %1560 = vmatprep.mubr.bf16.mxu0 0
      %1561 = vmatmul.mubr.bf16.gmra.mrb[0].mxu0 %v1496
      %v1562 = vpop.f32.mrb[0].mxu0
      %v1563 = vadd.f32 0.0, %v1562
      %v1564 = vpop.f32.mrb[0].mxu0
      %v1565 = vpop.f32.mrb[0].mxu0
      %v1566 = vadd.f32 0.0, %v1565
      %v1567 = vpop.f32.mrb[0].mxu0
      %1568 = vmatprep.mubr.bf16.mxu0 0
      %1569 = vmatmul.mubr.bf16.gmra.mrb[0].mxu0 %v1499
      %v1570 = vpop.f32.mrb[0].mxu0
      %v1571 = vadd.f32 0.0, %v1570
      %v1572 = vpop.f32.mrb[0].mxu0
      %v1573 = vpop.f32.mrb[0].mxu0
      %v1574 = vpop.f32.mrb[0].mxu0
      %1575 = vdwg.mxu0
      %v1576 = vadd.f32 %v1401, %v1539
      %v1577 = vadd.f32 %v1402, %v1542
      %v1578 = vadd.f32 %v1403, %v1547
      %v1579 = vadd.f32 %v1404, %v1550
      %v1580 = vadd.f32 %v1405, %v1555
      %v1581 = vadd.f32 %v1406, %v1558
      %v1582 = vadd.f32 %v1407, %v1563
      %v1583 = vadd.f32 %v1408, %v1566
      %v1584 = vadd.f32 %v1409, %v1571
      %1585 = vst [vmem:[#allocation2] sm:$0xff] %v1576
      %1586 = vst [vmem:[#allocation2 + $0x8] sm:$0xff] %v1577
      %1587 = vst [vmem:[#allocation2 + $0x10] sm:$0xff] %v1578
      %1588 = vst [vmem:[#allocation2 + $0x18] sm:$0xff] %v1579
      %1589 = vst [vmem:[#allocation2 + $0x20] sm:$0xff] %v1580
      %1590 = vst [vmem:[#allocation2 + $0x28] sm:$0xff] %v1581
      %1591 = vst [vmem:[#allocation2 + $0x30] sm:$0xff] %v1582
      %1592 = vst [vmem:[#allocation2 + $0x38] sm:$0xff] %v1583
      %1593 = vst [vmem:[#allocation2 + $0x40] sm:$0xff] %v1584
      %v1594 = vld [vmem:[#allocation2] sm:$0xff]
      %v1595 = vld [vmem:[#allocation2 + $0x8] sm:$0xff]
      %v1596 = vld [vmem:[#allocation2 + $0x10] sm:$0xff]
      %v1597 = vld [vmem:[#allocation2 + $0x18] sm:$0xff]
      %v1598 = vld [vmem:[#allocation2 + $0x20] sm:$0xff]
      %v1599 = vld [vmem:[#allocation2 + $0x28] sm:$0xff]
      %v1600 = vld [vmem:[#allocation2 + $0x30] sm:$0xff]
      %v1601 = vld [vmem:[#allocation2 + $0x38] sm:$0xff]
      %v1602 = vld [vmem:[#allocation2 + $0x40] sm:$0xff]
      %v1603 = vld [vmem:[%s196 + $0x4] sm:$0xe]
      %v1604 = vld [vmem:[%s196 + $0x8] sm:$0xf]
      %v1605 = vld [vmem:[%s196 + $0xc] sm:$0xf]
      %v1606 = vld [vmem:[%s196 + $0x10] sm:$0xf]
      %v1607 = vld [vmem:[%s196 + $0x14] sm:$0xf]
      %v1608 = vld [vmem:[%s196 + $0x18] sm:$0xf]
      %v1609 = vld [vmem:[%s196 + $0x1c] sm:$0xf]
      %v1610 = vld [vmem:[%s196 + $0x20] sm:$0xf]
      %v1611 = vld [vmem:[%s196 + $0x24] sm:$0xf]
      %v1612 = vld [vmem:[%s196 + $0x28] sm:$0x1]
      %s1613 = scalar_lea.vmem %s1, 16
      %v1614 = vld [vmem:[%s1613] sm:$0x3]
      %v1625 = vunpack.c.l.b16 %v1603
      %v1626 = vunpack.c.l.b16 %v1604
      %v1627 = vunpack.c.l.b16 %v1605
      %v1628 = vunpack.c.l.b16 %v1606
      %v1629 = vunpack.c.l.b16 %v1607
      %v1630 = vunpack.c.l.b16 %v1608
      %v1631 = vunpack.c.l.b16 %v1609
      %v1632 = vunpack.c.l.b16 %v1610
      %v1633 = vunpack.c.l.b16 %v1611
      %v1634 = vunpack.c.l.b16 %v1612
      %v1635 = vpack.c.b16 %v1626, %v1625
      %v1636 = vpack.c.b16 %v1628, %v1627
      %v1637 = vpack.c.b16 %v1630, %v1629
      %v1638 = vpack.c.b16 %v1632, %v1631
      %v1639 = vpack.c.b16 %v1634, %v1633
      %vm1640 = vcmask 1046528
      %v1641 = vrot.slane %v1635, 1
      %v1642 = vrot.slane %v1636, 1
      %v1643 = vsel %vm1640, %v1641, %v1642
      %v1644 = vrot.slane %v1637, 1
      %v1645 = vsel %vm1640, %v1642, %v1644
      %v1646 = vrot.slane %v1638, 1
      %v1647 = vsel %vm1640, %v1644, %v1646
      %v1648 = vrot.slane %v1639, 1
      %v1649 = vsel %vm1640, %v1646, %v1648
      %v1651 = vsel %vm255, %v1643, 0
      %v1654 = vsel %vm255, %v1645, 0
      %v1657 = vsel %vm255, %v1647, 0
      %v1660 = vsel %vm255, %v1649, 0
      %v1663 = vsel %vm255, %v1648, 0
      %v1666 = vsel %vm271, %v1614, 0
      %1668 = vmatprep.subr.bf16.mxu0 0
      %1669 = vmatpush1.bf16.msra.mxu0 %v1666
      %1670 = vmatprep.subr.bf16.mxu0 0
      %1671 = vmatpush1.bf16.msra.mxu0 0
      %1672 = vmatprep.subr.bf16.mxu0 0
      %1673 = vmatpush1.bf16.msra.mxu0 0
      %1674 = vmatprep.subr.bf16.mxu0 0
      %1675 = vmatpush1.bf16.msra.mxu0 0
      %1676 = vmatprep.subr.bf16.mxu0 0
      %1677 = vmatpush1.bf16.msra.mxu0 0
      %1678 = vmatprep.subr.bf16.mxu0 0
      %1679 = vmatpush1.bf16.msra.mxu0 0
      %1680 = vmatprep.subr.bf16.mxu0 0
      %1681 = vmatpush1.bf16.msra.mxu0 0
      %1682 = vmatprep.subr.bf16.mxu0 0
      %1683 = vmatpush1.bf16.msra.mxu0 0
      %1684 = vmatprep.subr.bf16.mxu0 0
      %1685 = vmatpush1.bf16.msra.mxu0 0
      %1686 = vmatprep.subr.bf16.mxu0 0
      %1687 = vmatpush1.bf16.msra.mxu0 0
      %1688 = vmatprep.subr.bf16.mxu0 0
      %1689 = vmatpush1.bf16.msra.mxu0 0
      %1690 = vmatprep.subr.bf16.mxu0 0
      %1691 = vmatpush1.bf16.msra.mxu0 0
      %1692 = vmatprep.subr.bf16.mxu0 0
      %1693 = vmatpush1.bf16.msra.mxu0 0
      %1694 = vmatprep.subr.bf16.mxu0 0
      %1695 = vmatpush1.bf16.msra.mxu0 0
      %1696 = vmatprep.subr.bf16.mxu0 0
      %1697 = vmatpush1.bf16.msra.mxu0 0
      %1698 = vmatprep.subr.bf16.mxu0 0
      %1699 = vmatpush1.bf16.msra.mxu0 0
      %1700 = vmatprep.mubr.bf16.mxu0 0
      %1701 = vmatmul.mubr.bf16.gmra.mrb[0].mxu0 %v1651
      %v1702 = vpop.f32.mrb[0].mxu0
      %v1703 = vadd.f32 0.0, %v1702
      %v1704 = vpop.f32.mrb[0].mxu0
      %v1705 = vpop.f32.mrb[0].mxu0
      %v1706 = vadd.f32 0.0, %v1705
      %v1707 = vpop.f32.mrb[0].mxu0
      %1708 = vmatprep.mubr.bf16.mxu0 0
      %1709 = vmatmul.mubr.bf16.gmra.mrb[0].mxu0 %v1654
      %v1710 = vpop.f32.mrb[0].mxu0
      %v1711 = vadd.f32 0.0, %v1710
      %v1712 = vpop.f32.mrb[0].mxu0
      %v1713 = vpop.f32.mrb[0].mxu0
      %v1714 = vadd.f32 0.0, %v1713
      %v1715 = vpop.f32.mrb[0].mxu0
      %1716 = vmatprep.mubr.bf16.mxu0 0
      %1717 = vmatmul.mubr.bf16.gmra.mrb[0].mxu0 %v1657
      %v1718 = vpop.f32.mrb[0].mxu0
      %v1719 = vadd.f32 0.0, %v1718
      %v1720 = vpop.f32.mrb[0].mxu0
      %v1721 = vpop.f32.mrb[0].mxu0
      %v1722 = vadd.f32 0.0, %v1721
      %v1723 = vpop.f32.mrb[0].mxu0
      %1724 = vmatprep.mubr.bf16.mxu0 0
      %1725 = vmatmul.mubr.bf16.gmra.mrb[0].mxu0 %v1660
      %v1726 = vpop.f32.mrb[0].mxu0
      %v1727 = vadd.f32 0.0, %v1726
      %v1728 = vpop.f32.mrb[0].mxu0
      %v1729 = vpop.f32.mrb[0].mxu0
      %v1730 = vadd.f32 0.0, %v1729
      %v1731 = vpop.f32.mrb[0].mxu0
      %1732 = vmatprep.mubr.bf16.mxu0 0
      %1733 = vmatmul.mubr.bf16.gmra.mrb[0].mxu0 %v1663
      %v1734 = vpop.f32.mrb[0].mxu0
      %v1735 = vadd.f32 0.0, %v1734
      %v1736 = vpop.f32.mrb[0].mxu0
      %v1737 = vpop.f32.mrb[0].mxu0
      %v1738 = vpop.f32.mrb[0].mxu0
      %1739 = vdwg.mxu0
      %v1740 = vadd.f32 %v1594, %v1703
      %v1741 = vadd.f32 %v1595, %v1706
      %v1742 = vadd.f32 %v1596, %v1711
      %v1743 = vadd.f32 %v1597, %v1714
      %v1744 = vadd.f32 %v1598, %v1719
      %v1745 = vadd.f32 %v1599, %v1722
      %v1746 = vadd.f32 %v1600, %v1727
      %v1747 = vadd.f32 %v1601, %v1730
      %v1748 = vadd.f32 %v1602, %v1735
      %1749 = vst [vmem:[#allocation2] sm:$0xff] %v1740
      %1750 = vst [vmem:[#allocation2 + $0x8] sm:$0xff] %v1741
      %1751 = vst [vmem:[#allocation2 + $0x10] sm:$0xff] %v1742
      %1752 = vst [vmem:[#allocation2 + $0x18] sm:$0xff] %v1743
      %1753 = vst [vmem:[#allocation2 + $0x20] sm:$0xff] %v1744
      %1754 = vst [vmem:[#allocation2 + $0x28] sm:$0xff] %v1745
      %1755 = vst [vmem:[#allocation2 + $0x30] sm:$0xff] %v1746
      %1756 = vst [vmem:[#allocation2 + $0x38] sm:$0xff] %v1747
      %1757 = vst [vmem:[#allocation2 + $0x40] sm:$0xff] %v1748
      %1758 = vst [vmem:[%s202] sm:$0xf] 0
      %1759 = vst [vmem:[%s202 + $0x4] sm:$0xf] 0
      %1760 = vst [vmem:[%s202 + $0x8] sm:$0xf] 0
      %1761 = vst [vmem:[%s202 + $0xc] sm:$0xf] 0
      %1762 = vst [vmem:[%s202 + $0x10] sm:$0xf] 0
      %1763 = vst [vmem:[%s202 + $0x14] sm:$0xf] 0
      %1764 = vst [vmem:[%s202 + $0x18] sm:$0xf] 0
      %1765 = vst [vmem:[%s202 + $0x1c] sm:$0xf] 0
      %1766 = vst [vmem:[%s202 + $0x20] sm:$0xf] 0
      %1767 = vst [vmem:[%s202 + $0x24] sm:$0xf] 0
      %1768 = vst [vmem:[%s202 + $0x28] sm:$0xf] 0
      %1769 = vst [vmem:[%s202 + $0x2c] sm:$0xf] 0
      %1770 = vst [vmem:[%s202 + $0x30] sm:$0xf] 0
      %1771 = vst [vmem:[%s202 + $0x34] sm:$0x7] 0
      %v1772 = vld [vmem:[%s2] sm:$0x1]
      %v1773 = vld [vmem:[%s3] sm:$0x1]
      %v1774 = vld [vmem:[#allocation2] sm:$0xff]
      %v1776 = vlaneseq
      %v1777 = vshrl.u32 %v1776, 7
      %v1778 = vsub.s32 0, %v1777
      %v1779 = vrot.slane %v1772, %v1778
      %v1781 = vmul.f32 %v1774, %v1779
      %v1783 = vlaneseq
      %v1784 = vshrl.u32 %v1783, 7
      %v1785 = vsub.s32 0, %v1784
      %v1786 = vrot.slane %v1773, %v1785
      %v1788 = vadd.f32 %v1781, %v1786
      %v1789 = vmax.f32 %v1788, 0.0
      %v1790 = vpack.c.bf16 %v1789, %v1789
      %v1792 = vunpack.c.l.b16 %v1790
      %v1793 = vpack.c.b16 %v1792, %v1792
      %v1795 = vshrl.u32 %v1793, 16
      %v1797 = vrot.slane %v1795, 6
      %v1798 = vshll.u32 %v1793, 16
      %v1800 = vrot.slane %v1798, 7
      %v1801 = vor.u32 %v1797, %v1800
      %v1802 = vrot.slane %v1801, 4
      %vm1805 = vcmask 1043457
      %vm1806 = vsmask.f32 7942
      %vm1807 = vmand %vm1805, %vm1806
      %v1808 = vld [vmem:[%s202 + $0x4] sm:$0xe]
      %v1809 = vsel %vm1807, %v1801, %v1808
      %1810 = vst [vmem:[%s202 + $0x4] sm:$0xe] %v1809
      %vm1811 = vcmask 1041408
      %vm1812 = vsmask.f32 1280
      %vm1813 = vmand %vm1811, %vm1812
      %v1814 = vld [vmem:[%s202 + $0x8] sm:$0x3]
      %v1815 = vsel %vm1813, %v1802, %v1814
      %1816 = vst [vmem:[%s202 + $0x8] sm:$0x3] %v1815
      %v1817 = vld [vmem:[#allocation2 + $0x9] sm:$0xff]
      %v1818 = vmul.f32 %v1817, %v1779
      %v1819 = vadd.f32 %v1818, %v1786
      %v1820 = vmax.f32 %v1819, 0.0
      %v1821 = vpack.c.bf16 %v1820, %v1820
      %v1823 = vunpack.c.l.b16 %v1821
      %v1824 = vpack.c.b16 %v1823, %v1823
      %v1826 = vshrl.u32 %v1824, 16
      %v1828 = vrot.slane %v1826, 5
      %v1829 = vshll.u32 %v1824, 16
      %v1831 = vrot.slane %v1829, 6
      %v1832 = vor.u32 %v1828, %v1831
      %v1833 = vrot.slane %v1832, 4
      %vm1836 = vcmask 1043458
      %vm1837 = vsmask.f32 7946
      %vm1838 = vmand %vm1836, %vm1837
      %v1839 = vld [vmem:[%s202 + $0x8] sm:$0xc]
      %v1840 = vsel %vm1838, %v1832, %v1839
      %1841 = vst [vmem:[%s202 + $0x8] sm:$0xc] %v1840
      %vm1842 = vcmask 1042432
      %vm1843 = vsmask.f32 2304
      %vm1844 = vmand %vm1842, %vm1843
      %v1845 = vld [vmem:[%s202 + $0xc] sm:$0x7]
      %v1846 = vsel %vm1844, %v1833, %v1845
      %1847 = vst [vmem:[%s202 + $0xc] sm:$0x7] %v1846
      %v1848 = vld [vmem:[#allocation2 + $0x12] sm:$0xff]
      %v1849 = vmul.f32 %v1848, %v1779
      %v1850 = vadd.f32 %v1849, %v1786
      %v1851 = vmax.f32 %v1850, 0.0
      %v1852 = vpack.c.bf16 %v1851, %v1851
      %v1854 = vunpack.c.l.b16 %v1852
      %v1855 = vpack.c.b16 %v1854, %v1854
      %v1857 = vshll.u32 %v1855, 16
      %v1859 = vrot.slane %v1857, 5
      %v1860 = vshrl.u32 %v1855, 16
      %v1862 = vrot.slane %v1860, 4
      %v1863 = vor.u32 %v1862, %v1859
      %v1864 = vrot.slane %v1863, 4
      %vm1867 = vcmask 1043459
      %vm1868 = vsmask.f32 7950
      %vm1869 = vmand %vm1867, %vm1868
      %v1870 = vld [vmem:[%s202 + $0xc] sm:$0x8]
      %v1871 = vsel %vm1869, %v1859, %v1870
      %1872 = vst [vmem:[%s202 + $0xc] sm:$0x8] %v1871
      %vm1873 = vcmask 1043456
      %vm1874 = vsmask.f32 3328
      %vm1875 = vmand %vm1873, %vm1874
      %v1876 = vld [vmem:[%s202 + $0x10] sm:$0xf]
      %v1877 = vsel %vm1875, %v1864, %v1876
      %1878 = vst [vmem:[%s202 + $0x10] sm:$0xf] %v1877
      %v1879 = vld [vmem:[#allocation2 + $0x1b] sm:$0xff]
      %v1880 = vmul.f32 %v1879, %v1779
      %v1881 = vadd.f32 %v1880, %v1786
      %v1882 = vmax.f32 %v1881, 0.0
      %v1883 = vpack.c.bf16 %v1882, %v1882
      %v1885 = vunpack.c.l.b16 %v1883
      %v1886 = vpack.c.b16 %v1885, %v1885
      %v1888 = vshrl.u32 %v1886, 16
      %v1890 = vrot.slane %v1888, 7
      %v1891 = vshll.u32 %v1886, 16
      %v1893 = vor.u32 %v1890, %v1891
      %v1894 = vrot.slane %v1890, 4
      %vm1897 = vsmask.f32 7938
      %vm1898 = vmand %vm1873, %vm1897
      %v1899 = vld [vmem:[%s202 + $0x14] sm:$0xf]
      %v1900 = vsel %vm1898, %v1893, %v1899
      %1901 = vst [vmem:[%s202 + $0x14] sm:$0xf] %v1900
      %vm1902 = vcmask 1040384
      %vm1903 = vsmask.f32 256
      %vm1904 = vmand %vm1902, %vm1903
      %v1905 = vld [vmem:[%s202 + $0x18] sm:$0x1]
      %v1906 = vsel %vm1904, %v1894, %v1905
      %1907 = vst [vmem:[%s202 + $0x18] sm:$0x1] %v1906
      %v1908 = vld [vmem:[#allocation2 + $0x24] sm:$0xff]
      %v1909 = vmul.f32 %v1908, %v1779
      %v1910 = vadd.f32 %v1909, %v1786
      %v1911 = vmax.f32 %v1910, 0.0
      %v1912 = vpack.c.bf16 %v1911, %v1911
      %v1914 = vunpack.c.l.b16 %v1912
      %v1915 = vpack.c.b16 %v1914, %v1914
      %v1917 = vshrl.u32 %v1915, 16
      %v1919 = vrot.slane %v1917, 6
      %v1920 = vshll.u32 %v1915, 16
      %v1922 = vrot.slane %v1920, 7
      %v1923 = vor.u32 %v1919, %v1922
      %v1924 = vrot.slane %v1923, 4
      %v1927 = vld [vmem:[%s202 + $0x18] sm:$0xe]
      %v1928 = vsel %vm1807, %v1923, %v1927
      %1929 = vst [vmem:[%s202 + $0x18] sm:$0xe] %v1928
      %v1930 = vld [vmem:[%s202 + $0x1c] sm:$0x3]
      %v1931 = vsel %vm1813, %v1924, %v1930
      %1932 = vst [vmem:[%s202 + $0x1c] sm:$0x3] %v1931
      %v1933 = vld [vmem:[#allocation2 + $0x2d] sm:$0xff]
      %v1934 = vmul.f32 %v1933, %v1779
      %v1935 = vadd.f32 %v1934, %v1786
      %v1936 = vmax.f32 %v1935, 0.0
      %v1937 = vpack.c.bf16 %v1936, %v1936
      %v1939 = vunpack.c.l.b16 %v1937
      %v1940 = vpack.c.b16 %v1939, %v1939
      %v1942 = vshrl.u32 %v1940, 16
      %v1944 = vrot.slane %v1942, 5
      %v1945 = vshll.u32 %v1940, 16
      %v1947 = vrot.slane %v1945, 6
      %v1948 = vor.u32 %v1944, %v1947
      %v1949 = vrot.slane %v1948, 4
      %v1952 = vld [vmem:[%s202 + $0x1c] sm:$0xc]
      %v1953 = vsel %vm1838, %v1948, %v1952
      %1954 = vst [vmem:[%s202 + $0x1c] sm:$0xc] %v1953
      %v1955 = vld [vmem:[%s202 + $0x20] sm:$0x7]
      %v1956 = vsel %vm1844, %v1949, %v1955
      %1957 = vst [vmem:[%s202 + $0x20] sm:$0x7] %v1956
      %v1958 = vld [vmem:[#allocation2 + $0x36] sm:$0xff]
      %v1959 = vmul.f32 %v1958, %v1779
      %v1960 = vadd.f32 %v1959, %v1786
      %v1961 = vmax.f32 %v1960, 0.0
      %v1962 = vpack.c.bf16 %v1961, %v1961
      %v1964 = vunpack.c.l.b16 %v1962
      %v1965 = vpack.c.b16 %v1964, %v1964
      %v1967 = vshll.u32 %v1965, 16
      %v1969 = vrot.slane %v1967, 5
      %v1970 = vshrl.u32 %v1965, 16
      %v1972 = vrot.slane %v1970, 4
      %v1973 = vor.u32 %v1972, %v1969
      %v1974 = vrot.slane %v1973, 4
      %v1977 = vld [vmem:[%s202 + $0x20] sm:$0x8]
      %v1978 = vsel %vm1869, %v1969, %v1977
      %1979 = vst [vmem:[%s202 + $0x20] sm:$0x8] %v1978
      %v1980 = vld [vmem:[%s202 + $0x24] sm:$0xf]
      %v1981 = vsel %vm1875, %v1974, %v1980
      %1982 = vst [vmem:[%s202 + $0x24] sm:$0xf] %v1981
      %v1983 = vld [vmem:[#allocation2 + $0x3f] sm:$0xff]
      %v1984 = vmul.f32 %v1983, %v1779
      %v1985 = vadd.f32 %v1984, %v1786
      %v1986 = vmax.f32 %v1985, 0.0
      %v1987 = vpack.c.bf16 %v1986, %v1986
      %v1989 = vunpack.c.l.b16 %v1987
      %v1990 = vpack.c.b16 %v1989, %v1989
      %v1992 = vshrl.u32 %v1990, 16
      %v1994 = vrot.slane %v1992, 7
      %v1995 = vshll.u32 %v1990, 16
      %v1997 = vor.u32 %v1994, %v1995
      %v1998 = vrot.slane %v1994, 4
      %v2001 = vld [vmem:[%s202 + $0x28] sm:$0xf]
      %v2002 = vsel %vm1898, %v1997, %v2001
      %2003 = vst [vmem:[%s202 + $0x28] sm:$0xf] %v2002
      %v2004 = vld [vmem:[%s202 + $0x2c] sm:$0x1]
      %v2005 = vsel %vm1904, %v1998, %v2004
      %2006 = vst [vmem:[%s202 + $0x2c] sm:$0x1] %v2005
      %p2007 = scmp.lt.s32.totalorder %s15, 1
      %s2008 = scalar_select %p2007, %s15, 1
      %s2009 = smul.addr %s2008, 14
      %s2010 = smul.addr %s2009, 4
      %s2011 = scalar_lea.vmem %s4, %s2010
      // Predicated region
      $region37: #{residual_block_forward.2} parent=35 // pred_check
        %p2012 = pneg %p122
      $region38: #{residual_block_forward.2} parent=35 // pred_check_branch
        %2014 = sbr.rel (%p2012) target = $region40
      $region39: #{residual_block_forward.2} parent=35 // pred_region
        _
      $region40: #{residual_block_forward.2} parent=35 // pred_fallthru
        _
    $region36: #{residual_block_forward.2} parent=5 // pred_fallthru
      _
    %p2015 = scmp.le.s32.totalorder 2, %s10
    // Predicated region
    $region41: #{residual_block_forward.2} parent=5 // pred_check
      %p2016 = pneg %p2015
    $region42: #{residual_block_forward.2} parent=5 // pred_check_branch
      %2018 = sbr.rel (%p2016) target = $region44
    $region43: #{residual_block_forward.2} parent=5 // pred_region
      %s2019 = ssub.s32 %s10, 2
      // Predicated region
      $region45: #{residual_block_forward.2} parent=43 // pred_check
        %p2020 = pneg %p128
      $region46: #{residual_block_forward.2} parent=43 // pred_check_branch
        %2022 = sbr.rel (%p2020) target = $region48
      $region47: #{residual_block_forward.2} parent=43 // pred_region
        %p2023 = scmp.lt.s32.totalorder %s16, 1
        %s2024 = scalar_select %p2023, %s16, 1
        %s2025 = smul.addr %s2024, 14
        %s2026 = smul.addr %s2025, 4
        %s2027 = scalar_lea.vmem %s4, %s2026
      $region48: #{residual_block_forward.2} parent=43 // pred_fallthru
        _
    $region44: #{residual_block_forward.2} parent=5 // pred_fallthru
      _
  $region6: #{residual_block_forward.2} parent=0 // loop_footer
    %s14 = sadd.s32 1, %s10
  $region7: #{residual_block_forward.2} parent=0 // loop_footer_branch
    %9 = sbr.rel target = $region3
  $region8: #{residual_block_forward.2} parent=0 // loop_exit
    _

// kernel: residual_block_forward.3
$region0: #{residual_block_forward.3}
  #allocation0 [shape = 'u32[]', space=smem, size = 0x4, offset = 0x4, fixed_abs, tag = 'smem constant byte address 0x4 - core index']
  #allocation1 [shape = 'u32[144,128]{1,0:T(1,128)}', space=vmem, size = 0x12000, scoped, tag = 'internal scratch']
  #allocation2 [shape = 'f32[80,128]{1,0:T(8,128)}', space=vmem, size = 0xa000, scoped, tag = 'scratch operand']
  %s0 = inlined_call_operand.vmem [shape: bf16[2,110,128], index: 0, kind: input, shape index: {}]
  %s1 = inlined_call_operand.vmem [shape: bf16[9,128,128], index: 1, kind: input, shape index: {}]
  %s2 = inlined_call_operand.vmem [shape: f32[1,128], index: 2, kind: input, shape index: {}]
  %s3 = inlined_call_operand.vmem [shape: f32[1,128], index: 3, kind: input, shape index: {}]
  %s4 = inlined_call_operand.vmem [shape: bf16[2,80,4], index: 4, kind: input, shape index: {}]
  %s5 = inlined_call_operand.vmem [shape: bf16[4,128], index: 5, kind: input, shape index: {}]
  %s6 = inlined_call_operand.vmem [shape: f32[1,128], index: 6, kind: input, shape index: {}]
  %s7 = inlined_call_operand.vmem [shape: f32[1,128], index: 7, kind: input, shape index: {}]
  %s8 = inlined_call_operand.vmem [shape: f32[2,80,128], index: 8, kind: output, shape index: {}]
  %s9 = sld [smem:[#allocation0]]
  $region65: #{residual_block_forward.3} parent=0
    _
  %s11 = ssub.s32 1, %s9
  %s12 = scalar_select 0, %s11, %s9
  loop: start=0, step=1, limit=4
  $region2: #{residual_block_forward.3} parent=0 // loop_pre_header
    _
  $region3: #{residual_block_forward.3} parent=0 // loop_header
    %s14 = sphi 0, %s18
    %p15 = scmp.ge.s32.totalorder %s14, 4
    %s24 = sphi 0, %s26
    %s27 = sphi 0, %s24
    %s28 = sphi 0, %s27
    %s44 = sphi 0, %s28
    %s48 = sphi 0, %s48
    %s50 = sphi 0, %s48
    %s51 = sphi 0, %s50
    %s65 = sphi 0, %s51
    %s69 = sphi 0, %s69
    %s71 = sphi 0, %s69
    %s72 = sphi 0, %s71
    %s86 = sphi 0, %s72
    %s90 = sphi 0, %s90
    %s92 = sphi 0, %s90
    %s93 = sphi 0, %s92
    %s107 = sphi 0, %s93
    %s113 = sphi 0, %s115
    %s116 = sphi 0, %s113
    %s117 = sphi 0, %s116
    %s133 = sphi 0, %s117
    %s137 = sphi 0, %s137
    %s139 = sphi 0, %s137
    %s140 = sphi 0, %s139
    %s154 = sphi 0, %s140
    %s158 = sphi 0, %s158
    %s160 = sphi 0, %s158
    %s161 = sphi 0, %s160
    %s175 = sphi 0, %s161
    %s179 = sphi 0, %s179
    %s181 = sphi 0, %s179
    %s182 = sphi 0, %s181
    %s196 = sphi 0, %s182
    %s202 = sphi 0, %s204
    %s205 = sphi 0, %s202
    %s206 = sphi 0, %s205
    %s222 = sphi 0, %s206
  $region4: #{residual_block_forward.3} parent=0 // loop_header_branch
    %17 = sbr.rel (%p15) target = $region8
  $region5: #{residual_block_forward.3} parent=0 // loop_body
    %s19 = ssub.s32 %s14, 1
    %s20 = ssub.s32 %s14, 2
    %s21 = sadd.s32 %s14, 1
    %s22 = ssub.s32 %s14, %s21
    %p23 = scmp.eq.s32.totalorder %s22, 0
    %s25 = sadd.s32 %s24, 1
    %s26 = scalar_select %p23, %s24, %s25
    %p29 = pneg %p23
    %p30 = scmp.eq.s32.totalorder %s14, 1
    %p31 = por %p29, %p30
    %p32 = scmp.ne.s32.totalorder %s24, %s27
    %p33 = scmp.eq.s32.totalorder %s14, 0
    %p34 = por %p32, %p33
    %p35 = scmp.ne.s32.totalorder %s24, %s27
    %p36 = scmp.eq.s32.totalorder %s19, 1
    %p37 = por %p35, %p36
    %p38 = scmp.ne.s32.totalorder %s27, %s28
    %p39 = scmp.eq.s32.totalorder %s19, 0
    %p40 = por %p38, %p39
    %p41 = scmp.ne.s32.totalorder %s27, %s28
    %p42 = scmp.eq.s32.totalorder %s20, 1
    %p43 = por %p41, %p42
    %p45 = scmp.ne.s32.totalorder %s28, %s44
    %p46 = scmp.eq.s32.totalorder %s20, 0
    %p47 = por %p45, %p46
    %s49 = sadd.s32 %s48, 1
    %p52 = scmp.eq.s32.totalorder %s14, 1
    %p53 = scmp.ne.s32.totalorder %s48, %s50
    %p54 = scmp.eq.s32.totalorder %s14, 0
    %p55 = por %p53, %p54
    %p56 = scmp.ne.s32.totalorder %s48, %s50
    %p57 = scmp.eq.s32.totalorder %s19, 1
    %p58 = por %p56, %p57
    %p59 = scmp.ne.s32.totalorder %s50, %s51
    %p60 = scmp.eq.s32.totalorder %s19, 0
    %p61 = por %p59, %p60
    %p62 = scmp.ne.s32.totalorder %s50, %s51
    %p63 = scmp.eq.s32.totalorder %s20, 1
    %p64 = por %p62, %p63
    %p66 = scmp.ne.s32.totalorder %s51, %s65
    %p67 = scmp.eq.s32.totalorder %s20, 0
    %p68 = por %p66, %p67
    %s70 = sadd.s32 %s69, 1
    %p73 = scmp.eq.s32.totalorder %s14, 1
    %p74 = scmp.ne.s32.totalorder %s69, %s71
    %p75 = scmp.eq.s32.totalorder %s14, 0
    %p76 = por %p74, %p75
    %p77 = scmp.ne.s32.totalorder %s69, %s71
    %p78 = scmp.eq.s32.totalorder %s19, 1
    %p79 = por %p77, %p78
    %p80 = scmp.ne.s32.totalorder %s71, %s72
    %p81 = scmp.eq.s32.totalorder %s19, 0
    %p82 = por %p80, %p81
    %p83 = scmp.ne.s32.totalorder %s71, %s72
    %p84 = scmp.eq.s32.totalorder %s20, 1
    %p85 = por %p83, %p84
    %p87 = scmp.ne.s32.totalorder %s72, %s86
    %p88 = scmp.eq.s32.totalorder %s20, 0
    %p89 = por %p87, %p88
    %s91 = sadd.s32 %s90, 1
    %p94 = scmp.eq.s32.totalorder %s14, 1
    %p95 = scmp.ne.s32.totalorder %s90, %s92
    %p96 = scmp.eq.s32.totalorder %s14, 0
    %p97 = por %p95, %p96
    %p98 = scmp.ne.s32.totalorder %s90, %s92
    %p99 = scmp.eq.s32.totalorder %s19, 1
    %p100 = por %p98, %p99
    %p101 = scmp.ne.s32.totalorder %s92, %s93
    %p102 = scmp.eq.s32.totalorder %s19, 0
    %p103 = por %p101, %p102
    %p104 = scmp.ne.s32.totalorder %s92, %s93
    %p105 = scmp.eq.s32.totalorder %s20, 1
    %p106 = por %p104, %p105
    %p108 = scmp.ne.s32.totalorder %s93, %s107
    %p109 = scmp.eq.s32.totalorder %s20, 0
    %p110 = por %p108, %p109
    %s111 = ssub.s32 %s14, %s21
    %p112 = scmp.eq.s32.totalorder %s111, 0
    %s114 = sadd.s32 %s113, 1
    %s115 = scalar_select %p112, %s113, %s114
    %p118 = pneg %p112
    %p119 = scmp.eq.s32.totalorder %s14, 1
    %p120 = por %p118, %p119
    %p121 = scmp.ne.s32.totalorder %s113, %s116
    %p122 = scmp.eq.s32.totalorder %s14, 0
    %p123 = por %p121, %p122
    %p124 = scmp.ne.s32.totalorder %s113, %s116
    %p125 = scmp.eq.s32.totalorder %s19, 1
    %p126 = por %p124, %p125
    %p127 = scmp.ne.s32.totalorder %s116, %s117
    %p128 = scmp.eq.s32.totalorder %s19, 0
    %p129 = por %p127, %p128
    %p130 = scmp.ne.s32.totalorder %s116, %s117
    %p131 = scmp.eq.s32.totalorder %s20, 1
    %p132 = por %p130, %p131
    %p134 = scmp.ne.s32.totalorder %s117, %s133
    %p135 = scmp.eq.s32.totalorder %s20, 0
    %p136 = por %p134, %p135
    %s138 = sadd.s32 %s137, 1
    %p141 = scmp.eq.s32.totalorder %s14, 1
    %p142 = scmp.ne.s32.totalorder %s137, %s139
    %p143 = scmp.eq.s32.totalorder %s14, 0
    %p144 = por %p142, %p143
    %p145 = scmp.ne.s32.totalorder %s137, %s139
    %p146 = scmp.eq.s32.totalorder %s19, 1
    %p147 = por %p145, %p146
    %p148 = scmp.ne.s32.totalorder %s139, %s140
    %p149 = scmp.eq.s32.totalorder %s19, 0
    %p150 = por %p148, %p149
    %p151 = scmp.ne.s32.totalorder %s139, %s140
    %p152 = scmp.eq.s32.totalorder %s20, 1
    %p153 = por %p151, %p152
    %p155 = scmp.ne.s32.totalorder %s140, %s154
    %p156 = scmp.eq.s32.totalorder %s20, 0
    %p157 = por %p155, %p156
    %s159 = sadd.s32 %s158, 1
    %p162 = scmp.eq.s32.totalorder %s14, 1
    %p163 = scmp.ne.s32.totalorder %s158, %s160
    %p164 = scmp.eq.s32.totalorder %s14, 0
    %p165 = por %p163, %p164
    %p166 = scmp.ne.s32.totalorder %s158, %s160
    %p167 = scmp.eq.s32.totalorder %s19, 1
    %p168 = por %p166, %p167
    %p169 = scmp.ne.s32.totalorder %s160, %s161
    %p170 = scmp.eq.s32.totalorder %s19, 0
    %p171 = por %p169, %p170
    %p172 = scmp.ne.s32.totalorder %s160, %s161
    %p173 = scmp.eq.s32.totalorder %s20, 1
    %p174 = por %p172, %p173
    %p176 = scmp.ne.s32.totalorder %s161, %s175
    %p177 = scmp.eq.s32.totalorder %s20, 0
    %p178 = por %p176, %p177
    %s180 = sadd.s32 %s179, 1
    %p183 = scmp.eq.s32.totalorder %s14, 1
    %p184 = scmp.ne.s32.totalorder %s179, %s181
    %p185 = scmp.eq.s32.totalorder %s14, 0
    %p186 = por %p184, %p185
    %p187 = scmp.ne.s32.totalorder %s179, %s181
    %p188 = scmp.eq.s32.totalorder %s19, 1
    %p189 = por %p187, %p188
    %p190 = scmp.ne.s32.totalorder %s181, %s182
    %p191 = scmp.eq.s32.totalorder %s19, 0
    %p192 = por %p190, %p191
    %p193 = scmp.ne.s32.totalorder %s181, %s182
    %p194 = scmp.eq.s32.totalorder %s20, 1
    %p195 = por %p193, %p194
    %p197 = scmp.ne.s32.totalorder %s182, %s196
    %p198 = scmp.eq.s32.totalorder %s20, 0
    %p199 = por %p197, %p198
    %s200 = ssub.s32 %s14, %s21
    %p201 = scmp.eq.s32.totalorder %s200, 0
    %s203 = sadd.s32 %s202, 1
    %s204 = scalar_select %p201, %s202, %s203
    %p207 = pneg %p201
    %p208 = scmp.eq.s32.totalorder %s14, 1
    %p209 = por %p207, %p208
    %p210 = scmp.ne.s32.totalorder %s202, %s205
    %p211 = scmp.eq.s32.totalorder %s14, 0
    %p212 = por %p210, %p211
    %p213 = scmp.ne.s32.totalorder %s202, %s205
    %p214 = scmp.eq.s32.totalorder %s19, 1
    %p215 = por %p213, %p214
    %p216 = scmp.ne.s32.totalorder %s205, %s206
    %p217 = scmp.eq.s32.totalorder %s19, 0
    %p218 = por %p216, %p217
    %p219 = scmp.ne.s32.totalorder %s205, %s206
    %p220 = scmp.eq.s32.totalorder %s20, 1
    %p221 = por %p219, %p220
    %p223 = scmp.ne.s32.totalorder %s206, %s222
    %p224 = scmp.eq.s32.totalorder %s20, 0
    %p225 = por %p223, %p224
    %p226 = scmp.le.s32.totalorder 1, %s14
    %p227 = scmp.lt.s32.totalorder %s14, 3
    %p228 = pnand %p226, %p227
    %p229 = pneg %p228
    // Predicated region
    $region9: #{residual_block_forward.3} parent=5 // pred_check
      _
    $region10: #{residual_block_forward.3} parent=5 // pred_check_branch
      %231 = sbr.rel (%p228) target = $region12
    $region11: #{residual_block_forward.3} parent=5 // pred_region
      %s232 = ssub.s32 %s14, 1
      // Predicated region
      $region13: #{residual_block_forward.3} parent=11 // pred_check
        %p233 = pneg %p61
      $region14: #{residual_block_forward.3} parent=11 // pred_check_branch
        %235 = sbr.rel (%p233) target = $region16
      $region15: #{residual_block_forward.3} parent=11 // pred_region
        _
      $region16: #{residual_block_forward.3} parent=11 // pred_fallthru
        _
      // Predicated region
      $region17: #{residual_block_forward.3} parent=11 // pred_check
        %p236 = pneg %p82
      $region18: #{residual_block_forward.3} parent=11 // pred_check_branch
        %238 = sbr.rel (%p236) target = $region20
      $region19: #{residual_block_forward.3} parent=11 // pred_region
        _
      $region20: #{residual_block_forward.3} parent=11 // pred_fallthru
        _
      // Predicated region
      $region21: #{residual_block_forward.3} parent=11 // pred_check
        %p239 = pneg %p103
      $region22: #{residual_block_forward.3} parent=11 // pred_check_branch
        %241 = sbr.rel (%p239) target = $region24
      $region23: #{residual_block_forward.3} parent=11 // pred_region
        _
      $region24: #{residual_block_forward.3} parent=11 // pred_fallthru
        _
      // Predicated region
      $region25: #{residual_block_forward.3} parent=11 // pred_check
        %p242 = pneg %p150
      $region26: #{residual_block_forward.3} parent=11 // pred_check_branch
        %244 = sbr.rel (%p242) target = $region28
      $region27: #{residual_block_forward.3} parent=11 // pred_region
        _
      $region28: #{residual_block_forward.3} parent=11 // pred_fallthru
        _
      // Predicated region
      $region29: #{residual_block_forward.3} parent=11 // pred_check
        %p245 = pneg %p171
      $region30: #{residual_block_forward.3} parent=11 // pred_check_branch
        %247 = sbr.rel (%p245) target = $region32
      $region31: #{residual_block_forward.3} parent=11 // pred_region
        _
      $region32: #{residual_block_forward.3} parent=11 // pred_fallthru
        _
      // Predicated region
      $region33: #{residual_block_forward.3} parent=11 // pred_check
        %p248 = pneg %p192
      $region34: #{residual_block_forward.3} parent=11 // pred_check_branch
        %250 = sbr.rel (%p248) target = $region36
      $region35: #{residual_block_forward.3} parent=11 // pred_region
        _
      $region36: #{residual_block_forward.3} parent=11 // pred_fallthru
        _
    $region12: #{residual_block_forward.3} parent=5 // pred_fallthru
      _
    %p251 = scmp.lt.s32.totalorder %s14, 2
    // Predicated region
    $region37: #{residual_block_forward.3} parent=5 // pred_check
      %p252 = pneg %p251
    $region38: #{residual_block_forward.3} parent=5 // pred_check_branch
      %254 = sbr.rel (%p252) target = $region40
    $region39: #{residual_block_forward.3} parent=5 // pred_region
      // Predicated region
      $region41: #{residual_block_forward.3} parent=39 // pred_check
        %p255 = pneg %p34
      $region42: #{residual_block_forward.3} parent=39 // pred_check_branch
        %257 = sbr.rel (%p255) target = $region44
      $region43: #{residual_block_forward.3} parent=39 // pred_region
        %p258 = scmp.lt.s32.totalorder %s14, 1
        %s259 = scalar_select %p258, %s14, 1
        %s260 = smul.addr %s259, 14
        %s261 = smul.addr %s260, 4
        %s262 = scalar_lea.vmem %s0, %s261
      $region44: #{residual_block_forward.3} parent=39 // pred_fallthru
        _
      // Predicated region
      $region45: #{residual_block_forward.3} parent=39 // pred_check
        %p263 = pneg %p123
      $region46: #{residual_block_forward.3} parent=39 // pred_check_branch
        %265 = sbr.rel (%p263) target = $region48
      $region47: #{residual_block_forward.3} parent=39 // pred_region
        %p266 = scmp.lt.s32.totalorder %s14, 1
        %s267 = scalar_select %p266, %s14, 1
        %s268 = smul.addr %s267, 10
        %s269 = smul.addr %s268, 4
        %s270 = scalar_lea.vmem %s4, %s269
      $region48: #{residual_block_forward.3} parent=39 // pred_fallthru
        _
    $region40: #{residual_block_forward.3} parent=5 // pred_fallthru
      _
    %p271 = scmp.le.s32.totalorder 1, %s14
    %p272 = scmp.lt.s32.totalorder %s14, 3
    %p273 = pnand %p271, %p272
    %p274 = pneg %p273
    // Predicated region
    $region49: #{residual_block_forward.3} parent=5 // pred_check
      _
    $region50: #{residual_block_forward.3} parent=5 // pred_check_branch
      %276 = sbr.rel (%p273) target = $region52
    $region51: #{residual_block_forward.3} parent=5 // pred_region
      %s277 = ssub.s32 %s14, 1
      %p278 = scmp.lt.s32.totalorder %s19, 1
      %s279 = scalar_select %p278, %s19, 1
      %s280 = smul.addr %s279, 14
      %s281 = smul.addr %s280, 4
      %s282 = scalar_lea.vmem %s0, %s281
      %p283 = pneg %p40
      %p284 = pneg %p37
      %p285 = pneg %p61
      %p286 = pneg %p58
      %p287 = pneg %p82
      %p288 = pneg %p79
      %p289 = pneg %p103
      %p290 = pneg %p100
      %p291 = scmp.lt.s32.totalorder %s19, 1
      %s292 = scalar_select %p291, %s19, 1
      %s293 = smul.addr %s292, 10
      %s294 = smul.addr %s293, 4
      %s295 = scalar_lea.vmem %s4, %s294
      %p296 = pneg %p129
      %p297 = pneg %p126
      %p298 = pneg %p150
      %p299 = pneg %p147
      %p300 = pneg %p171
      %p301 = pneg %p168
      %p302 = pneg %p192
      %p303 = pneg %p189
      %p304 = pneg %p218
      %p305 = pneg %p215
      %p306 = scmp.lt.s32.totalorder %s19, 1
      %s307 = scalar_select %p306, %s19, 1
      %s308 = smul.addr %s307, 10
      %s309 = smul.addr %s308, 8
      %s310 = scalar_lea.vmem %s8, %s309
      %p311 = scmp.lt.s32.totalorder %s19, 1
      %s312 = scalar_select %p311, %s19, 1
      %s313 = smul.addr %s312, 14
      %s314 = smul.addr %s313, 4
      %s315 = scalar_lea.vmem %s0, %s314
      %p316 = scmp.lt.s32.totalorder %s19, 1
      %s317 = scalar_select %p316, %s19, 1
      %s318 = smul.addr %s317, 10
      %s319 = smul.addr %s318, 4
      %s320 = scalar_lea.vmem %s4, %s319
      %p321 = scmp.lt.s32.totalorder %s19, 1
      %s322 = scalar_select %p321, %s19, 1
      %s323 = smul.addr %s322, 10
      %s324 = smul.addr %s323, 8
      %s325 = scalar_lea.vmem %s8, %s324
      %327 = vst [vmem:[#allocation2] sm:$0xff] 0.0
      %328 = vst [vmem:[#allocation2 + $0x8] sm:$0xff] 0.0
      %329 = vst [vmem:[#allocation2 + $0x10] sm:$0xff] 0.0
      %330 = vst [vmem:[#allocation2 + $0x18] sm:$0xff] 0.0
      %331 = vst [vmem:[#allocation2 + $0x20] sm:$0xff] 0.0
      %332 = vst [vmem:[#allocation2 + $0x28] sm:$0xff] 0.0
      %333 = vst [vmem:[#allocation2 + $0x30] sm:$0xff] 0.0
      %334 = vst [vmem:[#allocation2 + $0x38] sm:$0xff] 0.0
      %335 = vst [vmem:[#allocation2 + $0x40] sm:$0xff] 0.0
      %336 = vst [vmem:[#allocation2 + $0x48] sm:$0xff] 0.0
      %v337 = vld [vmem:[#allocation2] sm:$0xff]
      %v338 = vld [vmem:[#allocation2 + $0x8] sm:$0xff]
      %v339 = vld [vmem:[#allocation2 + $0x10] sm:$0xff]
      %v340 = vld [vmem:[#allocation2 + $0x18] sm:$0xff]
      %v341 = vld [vmem:[#allocation2 + $0x20] sm:$0xff]
      %v342 = vld [vmem:[#allocation2 + $0x28] sm:$0xff]
      %v343 = vld [vmem:[#allocation2 + $0x30] sm:$0xff]
      %v344 = vld [vmem:[#allocation2 + $0x38] sm:$0xff]
      %v345 = vld [vmem:[#allocation2 + $0x40] sm:$0xff]
      %v346 = vld [vmem:[#allocation2 + $0x48] sm:$0xff]
      %v347 = vld [vmem:[%s315] sm:$0xf]
      %v348 = vld [vmem:[%s315 + $0x4] sm:$0xf]
      %v349 = vld [vmem:[%s315 + $0x8] sm:$0xf]
      %v350 = vld [vmem:[%s315 + $0xc] sm:$0xf]
      %v351 = vld [vmem:[%s315 + $0x10] sm:$0xf]
      %v352 = vld [vmem:[%s315 + $0x14] sm:$0xf]
      %v353 = vld [vmem:[%s315 + $0x18] sm:$0xf]
      %v354 = vld [vmem:[%s315 + $0x1c] sm:$0xf]
      %v355 = vld [vmem:[%s315 + $0x20] sm:$0xf]
      %v356 = vld [vmem:[%s315 + $0x24] sm:$0xf]
      %v357 = vld [vmem:[%s1] sm:$0xf]
      %v358 = vld [vmem:[%s1 + $0x4] sm:$0xf]
      %v359 = vld [vmem:[%s1 + $0x8] sm:$0xf]
      %v360 = vld [vmem:[%s1 + $0xc] sm:$0xf]
      %v361 = vld [vmem:[%s1 + $0x10] sm:$0xf]
      %v362 = vld [vmem:[%s1 + $0x14] sm:$0xf]
      %v363 = vld [vmem:[%s1 + $0x18] sm:$0xf]
      %v364 = vld [vmem:[%s1 + $0x1c] sm:$0xf]
      %v365 = vld [vmem:[%s1 + $0x20] sm:$0xf]
      %v366 = vld [vmem:[%s1 + $0x24] sm:$0xf]
      %v367 = vld [vmem:[%s1 + $0x28] sm:$0xf]
      %v368 = vld [vmem:[%s1 + $0x2c] sm:$0xf]
      %v369 = vld [vmem:[%s1 + $0x30] sm:$0xf]
      %v370 = vld [vmem:[%s1 + $0x34] sm:$0xf]
      %v371 = vld [vmem:[%s1 + $0x38] sm:$0xf]
      %v372 = vld [vmem:[%s1 + $0x3c] sm:$0xf]
      %v383 = vunpack.c.l.b16 %v347
      %v384 = vunpack.c.l.b16 %v348
      %v385 = vunpack.c.l.b16 %v349
      %v386 = vunpack.c.l.b16 %v350
      %v387 = vunpack.c.l.b16 %v351
      %v388 = vunpack.c.l.b16 %v352
      %v389 = vunpack.c.l.b16 %v353
      %v390 = vunpack.c.l.b16 %v354
      %v391 = vunpack.c.l.b16 %v355
      %v392 = vunpack.c.l.b16 %v356
      %v393 = vpack.c.b16 %v384, %v383
      %v394 = vpack.c.b16 %v386, %v385
      %v395 = vpack.c.b16 %v388, %v387
      %v396 = vpack.c.b16 %v390, %v389
      %v397 = vpack.c.b16 %v392, %v391
      %v419 = vunpack.c.l.b16 %v357
      %v420 = vunpack.c.l.b16 %v358
      %v421 = vunpack.c.l.b16 %v359
      %v422 = vunpack.c.l.b16 %v360
      %v423 = vunpack.c.l.b16 %v361
      %v424 = vunpack.c.l.b16 %v362
      %v425 = vunpack.c.l.b16 %v363
      %v426 = vunpack.c.l.b16 %v364
      %v427 = vunpack.c.l.b16 %v365
      %v428 = vunpack.c.l.b16 %v366
      %v429 = vunpack.c.l.b16 %v367
      %v430 = vunpack.c.l.b16 %v368
      %v431 = vunpack.c.l.b16 %v369
      %v432 = vunpack.c.l.b16 %v370
      %v433 = vunpack.c.l.b16 %v371
      %v434 = vunpack.c.l.b16 %v372
      %v435 = vpack.c.b16 %v420, %v419
      %v436 = vpack.c.b16 %v422, %v421
      %v437 = vpack.c.b16 %v424, %v423
      %v438 = vpack.c.b16 %v426, %v425
      %v439 = vpack.c.b16 %v428, %v427
      %v440 = vpack.c.b16 %v430, %v429
      %v441 = vpack.c.b16 %v432, %v431
      %v442 = vpack.c.b16 %v434, %v433
      %451 = vmatprep.subr.bf16.mxu0 0
      %452 = vmatpush1.bf16.msra.mxu0 %v435
      %453 = vmatprep.subr.bf16.mxu0 0
      %454 = vmatpush1.bf16.msra.mxu0 %v436
      %455 = vmatprep.subr.bf16.mxu0 0
      %456 = vmatpush1.bf16.msra.mxu0 %v437
      %457 = vmatprep.subr.bf16.mxu0 0
      %458 = vmatpush1.bf16.msra.mxu0 %v438
      %459 = vmatprep.subr.bf16.mxu0 0
      %460 = vmatpush1.bf16.msra.mxu0 %v439
      %461 = vmatprep.subr.bf16.mxu0 0
      %462 = vmatpush1.bf16.msra.mxu0 %v440
      %463 = vmatprep.subr.bf16.mxu0 0
      %464 = vmatpush1.bf16.msra.mxu0 %v441
      %465 = vmatprep.subr.bf16.mxu0 0
      %466 = vmatpush1.bf16.msra.mxu0 %v442
      %467 = vmatprep.subr.bf16.mxu0 0
      %468 = vmatpush1.bf16.msra.mxu0 0
      %469 = vmatprep.subr.bf16.mxu0 0
      %470 = vmatpush1.bf16.msra.mxu0 0
      %471 = vmatprep.subr.bf16.mxu0 0
      %472 = vmatpush1.bf16.msra.mxu0 0
      %473 = vmatprep.subr.bf16.mxu0 0
      %474 = vmatpush1.bf16.msra.mxu0 0
      %475 = vmatprep.subr.bf16.mxu0 0
      %476 = vmatpush1.bf16.msra.mxu0 0
      %477 = vmatprep.subr.bf16.mxu0 0
      %478 = vmatpush1.bf16.msra.mxu0 0
      %479 = vmatprep.subr.bf16.mxu0 0
      %480 = vmatpush1.bf16.msra.mxu0 0
      %481 = vmatprep.subr.bf16.mxu0 0
      %482 = vmatpush1.bf16.msra.mxu0 0
      %483 = vmatprep.mubr.bf16.mxu0 0
      %484 = vmatmul.mubr.bf16.gmra.mrb[0].mxu0 %v393
      %v485 = vpop.f32.mrb[0].mxu0
      %v486 = vadd.f32 0.0, %v485
      %v487 = vpop.f32.mrb[0].mxu0
      %v488 = vpop.f32.mrb[0].mxu0
      %v489 = vadd.f32 0.0, %v488
      %v490 = vpop.f32.mrb[0].mxu0
      %491 = vmatprep.mubr.bf16.mxu0 0
      %492 = vmatmul.mubr.bf16.gmra.mrb[0].mxu0 %v394
      %v493 = vpop.f32.mrb[0].mxu0
      %v494 = vadd.f32 0.0, %v493
      %v495 = vpop.f32.mrb[0].mxu0
      %v496 = vpop.f32.mrb[0].mxu0
      %v497 = vadd.f32 0.0, %v496
      %v498 = vpop.f32.mrb[0].mxu0
      %499 = vmatprep.mubr.bf16.mxu0 0
      %500 = vmatmul.mubr.bf16.gmra.mrb[0].mxu0 %v395
      %v501 = vpop.f32.mrb[0].mxu0
      %v502 = vadd.f32 0.0, %v501
      %v503 = vpop.f32.mrb[0].mxu0
      %v504 = vpop.f32.mrb[0].mxu0
      %v505 = vadd.f32 0.0, %v504
      %v506 = vpop.f32.mrb[0].mxu0
      %507 = vmatprep.mubr.bf16.mxu0 0
      %508 = vmatmul.mubr.bf16.gmra.mrb[0].mxu0 %v396
      %v509 = vpop.f32.mrb[0].mxu0
      %v510 = vadd.f32 0.0, %v509
      %v511 = vpop.f32.mrb[0].mxu0
      %v512 = vpop.f32.mrb[0].mxu0
      %v513 = vadd.f32 0.0, %v512
      %v514 = vpop.f32.mrb[0].mxu0
      %515 = vmatprep.mubr.bf16.mxu0 0
      %516 = vmatmul.mubr.bf16.gmra.mrb[0].mxu0 %v397
      %v517 = vpop.f32.mrb[0].mxu0
      %v518 = vadd.f32 0.0, %v517
      %v519 = vpop.f32.mrb[0].mxu0
      %v520 = vpop.f32.mrb[0].mxu0
      %v521 = vadd.f32 0.0, %v520
      %v522 = vpop.f32.mrb[0].mxu0
      %523 = vdwg.mxu0
      %v524 = vadd.f32 %v337, %v486
      %v525 = vadd.f32 %v338, %v489
      %v526 = vadd.f32 %v339, %v494
      %v527 = vadd.f32 %v340, %v497
      %v528 = vadd.f32 %v341, %v502
      %v529 = vadd.f32 %v342, %v505
      %v530 = vadd.f32 %v343, %v510
      %v531 = vadd.f32 %v344, %v513
      %v532 = vadd.f32 %v345, %v518
      %v533 = vadd.f32 %v346, %v521
      %534 = vst [vmem:[#allocation2] sm:$0xff] %v524
      %535 = vst [vmem:[#allocation2 + $0x8] sm:$0xff] %v525
      %536 = vst [vmem:[#allocation2 + $0x10] sm:$0xff] %v526
      %537 = vst [vmem:[#allocation2 + $0x18] sm:$0xff] %v527
      %538 = vst [vmem:[#allocation2 + $0x20] sm:$0xff] %v528
      %539 = vst [vmem:[#allocation2 + $0x28] sm:$0xff] %v529
      %540 = vst [vmem:[#allocation2 + $0x30] sm:$0xff] %v530
      %541 = vst [vmem:[#allocation2 + $0x38] sm:$0xff] %v531
      %542 = vst [vmem:[#allocation2 + $0x40] sm:$0xff] %v532
      %543 = vst [vmem:[#allocation2 + $0x48] sm:$0xff] %v533
      %v544 = vld [vmem:[#allocation2] sm:$0xff]
      %v545 = vld [vmem:[#allocation2 + $0x8] sm:$0xff]
      %v546 = vld [vmem:[#allocation2 + $0x10] sm:$0xff]
      %v547 = vld [vmem:[#allocation2 + $0x18] sm:$0xff]
      %v548 = vld [vmem:[#allocation2 + $0x20] sm:$0xff]
      %v549 = vld [vmem:[#allocation2 + $0x28] sm:$0xff]
      %v550 = vld [vmem:[#allocation2 + $0x30] sm:$0xff]
      %v551 = vld [vmem:[#allocation2 + $0x38] sm:$0xff]
      %v552 = vld [vmem:[#allocation2 + $0x40] sm:$0xff]
      %v553 = vld [vmem:[#allocation2 + $0x48] sm:$0xff]
      %v554 = vld [vmem:[%s315] sm:$0xf]
      %v555 = vld [vmem:[%s315 + $0x4] sm:$0xf]
      %v556 = vld [vmem:[%s315 + $0x8] sm:$0xf]
      %v557 = vld [vmem:[%s315 + $0xc] sm:$0xf]
      %v558 = vld [vmem:[%s315 + $0x10] sm:$0xf]
      %v559 = vld [vmem:[%s315 + $0x14] sm:$0xf]
      %v560 = vld [vmem:[%s315 + $0x18] sm:$0xf]
      %v561 = vld [vmem:[%s315 + $0x1c] sm:$0xf]
      %v562 = vld [vmem:[%s315 + $0x20] sm:$0xf]
      %v563 = vld [vmem:[%s315 + $0x24] sm:$0xf]
      %v564 = vld [vmem:[%s315 + $0x28] sm:$0x1]
      %s565 = scalar_lea.vmem %s1, 64
      %v566 = vld [vmem:[%s565] sm:$0xf]
      %v567 = vld [vmem:[%s565 + $0x4] sm:$0xf]
      %v568 = vld [vmem:[%s565 + $0x8] sm:$0xf]
      %v569 = vld [vmem:[%s565 + $0xc] sm:$0xf]
      %v570 = vld [vmem:[%s565 + $0x10] sm:$0xf]
      %v571 = vld [vmem:[%s565 + $0x14] sm:$0xf]
      %v572 = vld [vmem:[%s565 + $0x18] sm:$0xf]
      %v573 = vld [vmem:[%s565 + $0x1c] sm:$0xf]
      %v574 = vld [vmem:[%s565 + $0x20] sm:$0xf]
      %v575 = vld [vmem:[%s565 + $0x24] sm:$0xf]
      %v576 = vld [vmem:[%s565 + $0x28] sm:$0xf]
      %v577 = vld [vmem:[%s565 + $0x2c] sm:$0xf]
      %v578 = vld [vmem:[%s565 + $0x30] sm:$0xf]
      %v579 = vld [vmem:[%s565 + $0x34] sm:$0xf]
      %v580 = vld [vmem:[%s565 + $0x38] sm:$0xf]
      %v581 = vld [vmem:[%s565 + $0x3c] sm:$0xf]
      %v593 = vunpack.c.l.b16 %v554
      %v594 = vunpack.c.l.b16 %v555
      %v595 = vunpack.c.l.b16 %v556
      %v596 = vunpack.c.l.b16 %v557
      %v597 = vunpack.c.l.b16 %v558
      %v598 = vunpack.c.l.b16 %v559
      %v599 = vunpack.c.l.b16 %v560
      %v600 = vunpack.c.l.b16 %v561
      %v601 = vunpack.c.l.b16 %v562
      %v602 = vunpack.c.l.b16 %v563
      %v603 = vunpack.c.l.b16 %v564
      %v604 = vpack.c.b16 %v594, %v593
      %v605 = vpack.c.b16 %v596, %v595
      %v606 = vpack.c.b16 %v598, %v597
      %v607 = vpack.c.b16 %v600, %v599
      %v608 = vpack.c.b16 %v602, %v601
      %v609 = vpack.c.b16 %v603, %v603
      %vm610 = vsmask.f32 7424
      %v612 = vshrl.u32 %v604, 16
      %v614 = vshll.u32 %v604, 16
      %v616 = vrot.slane %v614, 1
      %v617 = vor.u32 %v612, %v616
      %v619 = vshll.u32 %v605, 16
      %v621 = vrot.slane %v619, 1
      %v622 = vsel %vm610, %v617, %v621
      %v623 = vshrl.u32 %v605, 16
      %v625 = vor.u32 %v623, %v621
      %v627 = vshll.u32 %v606, 16
      %v629 = vrot.slane %v627, 1
      %v630 = vsel %vm610, %v625, %v629
      %v631 = vshrl.u32 %v606, 16
      %v633 = vor.u32 %v631, %v629
      %v635 = vshll.u32 %v607, 16
      %v637 = vrot.slane %v635, 1
      %v638 = vsel %vm610, %v633, %v637
      %v639 = vshrl.u32 %v607, 16
      %v641 = vor.u32 %v639, %v637
      %v643 = vshll.u32 %v608, 16
      %v645 = vrot.slane %v643, 1
      %v646 = vsel %vm610, %v641, %v645
      %v647 = vshrl.u32 %v608, 16
      %v649 = vor.u32 %v647, %v645
      %v651 = vshll.u32 %v609, 16
      %v653 = vrot.slane %v651, 1
      %v654 = vsel %vm610, %v649, %v653
      %v676 = vunpack.c.l.b16 %v566
      %v677 = vunpack.c.l.b16 %v567
      %v678 = vunpack.c.l.b16 %v568
      %v679 = vunpack.c.l.b16 %v569
      %v680 = vunpack.c.l.b16 %v570
      %v681 = vunpack.c.l.b16 %v571
      %v682 = vunpack.c.l.b16 %v572
      %v683 = vunpack.c.l.b16 %v573
      %v684 = vunpack.c.l.b16 %v574
      %v685 = vunpack.c.l.b16 %v575
      %v686 = vunpack.c.l.b16 %v576
      %v687 = vunpack.c.l.b16 %v577
      %v688 = vunpack.c.l.b16 %v578
      %v689 = vunpack.c.l.b16 %v579
      %v690 = vunpack.c.l.b16 %v580
      %v691 = vunpack.c.l.b16 %v581
      %v692 = vpack.c.b16 %v677, %v676
      %v693 = vpack.c.b16 %v679, %v678
      %v694 = vpack.c.b16 %v681, %v680
      %v695 = vpack.c.b16 %v683, %v682
      %v696 = vpack.c.b16 %v685, %v684
      %v697 = vpack.c.b16 %v687, %v686
      %v698 = vpack.c.b16 %v689, %v688
      %v699 = vpack.c.b16 %v691, %v690
      %708 = vmatprep.subr.bf16.mxu0 0
      %709 = vmatpush1.bf16.msra.mxu0 %v692
      %710 = vmatprep.subr.bf16.mxu0 0
      %711 = vmatpush1.bf16.msra.mxu0 %v693
      %712 = vmatprep.subr.bf16.mxu0 0
      %713 = vmatpush1.bf16.msra.mxu0 %v694
      %714 = vmatprep.subr.bf16.mxu0 0
      %715 = vmatpush1.bf16.msra.mxu0 %v695
      %716 = vmatprep.subr.bf16.mxu0 0
      %717 = vmatpush1.bf16.msra.mxu0 %v696
      %718 = vmatprep.subr.bf16.mxu0 0
      %719 = vmatpush1.bf16.msra.mxu0 %v697
      %720 = vmatprep.subr.bf16.mxu0 0
      %721 = vmatpush1.bf16.msra.mxu0 %v698
      %722 = vmatprep.subr.bf16.mxu0 0
      %723 = vmatpush1.bf16.msra.mxu0 %v699
      %724 = vmatprep.subr.bf16.mxu0 0
      %725 = vmatpush1.bf16.msra.mxu0 0
      %726 = vmatprep.subr.bf16.mxu0 0
      %727 = vmatpush1.bf16.msra.mxu0 0
      %728 = vmatprep.subr.bf16.mxu0 0
      %729 = vmatpush1.bf16.msra.mxu0 0
      %730 = vmatprep.subr.bf16.mxu0 0
      %731 = vmatpush1.bf16.msra.mxu0 0
      %732 = vmatprep.subr.bf16.mxu0 0
      %733 = vmatpush1.bf16.msra.mxu0 0
      %734 = vmatprep.subr.bf16.mxu0 0
      %735 = vmatpush1.bf16.msra.mxu0 0
      %736 = vmatprep.subr.bf16.mxu0 0
      %737 = vmatpush1.bf16.msra.mxu0 0
      %738 = vmatprep.subr.bf16.mxu0 0
      %739 = vmatpush1.bf16.msra.mxu0 0
      %740 = vmatprep.mubr.bf16.mxu0 0
      %741 = vmatmul.mubr.bf16.gmra.mrb[0].mxu0 %v622
      %v742 = vpop.f32.mrb[0].mxu0
      %v743 = vadd.f32 0.0, %v742
      %v744 = vpop.f32.mrb[0].mxu0
      %v745 = vpop.f32.mrb[0].mxu0
      %v746 = vadd.f32 0.0, %v745
      %v747 = vpop.f32.mrb[0].mxu0
      %748 = vmatprep.mubr.bf16.mxu0 0
      %749 = vmatmul.mubr.bf16.gmra.mrb[0].mxu0 %v630
      %v750 = vpop.f32.mrb[0].mxu0
      %v751 = vadd.f32 0.0, %v750
      %v752 = vpop.f32.mrb[0].mxu0
      %v753 = vpop.f32.mrb[0].mxu0
      %v754 = vadd.f32 0.0, %v753
      %v755 = vpop.f32.mrb[0].mxu0
      %756 = vmatprep.mubr.bf16.mxu0 0
      %757 = vmatmul.mubr.bf16.gmra.mrb[0].mxu0 %v638
      %v758 = vpop.f32.mrb[0].mxu0
      %v759 = vadd.f32 0.0, %v758
      %v760 = vpop.f32.mrb[0].mxu0
      %v761 = vpop.f32.mrb[0].mxu0
      %v762 = vadd.f32 0.0, %v761
      %v763 = vpop.f32.mrb[0].mxu0
      %764 = vmatprep.mubr.bf16.mxu0 0
      %765 = vmatmul.mubr.bf16.gmra.mrb[0].mxu0 %v646
      %v766 = vpop.f32.mrb[0].mxu0
      %v767 = vadd.f32 0.0, %v766
      %v768 = vpop.f32.mrb[0].mxu0
      %v769 = vpop.f32.mrb[0].mxu0
      %v770 = vadd.f32 0.0, %v769
      %v771 = vpop.f32.mrb[0].mxu0
      %772 = vmatprep.mubr.bf16.mxu0 0
      %773 = vmatmul.mubr.bf16.gmra.mrb[0].mxu0 %v654
      %v774 = vpop.f32.mrb[0].mxu0
      %v775 = vadd.f32 0.0, %v774
      %v776 = vpop.f32.mrb[0].mxu0
      %v777 = vpop.f32.mrb[0].mxu0
      %v778 = vadd.f32 0.0, %v777
      %v779 = vpop.f32.mrb[0].mxu0
      %780 = vdwg.mxu0
      %v781 = vadd.f32 %v544, %v743
      %v782 = vadd.f32 %v545, %v746
      %v783 = vadd.f32 %v546, %v751
      %v784 = vadd.f32 %v547, %v754
      %v785 = vadd.f32 %v548, %v759
      %v786 = vadd.f32 %v549, %v762
      %v787 = vadd.f32 %v550, %v767
      %v788 = vadd.f32 %v551, %v770
      %v789 = vadd.f32 %v552, %v775
      %v790 = vadd.f32 %v553, %v778
      %791 = vst [vmem:[#allocation2] sm:$0xff] %v781
      %792 = vst [vmem:[#allocation2 + $0x8] sm:$0xff] %v782
      %793 = vst [vmem:[#allocation2 + $0x10] sm:$0xff] %v783
      %794 = vst [vmem:[#allocation2 + $0x18] sm:$0xff] %v784
      %795 = vst [vmem:[#allocation2 + $0x20] sm:$0xff] %v785
      %796 = vst [vmem:[#allocation2 + $0x28] sm:$0xff] %v786
      %797 = vst [vmem:[#allocation2 + $0x30] sm:$0xff] %v787
      %798 = vst [vmem:[#allocation2 + $0x38] sm:$0xff] %v788
      %799 = vst [vmem:[#allocation2 + $0x40] sm:$0xff] %v789
      %800 = vst [vmem:[#allocation2 + $0x48] sm:$0xff] %v790
      %v801 = vld [vmem:[#allocation2] sm:$0xff]
      %v802 = vld [vmem:[#allocation2 + $0x8] sm:$0xff]
      %v803 = vld [vmem:[#allocation2 + $0x10] sm:$0xff]
      %v804 = vld [vmem:[#allocation2 + $0x18] sm:$0xff]
      %v805 = vld [vmem:[#allocation2 + $0x20] sm:$0xff]
      %v806 = vld [vmem:[#allocation2 + $0x28] sm:$0xff]
      %v807 = vld [vmem:[#allocation2 + $0x30] sm:$0xff]
      %v808 = vld [vmem:[#allocation2 + $0x38] sm:$0xff]
      %v809 = vld [vmem:[#allocation2 + $0x40] sm:$0xff]
      %v810 = vld [vmem:[#allocation2 + $0x48] sm:$0xff]
      %v811 = vld [vmem:[%s315] sm:$0xe]
      %v812 = vld [vmem:[%s315 + $0x4] sm:$0xf]
      %v813 = vld [vmem:[%s315 + $0x8] sm:$0xf]
      %v814 = vld [vmem:[%s315 + $0xc] sm:$0xf]
      %v815 = vld [vmem:[%s315 + $0x10] sm:$0xf]
      %v816 = vld [vmem:[%s315 + $0x14] sm:$0xf]
      %v817 = vld [vmem:[%s315 + $0x18] sm:$0xf]
      %v818 = vld [vmem:[%s315 + $0x1c] sm:$0xf]
      %v819 = vld [vmem:[%s315 + $0x20] sm:$0xf]
      %v820 = vld [vmem:[%s315 + $0x24] sm:$0xf]
      %v821 = vld [vmem:[%s315 + $0x28] sm:$0x1]
      %s822 = scalar_lea.vmem %s1, 128
      %v823 = vld [vmem:[%s822] sm:$0xf]
      %v824 = vld [vmem:[%s822 + $0x4] sm:$0xf]
      %v825 = vld [vmem:[%s822 + $0x8] sm:$0xf]
      %v826 = vld [vmem:[%s822 + $0xc] sm:$0xf]
      %v827 = vld [vmem:[%s822 + $0x10] sm:$0xf]
      %v828 = vld [vmem:[%s822 + $0x14] sm:$0xf]
      %v829 = vld [vmem:[%s822 + $0x18] sm:$0xf]
      %v830 = vld [vmem:[%s822 + $0x1c] sm:$0xf]
      %v831 = vld [vmem:[%s822 + $0x20] sm:$0xf]
      %v832 = vld [vmem:[%s822 + $0x24] sm:$0xf]
      %v833 = vld [vmem:[%s822 + $0x28] sm:$0xf]
      %v834 = vld [vmem:[%s822 + $0x2c] sm:$0xf]
      %v835 = vld [vmem:[%s822 + $0x30] sm:$0xf]
      %v836 = vld [vmem:[%s822 + $0x34] sm:$0xf]
      %v837 = vld [vmem:[%s822 + $0x38] sm:$0xf]
      %v838 = vld [vmem:[%s822 + $0x3c] sm:$0xf]
      %v850 = vunpack.c.l.b16 %v811
      %v851 = vunpack.c.l.b16 %v812
      %v852 = vunpack.c.l.b16 %v813
      %v853 = vunpack.c.l.b16 %v814
      %v854 = vunpack.c.l.b16 %v815
      %v855 = vunpack.c.l.b16 %v816
      %v856 = vunpack.c.l.b16 %v817
      %v857 = vunpack.c.l.b16 %v818
      %v858 = vunpack.c.l.b16 %v819
      %v859 = vunpack.c.l.b16 %v820
      %v860 = vunpack.c.l.b16 %v821
      %v861 = vpack.c.b16 %v851, %v850
      %v862 = vpack.c.b16 %v853, %v852
      %v863 = vpack.c.b16 %v855, %v854
      %v864 = vpack.c.b16 %v857, %v856
      %v865 = vpack.c.b16 %v859, %v858
      %v866 = vpack.c.b16 %v860, %v860
      %vm867 = vcmask 1046528
      %v868 = vrot.slane %v861, 1
      %v869 = vrot.slane %v862, 1
      %v870 = vsel %vm867, %v868, %v869
      %v871 = vrot.slane %v863, 1
      %v872 = vsel %vm867, %v869, %v871
      %v873 = vrot.slane %v864, 1
      %v874 = vsel %vm867, %v871, %v873
      %v875 = vrot.slane %v865, 1
      %v876 = vsel %vm867, %v873, %v875
      %v877 = vrot.slane %v866, 1
      %v878 = vsel %vm867, %v875, %v877
      %v900 = vunpack.c.l.b16 %v823
      %v901 = vunpack.c.l.b16 %v824
      %v902 = vunpack.c.l.b16 %v825
      %v903 = vunpack.c.l.b16 %v826
      %v904 = vunpack.c.l.b16 %v827
      %v905 = vunpack.c.l.b16 %v828
      %v906 = vunpack.c.l.b16 %v829
      %v907 = vunpack.c.l.b16 %v830
      %v908 = vunpack.c.l.b16 %v831
      %v909 = vunpack.c.l.b16 %v832
      %v910 = vunpack.c.l.b16 %v833
      %v911 = vunpack.c.l.b16 %v834
      %v912 = vunpack.c.l.b16 %v835
      %v913 = vunpack.c.l.b16 %v836
      %v914 = vunpack.c.l.b16 %v837
      %v915 = vunpack.c.l.b16 %v838
      %v916 = vpack.c.b16 %v901, %v900
      %v917 = vpack.c.b16 %v903, %v902
      %v918 = vpack.c.b16 %v905, %v904
      %v919 = vpack.c.b16 %v907, %v906
      %v920 = vpack.c.b16 %v909, %v908
      %v921 = vpack.c.b16 %v911, %v910
      %v922 = vpack.c.b16 %v913, %v912
      %v923 = vpack.c.b16 %v915, %v914
      %932 = vmatprep.subr.bf16.mxu0 0
      %933 = vmatpush1.bf16.msra.mxu0 %v916
      %934 = vmatprep.subr.bf16.mxu0 0
      %935 = vmatpush1.bf16.msra.mxu0 %v917
      %936 = vmatprep.subr.bf16.mxu0 0
      %937 = vmatpush1.bf16.msra.mxu0 %v918
      %938 = vmatprep.subr.bf16.mxu0 0
      %939 = vmatpush1.bf16.msra.mxu0 %v919
      %940 = vmatprep.subr.bf16.mxu0 0
      %941 = vmatpush1.bf16.msra.mxu0 %v920
      %942 = vmatprep.subr.bf16.mxu0 0
      %943 = vmatpush1.bf16.msra.mxu0 %v921
      %944 = vmatprep.subr.bf16.mxu0 0
      %945 = vmatpush1.bf16.msra.mxu0 %v922
      %946 = vmatprep.subr.bf16.mxu0 0
      %947 = vmatpush1.bf16.msra.mxu0 %v923
      %948 = vmatprep.subr.bf16.mxu0 0
      %949 = vmatpush1.bf16.msra.mxu0 0
      %950 = vmatprep.subr.bf16.mxu0 0
      %951 = vmatpush1.bf16.msra.mxu0 0
      %952 = vmatprep.subr.bf16.mxu0 0
      %953 = vmatpush1.bf16.msra.mxu0 0
      %954 = vmatprep.subr.bf16.mxu0 0
      %955 = vmatpush1.bf16.msra.mxu0 0
      %956 = vmatprep.subr.bf16.mxu0 0
      %957 = vmatpush1.bf16.msra.mxu0 0
      %958 = vmatprep.subr.bf16.mxu0 0
      %959 = vmatpush1.bf16.msra.mxu0 0
      %960 = vmatprep.subr.bf16.mxu0 0
      %961 = vmatpush1.bf16.msra.mxu0 0
      %962 = vmatprep.subr.bf16.mxu0 0
      %963 = vmatpush1.bf16.msra.mxu0 0
      %964 = vmatprep.mubr.bf16.mxu0 0
      %965 = vmatmul.mubr.bf16.gmra.mrb[0].mxu0 %v870
      %v966 = vpop.f32.mrb[0].mxu0
      %v967 = vadd.f32 0.0, %v966
      %v968 = vpop.f32.mrb[0].mxu0
      %v969 = vpop.f32.mrb[0].mxu0
      %v970 = vadd.f32 0.0, %v969
      %v971 = vpop.f32.mrb[0].mxu0
      %972 = vmatprep.mubr.bf16.mxu0 0
      %973 = vmatmul.mubr.bf16.gmra.mrb[0].mxu0 %v872
      %v974 = vpop.f32.mrb[0].mxu0
      %v975 = vadd.f32 0.0, %v974
      %v976 = vpop.f32.mrb[0].mxu0
      %v977 = vpop.f32.mrb[0].mxu0
      %v978 = vadd.f32 0.0, %v977
      %v979 = vpop.f32.mrb[0].mxu0
      %980 = vmatprep.mubr.bf16.mxu0 0
      %981 = vmatmul.mubr.bf16.gmra.mrb[0].mxu0 %v874
      %v982 = vpop.f32.mrb[0].mxu0
      %v983 = vadd.f32 0.0, %v982
      %v984 = vpop.f32.mrb[0].mxu0
      %v985 = vpop.f32.mrb[0].mxu0
      %v986 = vadd.f32 0.0, %v985
      %v987 = vpop.f32.mrb[0].mxu0
      %988 = vmatprep.mubr.bf16.mxu0 0
      %989 = vmatmul.mubr.bf16.gmra.mrb[0].mxu0 %v876
      %v990 = vpop.f32.mrb[0].mxu0
      %v991 = vadd.f32 0.0, %v990
      %v992 = vpop.f32.mrb[0].mxu0
      %v993 = vpop.f32.mrb[0].mxu0
      %v994 = vadd.f32 0.0, %v993
      %v995 = vpop.f32.mrb[0].mxu0
      %996 = vmatprep.mubr.bf16.mxu0 0
      %997 = vmatmul.mubr.bf16.gmra.mrb[0].mxu0 %v878
      %v998 = vpop.f32.mrb[0].mxu0
      %v999 = vadd.f32 0.0, %v998
      %v1000 = vpop.f32.mrb[0].mxu0
      %v1001 = vpop.f32.mrb[0].mxu0
      %v1002 = vadd.f32 0.0, %v1001
      %v1003 = vpop.f32.mrb[0].mxu0
      %1004 = vdwg.mxu0
      %v1005 = vadd.f32 %v801, %v967
      %v1006 = vadd.f32 %v802, %v970
      %v1007 = vadd.f32 %v803, %v975
      %v1008 = vadd.f32 %v804, %v978
      %v1009 = vadd.f32 %v805, %v983
      %v1010 = vadd.f32 %v806, %v986
      %v1011 = vadd.f32 %v807, %v991
      %v1012 = vadd.f32 %v808, %v994
      %v1013 = vadd.f32 %v809, %v999
      %v1014 = vadd.f32 %v810, %v1002
      %1015 = vst [vmem:[#allocation2] sm:$0xff] %v1005
      %1016 = vst [vmem:[#allocation2 + $0x8] sm:$0xff] %v1006
      %1017 = vst [vmem:[#allocation2 + $0x10] sm:$0xff] %v1007
      %1018 = vst [vmem:[#allocation2 + $0x18] sm:$0xff] %v1008
      %1019 = vst [vmem:[#allocation2 + $0x20] sm:$0xff] %v1009
      %1020 = vst [vmem:[#allocation2 + $0x28] sm:$0xff] %v1010
      %1021 = vst [vmem:[#allocation2 + $0x30] sm:$0xff] %v1011
      %1022 = vst [vmem:[#allocation2 + $0x38] sm:$0xff] %v1012
      %1023 = vst [vmem:[#allocation2 + $0x40] sm:$0xff] %v1013
      %1024 = vst [vmem:[#allocation2 + $0x48] sm:$0xff] %v1014
      %v1025 = vld [vmem:[#allocation2] sm:$0xff]
      %v1026 = vld [vmem:[#allocation2 + $0x8] sm:$0xff]
      %v1027 = vld [vmem:[#allocation2 + $0x10] sm:$0xff]
      %v1028 = vld [vmem:[#allocation2 + $0x18] sm:$0xff]
      %v1029 = vld [vmem:[#allocation2 + $0x20] sm:$0xff]
      %v1030 = vld [vmem:[#allocation2 + $0x28] sm:$0xff]
      %v1031 = vld [vmem:[#allocation2 + $0x30] sm:$0xff]
      %v1032 = vld [vmem:[#allocation2 + $0x38] sm:$0xff]
      %v1033 = vld [vmem:[#allocation2 + $0x40] sm:$0xff]
      %v1034 = vld [vmem:[#allocation2 + $0x48] sm:$0xff]
      %v1035 = vld [vmem:[%s315 + $0x4] sm:$0xe]
      %v1036 = vld [vmem:[%s315 + $0x8] sm:$0xf]
      %v1037 = vld [vmem:[%s315 + $0xc] sm:$0xf]
      %v1038 = vld [vmem:[%s315 + $0x10] sm:$0xf]
      %v1039 = vld [vmem:[%s315 + $0x14] sm:$0xf]
      %v1040 = vld [vmem:[%s315 + $0x18] sm:$0xf]
      %v1041 = vld [vmem:[%s315 + $0x1c] sm:$0xf]
      %v1042 = vld [vmem:[%s315 + $0x20] sm:$0xf]
      %v1043 = vld [vmem:[%s315 + $0x24] sm:$0xf]
      %v1044 = vld [vmem:[%s315 + $0x28] sm:$0xf]
      %v1045 = vld [vmem:[%s315 + $0x2c] sm:$0x1]
      %s1046 = scalar_lea.vmem %s1, 192
      %v1047 = vld [vmem:[%s1046] sm:$0xf]
      %v1048 = vld [vmem:[%s1046 + $0x4] sm:$0xf]
      %v1049 = vld [vmem:[%s1046 + $0x8] sm:$0xf]
      %v1050 = vld [vmem:[%s1046 + $0xc] sm:$0xf]
      %v1051 = vld [vmem:[%s1046 + $0x10] sm:$0xf]
      %v1052 = vld [vmem:[%s1046 + $0x14] sm:$0xf]
      %v1053 = vld [vmem:[%s1046 + $0x18] sm:$0xf]
      %v1054 = vld [vmem:[%s1046 + $0x1c] sm:$0xf]
      %v1055 = vld [vmem:[%s1046 + $0x20] sm:$0xf]
      %v1056 = vld [vmem:[%s1046 + $0x24] sm:$0xf]
      %v1057 = vld [vmem:[%s1046 + $0x28] sm:$0xf]
      %v1058 = vld [vmem:[%s1046 + $0x2c] sm:$0xf]
      %v1059 = vld [vmem:[%s1046 + $0x30] sm:$0xf]
      %v1060 = vld [vmem:[%s1046 + $0x34] sm:$0xf]
      %v1061 = vld [vmem:[%s1046 + $0x38] sm:$0xf]
      %v1062 = vld [vmem:[%s1046 + $0x3c] sm:$0xf]
      %v1074 = vunpack.c.l.b16 %v1035
      %v1075 = vunpack.c.l.b16 %v1036
      %v1076 = vunpack.c.l.b16 %v1037
      %v1077 = vunpack.c.l.b16 %v1038
      %v1078 = vunpack.c.l.b16 %v1039
      %v1079 = vunpack.c.l.b16 %v1040
      %v1080 = vunpack.c.l.b16 %v1041
      %v1081 = vunpack.c.l.b16 %v1042
      %v1082 = vunpack.c.l.b16 %v1043
      %v1083 = vunpack.c.l.b16 %v1044
      %v1084 = vunpack.c.l.b16 %v1045
      %v1085 = vpack.c.b16 %v1075, %v1074
      %v1086 = vpack.c.b16 %v1077, %v1076
      %v1087 = vpack.c.b16 %v1079, %v1078
      %v1088 = vpack.c.b16 %v1081, %v1080
      %v1089 = vpack.c.b16 %v1083, %v1082
      %v1090 = vpack.c.b16 %v1084, %v1084
      %v1091 = vrot.slane %v1085, 1
      %v1092 = vrot.slane %v1086, 1
      %v1093 = vsel %vm867, %v1091, %v1092
      %v1094 = vrot.slane %v1087, 1
      %v1095 = vsel %vm867, %v1092, %v1094
      %v1096 = vrot.slane %v1088, 1
      %v1097 = vsel %vm867, %v1094, %v1096
      %v1098 = vrot.slane %v1089, 1
      %v1099 = vsel %vm867, %v1096, %v1098
      %v1100 = vrot.slane %v1090, 1
      %v1101 = vsel %vm867, %v1098, %v1100
      %v1123 = vunpack.c.l.b16 %v1047
      %v1124 = vunpack.c.l.b16 %v1048
      %v1125 = vunpack.c.l.b16 %v1049
      %v1126 = vunpack.c.l.b16 %v1050
      %v1127 = vunpack.c.l.b16 %v1051
      %v1128 = vunpack.c.l.b16 %v1052
      %v1129 = vunpack.c.l.b16 %v1053
      %v1130 = vunpack.c.l.b16 %v1054
      %v1131 = vunpack.c.l.b16 %v1055
      %v1132 = vunpack.c.l.b16 %v1056
      %v1133 = vunpack.c.l.b16 %v1057
      %v1134 = vunpack.c.l.b16 %v1058
      %v1135 = vunpack.c.l.b16 %v1059
      %v1136 = vunpack.c.l.b16 %v1060
      %v1137 = vunpack.c.l.b16 %v1061
      %v1138 = vunpack.c.l.b16 %v1062
      %v1139 = vpack.c.b16 %v1124, %v1123
      %v1140 = vpack.c.b16 %v1126, %v1125
      %v1141 = vpack.c.b16 %v1128, %v1127
      %v1142 = vpack.c.b16 %v1130, %v1129
      %v1143 = vpack.c.b16 %v1132, %v1131
      %v1144 = vpack.c.b16 %v1134, %v1133
      %v1145 = vpack.c.b16 %v1136, %v1135
      %v1146 = vpack.c.b16 %v1138, %v1137
      %1155 = vmatprep.subr.bf16.mxu0 0
      %1156 = vmatpush1.bf16.msra.mxu0 %v1139
      %1157 = vmatprep.subr.bf16.mxu0 0
      %1158 = vmatpush1.bf16.msra.mxu0 %v1140
      %1159 = vmatprep.subr.bf16.mxu0 0
      %1160 = vmatpush1.bf16.msra.mxu0 %v1141
      %1161 = vmatprep.subr.bf16.mxu0 0
      %1162 = vmatpush1.bf16.msra.mxu0 %v1142
      %1163 = vmatprep.subr.bf16.mxu0 0
      %1164 = vmatpush1.bf16.msra.mxu0 %v1143
      %1165 = vmatprep.subr.bf16.mxu0 0
      %1166 = vmatpush1.bf16.msra.mxu0 %v1144
      %1167 = vmatprep.subr.bf16.mxu0 0
      %1168 = vmatpush1.bf16.msra.mxu0 %v1145
      %1169 = vmatprep.subr.bf16.mxu0 0
      %1170 = vmatpush1.bf16.msra.mxu0 %v1146
      %1171 = vmatprep.subr.bf16.mxu0 0
      %1172 = vmatpush1.bf16.msra.mxu0 0
      %1173 = vmatprep.subr.bf16.mxu0 0
      %1174 = vmatpush1.bf16.msra.mxu0 0
      %1175 = vmatprep.subr.bf16.mxu0 0
      %1176 = vmatpush1.bf16.msra.mxu0 0
      %1177 = vmatprep.subr.bf16.mxu0 0
      %1178 = vmatpush1.bf16.msra.mxu0 0
      %1179 = vmatprep.subr.bf16.mxu0 0
      %1180 = vmatpush1.bf16.msra.mxu0 0
      %1181 = vmatprep.subr.bf16.mxu0 0
      %1182 = vmatpush1.bf16.msra.mxu0 0
      %1183 = vmatprep.subr.bf16.mxu0 0
      %1184 = vmatpush1.bf16.msra.mxu0 0
      %1185 = vmatprep.subr.bf16.mxu0 0
      %1186 = vmatpush1.bf16.msra.mxu0 0
      %1187 = vmatprep.mubr.bf16.mxu0 0
      %1188 = vmatmul.mubr.bf16.gmra.mrb[0].mxu0 %v1093
      %v1189 = vpop.f32.mrb[0].mxu0
      %v1190 = vadd.f32 0.0, %v1189
      %v1191 = vpop.f32.mrb[0].mxu0
      %v1192 = vpop.f32.mrb[0].mxu0
      %v1193 = vadd.f32 0.0, %v1192
      %v1194 = vpop.f32.mrb[0].mxu0
      %1195 = vmatprep.mubr.bf16.mxu0 0
      %1196 = vmatmul.mubr.bf16.gmra.mrb[0].mxu0 %v1095
      %v1197 = vpop.f32.mrb[0].mxu0
      %v1198 = vadd.f32 0.0, %v1197
      %v1199 = vpop.f32.mrb[0].mxu0
      %v1200 = vpop.f32.mrb[0].mxu0
      %v1201 = vadd.f32 0.0, %v1200
      %v1202 = vpop.f32.mrb[0].mxu0
      %1203 = vmatprep.mubr.bf16.mxu0 0
      %1204 = vmatmul.mubr.bf16.gmra.mrb[0].mxu0 %v1097
      %v1205 = vpop.f32.mrb[0].mxu0
      %v1206 = vadd.f32 0.0, %v1205
      %v1207 = vpop.f32.mrb[0].mxu0
      %v1208 = vpop.f32.mrb[0].mxu0
      %v1209 = vadd.f32 0.0, %v1208
      %v1210 = vpop.f32.mrb[0].mxu0
      %1211 = vmatprep.mubr.bf16.mxu0 0
      %1212 = vmatmul.mubr.bf16.gmra.mrb[0].mxu0 %v1099
      %v1213 = vpop.f32.mrb[0].mxu0
      %v1214 = vadd.f32 0.0, %v1213
      %v1215 = vpop.f32.mrb[0].mxu0
      %v1216 = vpop.f32.mrb[0].mxu0
      %v1217 = vadd.f32 0.0, %v1216
      %v1218 = vpop.f32.mrb[0].mxu0
      %1219 = vmatprep.mubr.bf16.mxu0 0
      %1220 = vmatmul.mubr.bf16.gmra.mrb[0].mxu0 %v1101
      %v1221 = vpop.f32.mrb[0].mxu0
      %v1222 = vadd.f32 0.0, %v1221
      %v1223 = vpop.f32.mrb[0].mxu0
      %v1224 = vpop.f32.mrb[0].mxu0
      %v1225 = vadd.f32 0.0, %v1224
      %v1226 = vpop.f32.mrb[0].mxu0
      %1227 = vdwg.mxu0
      %v1228 = vadd.f32 %v1025, %v1190
      %v1229 = vadd.f32 %v1026, %v1193
      %v1230 = vadd.f32 %v1027, %v1198
      %v1231 = vadd.f32 %v1028, %v1201
      %v1232 = vadd.f32 %v1029, %v1206
      %v1233 = vadd.f32 %v1030, %v1209
      %v1234 = vadd.f32 %v1031, %v1214
      %v1235 = vadd.f32 %v1032, %v1217
      %v1236 = vadd.f32 %v1033, %v1222
      %v1237 = vadd.f32 %v1034, %v1225
      %1238 = vst [vmem:[#allocation2] sm:$0xff] %v1228
      %1239 = vst [vmem:[#allocation2 + $0x8] sm:$0xff] %v1229
      %1240 = vst [vmem:[#allocation2 + $0x10] sm:$0xff] %v1230
      %1241 = vst [vmem:[#allocation2 + $0x18] sm:$0xff] %v1231
      %1242 = vst [vmem:[#allocation2 + $0x20] sm:$0xff] %v1232
      %1243 = vst [vmem:[#allocation2 + $0x28] sm:$0xff] %v1233
      %1244 = vst [vmem:[#allocation2 + $0x30] sm:$0xff] %v1234
      %1245 = vst [vmem:[#allocation2 + $0x38] sm:$0xff] %v1235
      %1246 = vst [vmem:[#allocation2 + $0x40] sm:$0xff] %v1236
      %1247 = vst [vmem:[#allocation2 + $0x48] sm:$0xff] %v1237
      %v1248 = vld [vmem:[#allocation2] sm:$0xff]
      %v1249 = vld [vmem:[#allocation2 + $0x8] sm:$0xff]
      %v1250 = vld [vmem:[#allocation2 + $0x10] sm:$0xff]
      %v1251 = vld [vmem:[#allocation2 + $0x18] sm:$0xff]
      %v1252 = vld [vmem:[#allocation2 + $0x20] sm:$0xff]
      %v1253 = vld [vmem:[#allocation2 + $0x28] sm:$0xff]
      %v1254 = vld [vmem:[#allocation2 + $0x30] sm:$0xff]
      %v1255 = vld [vmem:[#allocation2 + $0x38] sm:$0xff]
      %v1256 = vld [vmem:[#allocation2 + $0x40] sm:$0xff]
      %v1257 = vld [vmem:[#allocation2 + $0x48] sm:$0xff]
      %v1258 = vld [vmem:[%s315 + $0x4] sm:$0xe]
      %v1259 = vld [vmem:[%s315 + $0x8] sm:$0xf]
      %v1260 = vld [vmem:[%s315 + $0xc] sm:$0xf]
      %v1261 = vld [vmem:[%s315 + $0x10] sm:$0xf]
      %v1262 = vld [vmem:[%s315 + $0x14] sm:$0xf]
      %v1263 = vld [vmem:[%s315 + $0x18] sm:$0xf]
      %v1264 = vld [vmem:[%s315 + $0x1c] sm:$0xf]
      %v1265 = vld [vmem:[%s315 + $0x20] sm:$0xf]
      %v1266 = vld [vmem:[%s315 + $0x24] sm:$0xf]
      %v1267 = vld [vmem:[%s315 + $0x28] sm:$0xf]
      %v1268 = vld [vmem:[%s315 + $0x2c] sm:$0x3]
      %s1269 = scalar_lea.vmem %s1, 256
      %v1270 = vld [vmem:[%s1269] sm:$0xf]
      %v1271 = vld [vmem:[%s1269 + $0x4] sm:$0xf]
      %v1272 = vld [vmem:[%s1269 + $0x8] sm:$0xf]
      %v1273 = vld [vmem:[%s1269 + $0xc] sm:$0xf]
      %v1274 = vld [vmem:[%s1269 + $0x10] sm:$0xf]
      %v1275 = vld [vmem:[%s1269 + $0x14] sm:$0xf]
      %v1276 = vld [vmem:[%s1269 + $0x18] sm:$0xf]
      %v1277 = vld [vmem:[%s1269 + $0x1c] sm:$0xf]
      %v1278 = vld [vmem:[%s1269 + $0x20] sm:$0xf]
      %v1279 = vld [vmem:[%s1269 + $0x24] sm:$0xf]
      %v1280 = vld [vmem:[%s1269 + $0x28] sm:$0xf]
      %v1281 = vld [vmem:[%s1269 + $0x2c] sm:$0xf]
      %v1282 = vld [vmem:[%s1269 + $0x30] sm:$0xf]
      %v1283 = vld [vmem:[%s1269 + $0x34] sm:$0xf]
      %v1284 = vld [vmem:[%s1269 + $0x38] sm:$0xf]
      %v1285 = vld [vmem:[%s1269 + $0x3c] sm:$0xf]
      %v1297 = vunpack.c.l.b16 %v1258
      %v1298 = vunpack.c.l.b16 %v1259
      %v1299 = vunpack.c.l.b16 %v1260
      %v1300 = vunpack.c.l.b16 %v1261
      %v1301 = vunpack.c.l.b16 %v1262
      %v1302 = vunpack.c.l.b16 %v1263
      %v1303 = vunpack.c.l.b16 %v1264
      %v1304 = vunpack.c.l.b16 %v1265
      %v1305 = vunpack.c.l.b16 %v1266
      %v1306 = vunpack.c.l.b16 %v1267
      %v1307 = vunpack.c.l.b16 %v1268
      %v1308 = vpack.c.b16 %v1298, %v1297
      %v1309 = vpack.c.b16 %v1300, %v1299
      %v1310 = vpack.c.b16 %v1302, %v1301
      %v1311 = vpack.c.b16 %v1304, %v1303
      %v1312 = vpack.c.b16 %v1306, %v1305
      %v1313 = vpack.c.b16 %v1307, %v1307
      %vm1314 = vsmask.f32 6400
      %v1316 = vshrl.u32 %v1308, 16
      %v1318 = vrot.slane %v1316, 1
      %v1319 = vshll.u32 %v1308, 16
      %v1321 = vrot.slane %v1319, 2
      %v1322 = vor.u32 %v1318, %v1321
      %v1324 = vshrl.u32 %v1309, 16
      %v1326 = vrot.slane %v1324, 1
      %v1327 = vshll.u32 %v1309, 16
      %v1329 = vrot.slane %v1327, 2
      %v1330 = vor.u32 %v1326, %v1329
      %v1331 = vsel %vm1314, %v1322, %v1330
      %v1333 = vshrl.u32 %v1310, 16
      %v1335 = vrot.slane %v1333, 1
      %v1336 = vshll.u32 %v1310, 16
      %v1338 = vrot.slane %v1336, 2
      %v1339 = vor.u32 %v1335, %v1338
      %v1340 = vsel %vm1314, %v1330, %v1339
      %v1342 = vshrl.u32 %v1311, 16
      %v1344 = vrot.slane %v1342, 1
      %v1345 = vshll.u32 %v1311, 16
      %v1347 = vrot.slane %v1345, 2
      %v1348 = vor.u32 %v1344, %v1347
      %v1349 = vsel %vm1314, %v1339, %v1348
      %v1351 = vshrl.u32 %v1312, 16
      %v1353 = vrot.slane %v1351, 1
      %v1354 = vshll.u32 %v1312, 16
      %v1356 = vrot.slane %v1354, 2
      %v1357 = vor.u32 %v1353, %v1356
      %v1358 = vsel %vm1314, %v1348, %v1357
      %v1360 = vshrl.u32 %v1313, 16
      %v1362 = vrot.slane %v1360, 1
      %v1363 = vshll.u32 %v1313, 16
      %v1365 = vrot.slane %v1363, 2
      %v1366 = vor.u32 %v1362, %v1365
      %v1367 = vsel %vm1314, %v1357, %v1366
      %v1389 = vunpack.c.l.b16 %v1270
      %v1390 = vunpack.c.l.b16 %v1271
      %v1391 = vunpack.c.l.b16 %v1272
      %v1392 = vunpack.c.l.b16 %v1273
      %v1393 = vunpack.c.l.b16 %v1274
      %v1394 = vunpack.c.l.b16 %v1275
      %v1395 = vunpack.c.l.b16 %v1276
      %v1396 = vunpack.c.l.b16 %v1277
      %v1397 = vunpack.c.l.b16 %v1278
      %v1398 = vunpack.c.l.b16 %v1279
      %v1399 = vunpack.c.l.b16 %v1280
      %v1400 = vunpack.c.l.b16 %v1281
      %v1401 = vunpack.c.l.b16 %v1282
      %v1402 = vunpack.c.l.b16 %v1283
      %v1403 = vunpack.c.l.b16 %v1284
      %v1404 = vunpack.c.l.b16 %v1285
      %v1405 = vpack.c.b16 %v1390, %v1389
      %v1406 = vpack.c.b16 %v1392, %v1391
      %v1407 = vpack.c.b16 %v1394, %v1393
      %v1408 = vpack.c.b16 %v1396, %v1395
      %v1409 = vpack.c.b16 %v1398, %v1397
      %v1410 = vpack.c.b16 %v1400, %v1399
      %v1411 = vpack.c.b16 %v1402, %v1401
      %v1412 = vpack.c.b16 %v1404, %v1403
      %1421 = vmatprep.subr.bf16.mxu0 0
      %1422 = vmatpush1.bf16.msra.mxu0 %v1405
      %1423 = vmatprep.subr.bf16.mxu0 0
      %1424 = vmatpush1.bf16.msra.mxu0 %v1406
      %1425 = vmatprep.subr.bf16.mxu0 0
      %1426 = vmatpush1.bf16.msra.mxu0 %v1407
      %1427 = vmatprep.subr.bf16.mxu0 0
      %1428 = vmatpush1.bf16.msra.mxu0 %v1408
      %1429 = vmatprep.subr.bf16.mxu0 0
      %1430 = vmatpush1.bf16.msra.mxu0 %v1409
      %1431 = vmatprep.subr.bf16.mxu0 0
      %1432 = vmatpush1.bf16.msra.mxu0 %v1410
      %1433 = vmatprep.subr.bf16.mxu0 0
      %1434 = vmatpush1.bf16.msra.mxu0 %v1411
      %1435 = vmatprep.subr.bf16.mxu0 0
      %1436 = vmatpush1.bf16.msra.mxu0 %v1412
      %1437 = vmatprep.subr.bf16.mxu0 0
      %1438 = vmatpush1.bf16.msra.mxu0 0
      %1439 = vmatprep.subr.bf16.mxu0 0
      %1440 = vmatpush1.bf16.msra.mxu0 0
      %1441 = vmatprep.subr.bf16.mxu0 0
      %1442 = vmatpush1.bf16.msra.mxu0 0
      %1443 = vmatprep.subr.bf16.mxu0 0
      %1444 = vmatpush1.bf16.msra.mxu0 0
      %1445 = vmatprep.subr.bf16.mxu0 0
      %1446 = vmatpush1.bf16.msra.mxu0 0
      %1447 = vmatprep.subr.bf16.mxu0 0
      %1448 = vmatpush1.bf16.msra.mxu0 0
      %1449 = vmatprep.subr.bf16.mxu0 0
      %1450 = vmatpush1.bf16.msra.mxu0 0
      %1451 = vmatprep.subr.bf16.mxu0 0
      %1452 = vmatpush1.bf16.msra.mxu0 0
      %1453 = vmatprep.mubr.bf16.mxu0 0
      %1454 = vmatmul.mubr.bf16.gmra.mrb[0].mxu0 %v1331
      %v1455 = vpop.f32.mrb[0].mxu0
      %v1456 = vadd.f32 0.0, %v1455
      %v1457 = vpop.f32.mrb[0].mxu0
      %v1458 = vpop.f32.mrb[0].mxu0
      %v1459 = vadd.f32 0.0, %v1458
      %v1460 = vpop.f32.mrb[0].mxu0
      %1461 = vmatprep.mubr.bf16.mxu0 0
      %1462 = vmatmul.mubr.bf16.gmra.mrb[0].mxu0 %v1340
      %v1463 = vpop.f32.mrb[0].mxu0
      %v1464 = vadd.f32 0.0, %v1463
      %v1465 = vpop.f32.mrb[0].mxu0
      %v1466 = vpop.f32.mrb[0].mxu0
      %v1467 = vadd.f32 0.0, %v1466
      %v1468 = vpop.f32.mrb[0].mxu0
      %1469 = vmatprep.mubr.bf16.mxu0 0
      %1470 = vmatmul.mubr.bf16.gmra.mrb[0].mxu0 %v1349
      %v1471 = vpop.f32.mrb[0].mxu0
      %v1472 = vadd.f32 0.0, %v1471
      %v1473 = vpop.f32.mrb[0].mxu0
      %v1474 = vpop.f32.mrb[0].mxu0
      %v1475 = vadd.f32 0.0, %v1474
      %v1476 = vpop.f32.mrb[0].mxu0
      %1477 = vmatprep.mubr.bf16.mxu0 0
      %1478 = vmatmul.mubr.bf16.gmra.mrb[0].mxu0 %v1358
      %v1479 = vpop.f32.mrb[0].mxu0
      %v1480 = vadd.f32 0.0, %v1479
      %v1481 = vpop.f32.mrb[0].mxu0
      %v1482 = vpop.f32.mrb[0].mxu0
      %v1483 = vadd.f32 0.0, %v1482
      %v1484 = vpop.f32.mrb[0].mxu0
      %1485 = vmatprep.mubr.bf16.mxu0 0
      %1486 = vmatmul.mubr.bf16.gmra.mrb[0].mxu0 %v1367
      %v1487 = vpop.f32.mrb[0].mxu0
      %v1488 = vadd.f32 0.0, %v1487
      %v1489 = vpop.f32.mrb[0].mxu0
      %v1490 = vpop.f32.mrb[0].mxu0
      %v1491 = vadd.f32 0.0, %v1490
      %v1492 = vpop.f32.mrb[0].mxu0
      %1493 = vdwg.mxu0
      %v1494 = vadd.f32 %v1248, %v1456
      %v1495 = vadd.f32 %v1249, %v1459
      %v1496 = vadd.f32 %v1250, %v1464
      %v1497 = vadd.f32 %v1251, %v1467
      %v1498 = vadd.f32 %v1252, %v1472
      %v1499 = vadd.f32 %v1253, %v1475
      %v1500 = vadd.f32 %v1254, %v1480
      %v1501 = vadd.f32 %v1255, %v1483
      %v1502 = vadd.f32 %v1256, %v1488
      %v1503 = vadd.f32 %v1257, %v1491
      %1504 = vst [vmem:[#allocation2] sm:$0xff] %v1494
      %1505 = vst [vmem:[#allocation2 + $0x8] sm:$0xff] %v1495
      %1506 = vst [vmem:[#allocation2 + $0x10] sm:$0xff] %v1496
      %1507 = vst [vmem:[#allocation2 + $0x18] sm:$0xff] %v1497
      %1508 = vst [vmem:[#allocation2 + $0x20] sm:$0xff] %v1498
      %1509 = vst [vmem:[#allocation2 + $0x28] sm:$0xff] %v1499
      %1510 = vst [vmem:[#allocation2 + $0x30] sm:$0xff] %v1500
      %1511 = vst [vmem:[#allocation2 + $0x38] sm:$0xff] %v1501
      %1512 = vst [vmem:[#allocation2 + $0x40] sm:$0xff] %v1502
      %1513 = vst [vmem:[#allocation2 + $0x48] sm:$0xff] %v1503
      %v1514 = vld [vmem:[#allocation2] sm:$0xff]
      %v1515 = vld [vmem:[#allocation2 + $0x8] sm:$0xff]
      %v1516 = vld [vmem:[#allocation2 + $0x10] sm:$0xff]
      %v1517 = vld [vmem:[#allocation2 + $0x18] sm:$0xff]
      %v1518 = vld [vmem:[#allocation2 + $0x20] sm:$0xff]
      %v1519 = vld [vmem:[#allocation2 + $0x28] sm:$0xff]
      %v1520 = vld [vmem:[#allocation2 + $0x30] sm:$0xff]
      %v1521 = vld [vmem:[#allocation2 + $0x38] sm:$0xff]
      %v1522 = vld [vmem:[#allocation2 + $0x40] sm:$0xff]
      %v1523 = vld [vmem:[#allocation2 + $0x48] sm:$0xff]
      %v1524 = vld [vmem:[%s315 + $0x4] sm:$0xc]
      %v1525 = vld [vmem:[%s315 + $0x8] sm:$0xf]
      %v1526 = vld [vmem:[%s315 + $0xc] sm:$0xf]
      %v1527 = vld [vmem:[%s315 + $0x10] sm:$0xf]
      %v1528 = vld [vmem:[%s315 + $0x14] sm:$0xf]
      %v1529 = vld [vmem:[%s315 + $0x18] sm:$0xf]
      %v1530 = vld [vmem:[%s315 + $0x1c] sm:$0xf]
      %v1531 = vld [vmem:[%s315 + $0x20] sm:$0xf]
      %v1532 = vld [vmem:[%s315 + $0x24] sm:$0xf]
      %v1533 = vld [vmem:[%s315 + $0x28] sm:$0xf]
      %v1534 = vld [vmem:[%s315 + $0x2c] sm:$0x3]
      %s1535 = scalar_lea.vmem %s1, 320
      %v1536 = vld [vmem:[%s1535] sm:$0xf]
      %v1537 = vld [vmem:[%s1535 + $0x4] sm:$0xf]
      %v1538 = vld [vmem:[%s1535 + $0x8] sm:$0xf]
      %v1539 = vld [vmem:[%s1535 + $0xc] sm:$0xf]
      %v1540 = vld [vmem:[%s1535 + $0x10] sm:$0xf]
      %v1541 = vld [vmem:[%s1535 + $0x14] sm:$0xf]
      %v1542 = vld [vmem:[%s1535 + $0x18] sm:$0xf]
      %v1543 = vld [vmem:[%s1535 + $0x1c] sm:$0xf]
      %v1544 = vld [vmem:[%s1535 + $0x20] sm:$0xf]
      %v1545 = vld [vmem:[%s1535 + $0x24] sm:$0xf]
      %v1546 = vld [vmem:[%s1535 + $0x28] sm:$0xf]
      %v1547 = vld [vmem:[%s1535 + $0x2c] sm:$0xf]
      %v1548 = vld [vmem:[%s1535 + $0x30] sm:$0xf]
      %v1549 = vld [vmem:[%s1535 + $0x34] sm:$0xf]
      %v1550 = vld [vmem:[%s1535 + $0x38] sm:$0xf]
      %v1551 = vld [vmem:[%s1535 + $0x3c] sm:$0xf]
      %v1563 = vunpack.c.l.b16 %v1524
      %v1564 = vunpack.c.l.b16 %v1525
      %v1565 = vunpack.c.l.b16 %v1526
      %v1566 = vunpack.c.l.b16 %v1527
      %v1567 = vunpack.c.l.b16 %v1528
      %v1568 = vunpack.c.l.b16 %v1529
      %v1569 = vunpack.c.l.b16 %v1530
      %v1570 = vunpack.c.l.b16 %v1531
      %v1571 = vunpack.c.l.b16 %v1532
      %v1572 = vunpack.c.l.b16 %v1533
      %v1573 = vunpack.c.l.b16 %v1534
      %v1574 = vpack.c.b16 %v1564, %v1563
      %v1575 = vpack.c.b16 %v1566, %v1565
      %v1576 = vpack.c.b16 %v1568, %v1567
      %v1577 = vpack.c.b16 %v1570, %v1569
      %v1578 = vpack.c.b16 %v1572, %v1571
      %v1579 = vpack.c.b16 %v1573, %v1573
      %vm1580 = vcmask 1045504
      %v1581 = vrot.slane %v1574, 2
      %v1582 = vrot.slane %v1575, 2
      %v1583 = vsel %vm1580, %v1581, %v1582
      %v1584 = vrot.slane %v1576, 2
      %v1585 = vsel %vm1580, %v1582, %v1584
      %v1586 = vrot.slane %v1577, 2
      %v1587 = vsel %vm1580, %v1584, %v1586
      %v1588 = vrot.slane %v1578, 2
      %v1589 = vsel %vm1580, %v1586, %v1588
      %v1590 = vrot.slane %v1579, 2
      %v1591 = vsel %vm1580, %v1588, %v1590
      %v1613 = vunpack.c.l.b16 %v1536
      %v1614 = vunpack.c.l.b16 %v1537
      %v1615 = vunpack.c.l.b16 %v1538
      %v1616 = vunpack.c.l.b16 %v1539
      %v1617 = vunpack.c.l.b16 %v1540
      %v1618 = vunpack.c.l.b16 %v1541
      %v1619 = vunpack.c.l.b16 %v1542
      %v1620 = vunpack.c.l.b16 %v1543
      %v1621 = vunpack.c.l.b16 %v1544
      %v1622 = vunpack.c.l.b16 %v1545
      %v1623 = vunpack.c.l.b16 %v1546
      %v1624 = vunpack.c.l.b16 %v1547
      %v1625 = vunpack.c.l.b16 %v1548
      %v1626 = vunpack.c.l.b16 %v1549
      %v1627 = vunpack.c.l.b16 %v1550
      %v1628 = vunpack.c.l.b16 %v1551
      %v1629 = vpack.c.b16 %v1614, %v1613
      %v1630 = vpack.c.b16 %v1616, %v1615
      %v1631 = vpack.c.b16 %v1618, %v1617
      %v1632 = vpack.c.b16 %v1620, %v1619
      %v1633 = vpack.c.b16 %v1622, %v1621
      %v1634 = vpack.c.b16 %v1624, %v1623
      %v1635 = vpack.c.b16 %v1626, %v1625
      %v1636 = vpack.c.b16 %v1628, %v1627
      %1645 = vmatprep.subr.bf16.mxu0 0
      %1646 = vmatpush1.bf16.msra.mxu0 %v1629
      %1647 = vmatprep.subr.bf16.mxu0 0
      %1648 = vmatpush1.bf16.msra.mxu0 %v1630
      %1649 = vmatprep.subr.bf16.mxu0 0
      %1650 = vmatpush1.bf16.msra.mxu0 %v1631
      %1651 = vmatprep.subr.bf16.mxu0 0
      %1652 = vmatpush1.bf16.msra.mxu0 %v1632
      %1653 = vmatprep.subr.bf16.mxu0 0
      %1654 = vmatpush1.bf16.msra.mxu0 %v1633
      %1655 = vmatprep.subr.bf16.mxu0 0
      %1656 = vmatpush1.bf16.msra.mxu0 %v1634
      %1657 = vmatprep.subr.bf16.mxu0 0
      %1658 = vmatpush1.bf16.msra.mxu0 %v1635
      %1659 = vmatprep.subr.bf16.mxu0 0
      %1660 = vmatpush1.bf16.msra.mxu0 %v1636
      %1661 = vmatprep.subr.bf16.mxu0 0
      %1662 = vmatpush1.bf16.msra.mxu0 0
      %1663 = vmatprep.subr.bf16.mxu0 0
      %1664 = vmatpush1.bf16.msra.mxu0 0
      %1665 = vmatprep.subr.bf16.mxu0 0
      %1666 = vmatpush1.bf16.msra.mxu0 0
      %1667 = vmatprep.subr.bf16.mxu0 0
      %1668 = vmatpush1.bf16.msra.mxu0 0
      %1669 = vmatprep.subr.bf16.mxu0 0
      %1670 = vmatpush1.bf16.msra.mxu0 0
      %1671 = vmatprep.subr.bf16.mxu0 0
      %1672 = vmatpush1.bf16.msra.mxu0 0
      %1673 = vmatprep.subr.bf16.mxu0 0
      %1674 = vmatpush1.bf16.msra.mxu0 0
      %1675 = vmatprep.subr.bf16.mxu0 0
      %1676 = vmatpush1.bf16.msra.mxu0 0
      %1677 = vmatprep.mubr.bf16.mxu0 0
      %1678 = vmatmul.mubr.bf16.gmra.mrb[0].mxu0 %v1583
      %v1679 = vpop.f32.mrb[0].mxu0
      %v1680 = vadd.f32 0.0, %v1679
      %v1681 = vpop.f32.mrb[0].mxu0
      %v1682 = vpop.f32.mrb[0].mxu0
      %v1683 = vadd.f32 0.0, %v1682
      %v1684 = vpop.f32.mrb[0].mxu0
      %1685 = vmatprep.mubr.bf16.mxu0 0
      %1686 = vmatmul.mubr.bf16.gmra.mrb[0].mxu0 %v1585
      %v1687 = vpop.f32.mrb[0].mxu0
      %v1688 = vadd.f32 0.0, %v1687
      %v1689 = vpop.f32.mrb[0].mxu0
      %v1690 = vpop.f32.mrb[0].mxu0
      %v1691 = vadd.f32 0.0, %v1690
      %v1692 = vpop.f32.mrb[0].mxu0
      %1693 = vmatprep.mubr.bf16.mxu0 0
      %1694 = vmatmul.mubr.bf16.gmra.mrb[0].mxu0 %v1587
      %v1695 = vpop.f32.mrb[0].mxu0
      %v1696 = vadd.f32 0.0, %v1695
      %v1697 = vpop.f32.mrb[0].mxu0
      %v1698 = vpop.f32.mrb[0].mxu0
      %v1699 = vadd.f32 0.0, %v1698
      %v1700 = vpop.f32.mrb[0].mxu0
      %1701 = vmatprep.mubr.bf16.mxu0 0
      %1702 = vmatmul.mubr.bf16.gmra.mrb[0].mxu0 %v1589
      %v1703 = vpop.f32.mrb[0].mxu0
      %v1704 = vadd.f32 0.0, %v1703
      %v1705 = vpop.f32.mrb[0].mxu0
      %v1706 = vpop.f32.mrb[0].mxu0
      %v1707 = vadd.f32 0.0, %v1706
      %v1708 = vpop.f32.mrb[0].mxu0
      %1709 = vmatprep.mubr.bf16.mxu0 0
      %1710 = vmatmul.mubr.bf16.gmra.mrb[0].mxu0 %v1591
      %v1711 = vpop.f32.mrb[0].mxu0
      %v1712 = vadd.f32 0.0, %v1711
      %v1713 = vpop.f32.mrb[0].mxu0
      %v1714 = vpop.f32.mrb[0].mxu0
      %v1715 = vadd.f32 0.0, %v1714
      %v1716 = vpop.f32.mrb[0].mxu0
      %1717 = vdwg.mxu0
      %v1718 = vadd.f32 %v1514, %v1680
      %v1719 = vadd.f32 %v1515, %v1683
      %v1720 = vadd.f32 %v1516, %v1688
      %v1721 = vadd.f32 %v1517, %v1691
      %v1722 = vadd.f32 %v1518, %v1696
      %v1723 = vadd.f32 %v1519, %v1699
      %v1724 = vadd.f32 %v1520, %v1704
      %v1725 = vadd.f32 %v1521, %v1707
      %v1726 = vadd.f32 %v1522, %v1712
      %v1727 = vadd.f32 %v1523, %v1715
      %1728 = vst [vmem:[#allocation2] sm:$0xff] %v1718
      %1729 = vst [vmem:[#allocation2 + $0x8] sm:$0xff] %v1719
      %1730 = vst [vmem:[#allocation2 + $0x10] sm:$0xff] %v1720
      %1731 = vst [vmem:[#allocation2 + $0x18] sm:$0xff] %v1721
      %1732 = vst [vmem:[#allocation2 + $0x20] sm:$0xff] %v1722
      %1733 = vst [vmem:[#allocation2 + $0x28] sm:$0xff] %v1723
      %1734 = vst [vmem:[#allocation2 + $0x30] sm:$0xff] %v1724
      %1735 = vst [vmem:[#allocation2 + $0x38] sm:$0xff] %v1725
      %1736 = vst [vmem:[#allocation2 + $0x40] sm:$0xff] %v1726
      %1737 = vst [vmem:[#allocation2 + $0x48] sm:$0xff] %v1727
      %v1738 = vld [vmem:[#allocation2] sm:$0xff]
      %v1739 = vld [vmem:[#allocation2 + $0x8] sm:$0xff]
      %v1740 = vld [vmem:[#allocation2 + $0x10] sm:$0xff]
      %v1741 = vld [vmem:[#allocation2 + $0x18] sm:$0xff]
      %v1742 = vld [vmem:[#allocation2 + $0x20] sm:$0xff]
      %v1743 = vld [vmem:[#allocation2 + $0x28] sm:$0xff]
      %v1744 = vld [vmem:[#allocation2 + $0x30] sm:$0xff]
      %v1745 = vld [vmem:[#allocation2 + $0x38] sm:$0xff]
      %v1746 = vld [vmem:[#allocation2 + $0x40] sm:$0xff]
      %v1747 = vld [vmem:[#allocation2 + $0x48] sm:$0xff]
      %v1748 = vld [vmem:[%s315 + $0x8] sm:$0xc]
      %v1749 = vld [vmem:[%s315 + $0xc] sm:$0xf]
      %v1750 = vld [vmem:[%s315 + $0x10] sm:$0xf]
      %v1751 = vld [vmem:[%s315 + $0x14] sm:$0xf]
      %v1752 = vld [vmem:[%s315 + $0x18] sm:$0xf]
      %v1753 = vld [vmem:[%s315 + $0x1c] sm:$0xf]
      %v1754 = vld [vmem:[%s315 + $0x20] sm:$0xf]
      %v1755 = vld [vmem:[%s315 + $0x24] sm:$0xf]
      %v1756 = vld [vmem:[%s315 + $0x28] sm:$0xf]
      %v1757 = vld [vmem:[%s315 + $0x2c] sm:$0xf]
      %v1758 = vld [vmem:[%s315 + $0x30] sm:$0x3]
      %s1759 = scalar_lea.vmem %s1, 384
      %v1760 = vld [vmem:[%s1759] sm:$0xf]
      %v1761 = vld [vmem:[%s1759 + $0x4] sm:$0xf]
      %v1762 = vld [vmem:[%s1759 + $0x8] sm:$0xf]
      %v1763 = vld [vmem:[%s1759 + $0xc] sm:$0xf]
      %v1764 = vld [vmem:[%s1759 + $0x10] sm:$0xf]
      %v1765 = vld [vmem:[%s1759 + $0x14] sm:$0xf]
      %v1766 = vld [vmem:[%s1759 + $0x18] sm:$0xf]
      %v1767 = vld [vmem:[%s1759 + $0x1c] sm:$0xf]
      %v1768 = vld [vmem:[%s1759 + $0x20] sm:$0xf]
      %v1769 = vld [vmem:[%s1759 + $0x24] sm:$0xf]
      %v1770 = vld [vmem:[%s1759 + $0x28] sm:$0xf]
      %v1771 = vld [vmem:[%s1759 + $0x2c] sm:$0xf]
      %v1772 = vld [vmem:[%s1759 + $0x30] sm:$0xf]
      %v1773 = vld [vmem:[%s1759 + $0x34] sm:$0xf]
      %v1774 = vld [vmem:[%s1759 + $0x38] sm:$0xf]
      %v1775 = vld [vmem:[%s1759 + $0x3c] sm:$0xf]
      %v1787 = vunpack.c.l.b16 %v1748
      %v1788 = vunpack.c.l.b16 %v1749
      %v1789 = vunpack.c.l.b16 %v1750
      %v1790 = vunpack.c.l.b16 %v1751
      %v1791 = vunpack.c.l.b16 %v1752
      %v1792 = vunpack.c.l.b16 %v1753
      %v1793 = vunpack.c.l.b16 %v1754
      %v1794 = vunpack.c.l.b16 %v1755
      %v1795 = vunpack.c.l.b16 %v1756
      %v1796 = vunpack.c.l.b16 %v1757
      %v1797 = vunpack.c.l.b16 %v1758
      %v1798 = vpack.c.b16 %v1788, %v1787
      %v1799 = vpack.c.b16 %v1790, %v1789
      %v1800 = vpack.c.b16 %v1792, %v1791
      %v1801 = vpack.c.b16 %v1794, %v1793
      %v1802 = vpack.c.b16 %v1796, %v1795
      %v1803 = vpack.c.b16 %v1797, %v1797
      %v1804 = vrot.slane %v1798, 2
      %v1805 = vrot.slane %v1799, 2
      %v1806 = vsel %vm1580, %v1804, %v1805
      %v1807 = vrot.slane %v1800, 2
      %v1808 = vsel %vm1580, %v1805, %v1807
      %v1809 = vrot.slane %v1801, 2
      %v1810 = vsel %vm1580, %v1807, %v1809
      %v1811 = vrot.slane %v1802, 2
      %v1812 = vsel %vm1580, %v1809, %v1811
      %v1813 = vrot.slane %v1803, 2
      %v1814 = vsel %vm1580, %v1811, %v1813
      %v1836 = vunpack.c.l.b16 %v1760
      %v1837 = vunpack.c.l.b16 %v1761
      %v1838 = vunpack.c.l.b16 %v1762
      %v1839 = vunpack.c.l.b16 %v1763
      %v1840 = vunpack.c.l.b16 %v1764
      %v1841 = vunpack.c.l.b16 %v1765
      %v1842 = vunpack.c.l.b16 %v1766
      %v1843 = vunpack.c.l.b16 %v1767
      %v1844 = vunpack.c.l.b16 %v1768
      %v1845 = vunpack.c.l.b16 %v1769
      %v1846 = vunpack.c.l.b16 %v1770
      %v1847 = vunpack.c.l.b16 %v1771
      %v1848 = vunpack.c.l.b16 %v1772
      %v1849 = vunpack.c.l.b16 %v1773
      %v1850 = vunpack.c.l.b16 %v1774
      %v1851 = vunpack.c.l.b16 %v1775
      %v1852 = vpack.c.b16 %v1837, %v1836
      %v1853 = vpack.c.b16 %v1839, %v1838
      %v1854 = vpack.c.b16 %v1841, %v1840
      %v1855 = vpack.c.b16 %v1843, %v1842
      %v1856 = vpack.c.b16 %v1845, %v1844
      %v1857 = vpack.c.b16 %v1847, %v1846
      %v1858 = vpack.c.b16 %v1849, %v1848
      %v1859 = vpack.c.b16 %v1851, %v1850
      %1868 = vmatprep.subr.bf16.mxu0 0
      %1869 = vmatpush1.bf16.msra.mxu0 %v1852
      %1870 = vmatprep.subr.bf16.mxu0 0
      %1871 = vmatpush1.bf16.msra.mxu0 %v1853
      %1872 = vmatprep.subr.bf16.mxu0 0
      %1873 = vmatpush1.bf16.msra.mxu0 %v1854
      %1874 = vmatprep.subr.bf16.mxu0 0
      %1875 = vmatpush1.bf16.msra.mxu0 %v1855
      %1876 = vmatprep.subr.bf16.mxu0 0
      %1877 = vmatpush1.bf16.msra.mxu0 %v1856
      %1878 = vmatprep.subr.bf16.mxu0 0
      %1879 = vmatpush1.bf16.msra.mxu0 %v1857
      %1880 = vmatprep.subr.bf16.mxu0 0
      %1881 = vmatpush1.bf16.msra.mxu0 %v1858
      %1882 = vmatprep.subr.bf16.mxu0 0
      %1883 = vmatpush1.bf16.msra.mxu0 %v1859
      %1884 = vmatprep.subr.bf16.mxu0 0
      %1885 = vmatpush1.bf16.msra.mxu0 0
      %1886 = vmatprep.subr.bf16.mxu0 0
      %1887 = vmatpush1.bf16.msra.mxu0 0
      %1888 = vmatprep.subr.bf16.mxu0 0
      %1889 = vmatpush1.bf16.msra.mxu0 0
      %1890 = vmatprep.subr.bf16.mxu0 0
      %1891 = vmatpush1.bf16.msra.mxu0 0
      %1892 = vmatprep.subr.bf16.mxu0 0
      %1893 = vmatpush1.bf16.msra.mxu0 0
      %1894 = vmatprep.subr.bf16.mxu0 0
      %1895 = vmatpush1.bf16.msra.mxu0 0
      %1896 = vmatprep.subr.bf16.mxu0 0
      %1897 = vmatpush1.bf16.msra.mxu0 0
      %1898 = vmatprep.subr.bf16.mxu0 0
      %1899 = vmatpush1.bf16.msra.mxu0 0
      %1900 = vmatprep.mubr.bf16.mxu0 0
      %1901 = vmatmul.mubr.bf16.gmra.mrb[0].mxu0 %v1806
      %v1902 = vpop.f32.mrb[0].mxu0
      %v1903 = vadd.f32 0.0, %v1902
      %v1904 = vpop.f32.mrb[0].mxu0
      %v1905 = vpop.f32.mrb[0].mxu0
      %v1906 = vadd.f32 0.0, %v1905
      %v1907 = vpop.f32.mrb[0].mxu0
      %1908 = vmatprep.mubr.bf16.mxu0 0
      %1909 = vmatmul.mubr.bf16.gmra.mrb[0].mxu0 %v1808
      %v1910 = vpop.f32.mrb[0].mxu0
      %v1911 = vadd.f32 0.0, %v1910
      %v1912 = vpop.f32.mrb[0].mxu0
      %v1913 = vpop.f32.mrb[0].mxu0
      %v1914 = vadd.f32 0.0, %v1913
      %v1915 = vpop.f32.mrb[0].mxu0
      %1916 = vmatprep.mubr.bf16.mxu0 0
      %1917 = vmatmul.mubr.bf16.gmra.mrb[0].mxu0 %v1810
      %v1918 = vpop.f32.mrb[0].mxu0
      %v1919 = vadd.f32 0.0, %v1918
      %v1920 = vpop.f32.mrb[0].mxu0
      %v1921 = vpop.f32.mrb[0].mxu0
      %v1922 = vadd.f32 0.0, %v1921
      %v1923 = vpop.f32.mrb[0].mxu0
      %1924 = vmatprep.mubr.bf16.mxu0 0
      %1925 = vmatmul.mubr.bf16.gmra.mrb[0].mxu0 %v1812
      %v1926 = vpop.f32.mrb[0].mxu0
      %v1927 = vadd.f32 0.0, %v1926
      %v1928 = vpop.f32.mrb[0].mxu0
      %v1929 = vpop.f32.mrb[0].mxu0
      %v1930 = vadd.f32 0.0, %v1929
      %v1931 = vpop.f32.mrb[0].mxu0
      %1932 = vmatprep.mubr.bf16.mxu0 0
      %1933 = vmatmul.mubr.bf16.gmra.mrb[0].mxu0 %v1814
      %v1934 = vpop.f32.mrb[0].mxu0
      %v1935 = vadd.f32 0.0, %v1934
      %v1936 = vpop.f32.mrb[0].mxu0
      %v1937 = vpop.f32.mrb[0].mxu0
      %v1938 = vadd.f32 0.0, %v1937
      %v1939 = vpop.f32.mrb[0].mxu0
      %1940 = vdwg.mxu0
      %v1941 = vadd.f32 %v1738, %v1903
      %v1942 = vadd.f32 %v1739, %v1906
      %v1943 = vadd.f32 %v1740, %v1911
      %v1944 = vadd.f32 %v1741, %v1914
      %v1945 = vadd.f32 %v1742, %v1919
      %v1946 = vadd.f32 %v1743, %v1922
      %v1947 = vadd.f32 %v1744, %v1927
      %v1948 = vadd.f32 %v1745, %v1930
      %v1949 = vadd.f32 %v1746, %v1935
      %v1950 = vadd.f32 %v1747, %v1938
      %1951 = vst [vmem:[#allocation2] sm:$0xff] %v1941
      %1952 = vst [vmem:[#allocation2 + $0x8] sm:$0xff] %v1942
      %1953 = vst [vmem:[#allocation2 + $0x10] sm:$0xff] %v1943
      %1954 = vst [vmem:[#allocation2 + $0x18] sm:$0xff] %v1944
      %1955 = vst [vmem:[#allocation2 + $0x20] sm:$0xff] %v1945
      %1956 = vst [vmem:[#allocation2 + $0x28] sm:$0xff] %v1946
      %1957 = vst [vmem:[#allocation2 + $0x30] sm:$0xff] %v1947
      %1958 = vst [vmem:[#allocation2 + $0x38] sm:$0xff] %v1948
      %1959 = vst [vmem:[#allocation2 + $0x40] sm:$0xff] %v1949
      %1960 = vst [vmem:[#allocation2 + $0x48] sm:$0xff] %v1950
      %v1961 = vld [vmem:[#allocation2] sm:$0xff]
      %v1962 = vld [vmem:[#allocation2 + $0x8] sm:$0xff]
      %v1963 = vld [vmem:[#allocation2 + $0x10] sm:$0xff]
      %v1964 = vld [vmem:[#allocation2 + $0x18] sm:$0xff]
      %v1965 = vld [vmem:[#allocation2 + $0x20] sm:$0xff]
      %v1966 = vld [vmem:[#allocation2 + $0x28] sm:$0xff]
      %v1967 = vld [vmem:[#allocation2 + $0x30] sm:$0xff]
      %v1968 = vld [vmem:[#allocation2 + $0x38] sm:$0xff]
      %v1969 = vld [vmem:[#allocation2 + $0x40] sm:$0xff]
      %v1970 = vld [vmem:[#allocation2 + $0x48] sm:$0xff]
      %v1971 = vld [vmem:[%s315 + $0x8] sm:$0xc]
      %v1972 = vld [vmem:[%s315 + $0xc] sm:$0xf]
      %v1973 = vld [vmem:[%s315 + $0x10] sm:$0xf]
      %v1974 = vld [vmem:[%s315 + $0x14] sm:$0xf]
      %v1975 = vld [vmem:[%s315 + $0x18] sm:$0xf]
      %v1976 = vld [vmem:[%s315 + $0x1c] sm:$0xf]
      %v1977 = vld [vmem:[%s315 + $0x20] sm:$0xf]
      %v1978 = vld [vmem:[%s315 + $0x24] sm:$0xf]
      %v1979 = vld [vmem:[%s315 + $0x28] sm:$0xf]
      %v1980 = vld [vmem:[%s315 + $0x2c] sm:$0xf]
      %v1981 = vld [vmem:[%s315 + $0x30] sm:$0x7]
      %s1982 = scalar_lea.vmem %s1, 448
      %v1983 = vld [vmem:[%s1982] sm:$0xf]
      %v1984 = vld [vmem:[%s1982 + $0x4] sm:$0xf]
      %v1985 = vld [vmem:[%s1982 + $0x8] sm:$0xf]
      %v1986 = vld [vmem:[%s1982 + $0xc] sm:$0xf]
      %v1987 = vld [vmem:[%s1982 + $0x10] sm:$0xf]
      %v1988 = vld [vmem:[%s1982 + $0x14] sm:$0xf]
      %v1989 = vld [vmem:[%s1982 + $0x18] sm:$0xf]
      %v1990 = vld [vmem:[%s1982 + $0x1c] sm:$0xf]
      %v1991 = vld [vmem:[%s1982 + $0x20] sm:$0xf]
      %v1992 = vld [vmem:[%s1982 + $0x24] sm:$0xf]
      %v1993 = vld [vmem:[%s1982 + $0x28] sm:$0xf]
      %v1994 = vld [vmem:[%s1982 + $0x2c] sm:$0xf]
      %v1995 = vld [vmem:[%s1982 + $0x30] sm:$0xf]
      %v1996 = vld [vmem:[%s1982 + $0x34] sm:$0xf]
      %v1997 = vld [vmem:[%s1982 + $0x38] sm:$0xf]
      %v1998 = vld [vmem:[%s1982 + $0x3c] sm:$0xf]
      %v2010 = vunpack.c.l.b16 %v1971
      %v2011 = vunpack.c.l.b16 %v1972
      %v2012 = vunpack.c.l.b16 %v1973
      %v2013 = vunpack.c.l.b16 %v1974
      %v2014 = vunpack.c.l.b16 %v1975
      %v2015 = vunpack.c.l.b16 %v1976
      %v2016 = vunpack.c.l.b16 %v1977
      %v2017 = vunpack.c.l.b16 %v1978
      %v2018 = vunpack.c.l.b16 %v1979
      %v2019 = vunpack.c.l.b16 %v1980
      %v2020 = vunpack.c.l.b16 %v1981
      %v2021 = vpack.c.b16 %v2011, %v2010
      %v2022 = vpack.c.b16 %v2013, %v2012
      %v2023 = vpack.c.b16 %v2015, %v2014
      %v2024 = vpack.c.b16 %v2017, %v2016
      %v2025 = vpack.c.b16 %v2019, %v2018
      %v2026 = vpack.c.b16 %v2020, %v2020
      %vm2027 = vsmask.f32 5376
      %v2029 = vshrl.u32 %v2021, 16
      %v2031 = vrot.slane %v2029, 2
      %v2032 = vshll.u32 %v2021, 16
      %v2034 = vrot.slane %v2032, 3
      %v2035 = vor.u32 %v2031, %v2034
      %v2037 = vshrl.u32 %v2022, 16
      %v2039 = vrot.slane %v2037, 2
      %v2040 = vshll.u32 %v2022, 16
      %v2042 = vrot.slane %v2040, 3
      %v2043 = vor.u32 %v2039, %v2042
      %v2044 = vsel %vm2027, %v2035, %v2043
      %v2046 = vshrl.u32 %v2023, 16
      %v2048 = vrot.slane %v2046, 2
      %v2049 = vshll.u32 %v2023, 16
      %v2051 = vrot.slane %v2049, 3
      %v2052 = vor.u32 %v2048, %v2051
      %v2053 = vsel %vm2027, %v2043, %v2052
      %v2055 = vshrl.u32 %v2024, 16
      %v2057 = vrot.slane %v2055, 2
      %v2058 = vshll.u32 %v2024, 16
      %v2060 = vrot.slane %v2058, 3
      %v2061 = vor.u32 %v2057, %v2060
      %v2062 = vsel %vm2027, %v2052, %v2061
      %v2064 = vshrl.u32 %v2025, 16
      %v2066 = vrot.slane %v2064, 2
      %v2067 = vshll.u32 %v2025, 16
      %v2069 = vrot.slane %v2067, 3
      %v2070 = vor.u32 %v2066, %v2069
      %v2071 = vsel %vm2027, %v2061, %v2070
      %v2073 = vshrl.u32 %v2026, 16
      %v2075 = vrot.slane %v2073, 2
      %v2076 = vshll.u32 %v2026, 16
      %v2078 = vrot.slane %v2076, 3
      %v2079 = vor.u32 %v2075, %v2078
      %v2080 = vsel %vm2027, %v2070, %v2079
      %v2102 = vunpack.c.l.b16 %v1983
      %v2103 = vunpack.c.l.b16 %v1984
      %v2104 = vunpack.c.l.b16 %v1985
      %v2105 = vunpack.c.l.b16 %v1986
      %v2106 = vunpack.c.l.b16 %v1987
      %v2107 = vunpack.c.l.b16 %v1988
      %v2108 = vunpack.c.l.b16 %v1989
      %v2109 = vunpack.c.l.b16 %v1990
      %v2110 = vunpack.c.l.b16 %v1991
      %v2111 = vunpack.c.l.b16 %v1992
      %v2112 = vunpack.c.l.b16 %v1993
      %v2113 = vunpack.c.l.b16 %v1994
      %v2114 = vunpack.c.l.b16 %v1995
      %v2115 = vunpack.c.l.b16 %v1996
      %v2116 = vunpack.c.l.b16 %v1997
      %v2117 = vunpack.c.l.b16 %v1998
      %v2118 = vpack.c.b16 %v2103, %v2102
      %v2119 = vpack.c.b16 %v2105, %v2104
      %v2120 = vpack.c.b16 %v2107, %v2106
      %v2121 = vpack.c.b16 %v2109, %v2108
      %v2122 = vpack.c.b16 %v2111, %v2110
      %v2123 = vpack.c.b16 %v2113, %v2112
      %v2124 = vpack.c.b16 %v2115, %v2114
      %v2125 = vpack.c.b16 %v2117, %v2116
      %2134 = vmatprep.subr.bf16.mxu0 0
      %2135 = vmatpush1.bf16.msra.mxu0 %v2118
      %2136 = vmatprep.subr.bf16.mxu0 0
      %2137 = vmatpush1.bf16.msra.mxu0 %v2119
      %2138 = vmatprep.subr.bf16.mxu0 0
      %2139 = vmatpush1.bf16.msra.mxu0 %v2120
      %2140 = vmatprep.subr.bf16.mxu0 0
      %2141 = vmatpush1.bf16.msra.mxu0 %v2121
      %2142 = vmatprep.subr.bf16.mxu0 0
      %2143 = vmatpush1.bf16.msra.mxu0 %v2122
      %2144 = vmatprep.subr.bf16.mxu0 0
      %2145 = vmatpush1.bf16.msra.mxu0 %v2123
      %2146 = vmatprep.subr.bf16.mxu0 0
      %2147 = vmatpush1.bf16.msra.mxu0 %v2124
      %2148 = vmatprep.subr.bf16.mxu0 0
      %2149 = vmatpush1.bf16.msra.mxu0 %v2125
      %2150 = vmatprep.subr.bf16.mxu0 0
      %2151 = vmatpush1.bf16.msra.mxu0 0
      %2152 = vmatprep.subr.bf16.mxu0 0
      %2153 = vmatpush1.bf16.msra.mxu0 0
      %2154 = vmatprep.subr.bf16.mxu0 0
      %2155 = vmatpush1.bf16.msra.mxu0 0
      %2156 = vmatprep.subr.bf16.mxu0 0
      %2157 = vmatpush1.bf16.msra.mxu0 0
      %2158 = vmatprep.subr.bf16.mxu0 0
      %2159 = vmatpush1.bf16.msra.mxu0 0
      %2160 = vmatprep.subr.bf16.mxu0 0
      %2161 = vmatpush1.bf16.msra.mxu0 0
      %2162 = vmatprep.subr.bf16.mxu0 0
      %2163 = vmatpush1.bf16.msra.mxu0 0
      %2164 = vmatprep.subr.bf16.mxu0 0
      %2165 = vmatpush1.bf16.msra.mxu0 0
      %2166 = vmatprep.mubr.bf16.mxu0 0
      %2167 = vmatmul.mubr.bf16.gmra.mrb[0].mxu0 %v2044
      %v2168 = vpop.f32.mrb[0].mxu0
      %v2169 = vadd.f32 0.0, %v2168
      %v2170 = vpop.f32.mrb[0].mxu0
      %v2171 = vpop.f32.mrb[0].mxu0
      %v2172 = vadd.f32 0.0, %v2171
      %v2173 = vpop.f32.mrb[0].mxu0
      %2174 = vmatprep.mubr.bf16.mxu0 0
      %2175 = vmatmul.mubr.bf16.gmra.mrb[0].mxu0 %v2053
      %v2176 = vpop.f32.mrb[0].mxu0
      %v2177 = vadd.f32 0.0, %v2176
      %v2178 = vpop.f32.mrb[0].mxu0
      %v2179 = vpop.f32.mrb[0].mxu0
      %v2180 = vadd.f32 0.0, %v2179
      %v2181 = vpop.f32.mrb[0].mxu0
      %2182 = vmatprep.mubr.bf16.mxu0 0
      %2183 = vmatmul.mubr.bf16.gmra.mrb[0].mxu0 %v2062
      %v2184 = vpop.f32.mrb[0].mxu0
      %v2185 = vadd.f32 0.0, %v2184
      %v2186 = vpop.f32.mrb[0].mxu0
      %v2187 = vpop.f32.mrb[0].mxu0
      %v2188 = vadd.f32 0.0, %v2187
      %v2189 = vpop.f32.mrb[0].mxu0
      %2190 = vmatprep.mubr.bf16.mxu0 0
      %2191 = vmatmul.mubr.bf16.gmra.mrb[0].mxu0 %v2071
      %v2192 = vpop.f32.mrb[0].mxu0
      %v2193 = vadd.f32 0.0, %v2192
      %v2194 = vpop.f32.mrb[0].mxu0
      %v2195 = vpop.f32.mrb[0].mxu0
      %v2196 = vadd.f32 0.0, %v2195
      %v2197 = vpop.f32.mrb[0].mxu0
      %2198 = vmatprep.mubr.bf16.mxu0 0
      %2199 = vmatmul.mubr.bf16.gmra.mrb[0].mxu0 %v2080
      %v2200 = vpop.f32.mrb[0].mxu0
      %v2201 = vadd.f32 0.0, %v2200
      %v2202 = vpop.f32.mrb[0].mxu0
      %v2203 = vpop.f32.mrb[0].mxu0
      %v2204 = vadd.f32 0.0, %v2203
      %v2205 = vpop.f32.mrb[0].mxu0
      %2206 = vdwg.mxu0
      %v2207 = vadd.f32 %v1961, %v2169
      %v2208 = vadd.f32 %v1962, %v2172
      %v2209 = vadd.f32 %v1963, %v2177
      %v2210 = vadd.f32 %v1964, %v2180
      %v2211 = vadd.f32 %v1965, %v2185
      %v2212 = vadd.f32 %v1966, %v2188
      %v2213 = vadd.f32 %v1967, %v2193
      %v2214 = vadd.f32 %v1968, %v2196
      %v2215 = vadd.f32 %v1969, %v2201
      %v2216 = vadd.f32 %v1970, %v2204
      %2217 = vst [vmem:[#allocation2] sm:$0xff] %v2207
      %2218 = vst [vmem:[#allocation2 + $0x8] sm:$0xff] %v2208
      %2219 = vst [vmem:[#allocation2 + $0x10] sm:$0xff] %v2209
      %2220 = vst [vmem:[#allocation2 + $0x18] sm:$0xff] %v2210
      %2221 = vst [vmem:[#allocation2 + $0x20] sm:$0xff] %v2211
      %2222 = vst [vmem:[#allocation2 + $0x28] sm:$0xff] %v2212
      %2223 = vst [vmem:[#allocation2 + $0x30] sm:$0xff] %v2213
      %2224 = vst [vmem:[#allocation2 + $0x38] sm:$0xff] %v2214
      %2225 = vst [vmem:[#allocation2 + $0x40] sm:$0xff] %v2215
      %2226 = vst [vmem:[#allocation2 + $0x48] sm:$0xff] %v2216
      %v2227 = vld [vmem:[#allocation2] sm:$0xff]
      %v2228 = vld [vmem:[#allocation2 + $0x8] sm:$0xff]
      %v2229 = vld [vmem:[#allocation2 + $0x10] sm:$0xff]
      %v2230 = vld [vmem:[#allocation2 + $0x18] sm:$0xff]
      %v2231 = vld [vmem:[#allocation2 + $0x20] sm:$0xff]
      %v2232 = vld [vmem:[#allocation2 + $0x28] sm:$0xff]
      %v2233 = vld [vmem:[#allocation2 + $0x30] sm:$0xff]
      %v2234 = vld [vmem:[#allocation2 + $0x38] sm:$0xff]
      %v2235 = vld [vmem:[#allocation2 + $0x40] sm:$0xff]
      %v2236 = vld [vmem:[#allocation2 + $0x48] sm:$0xff]
      %v2237 = vld [vmem:[%s315 + $0x8] sm:$0x8]
      %v2238 = vld [vmem:[%s315 + $0xc] sm:$0xf]
      %v2239 = vld [vmem:[%s315 + $0x10] sm:$0xf]
      %v2240 = vld [vmem:[%s315 + $0x14] sm:$0xf]
      %v2241 = vld [vmem:[%s315 + $0x18] sm:$0xf]
      %v2242 = vld [vmem:[%s315 + $0x1c] sm:$0xf]
      %v2243 = vld [vmem:[%s315 + $0x20] sm:$0xf]
      %v2244 = vld [vmem:[%s315 + $0x24] sm:$0xf]
      %v2245 = vld [vmem:[%s315 + $0x28] sm:$0xf]
      %v2246 = vld [vmem:[%s315 + $0x2c] sm:$0xf]
      %v2247 = vld [vmem:[%s315 + $0x30] sm:$0x7]
      %s2248 = scalar_lea.vmem %s1, 512
      %v2249 = vld [vmem:[%s2248] sm:$0xf]
      %v2250 = vld [vmem:[%s2248 + $0x4] sm:$0xf]
      %v2251 = vld [vmem:[%s2248 + $0x8] sm:$0xf]
      %v2252 = vld [vmem:[%s2248 + $0xc] sm:$0xf]
      %v2253 = vld [vmem:[%s2248 + $0x10] sm:$0xf]
      %v2254 = vld [vmem:[%s2248 + $0x14] sm:$0xf]
      %v2255 = vld [vmem:[%s2248 + $0x18] sm:$0xf]
      %v2256 = vld [vmem:[%s2248 + $0x1c] sm:$0xf]
      %v2257 = vld [vmem:[%s2248 + $0x20] sm:$0xf]
      %v2258 = vld [vmem:[%s2248 + $0x24] sm:$0xf]
      %v2259 = vld [vmem:[%s2248 + $0x28] sm:$0xf]
      %v2260 = vld [vmem:[%s2248 + $0x2c] sm:$0xf]
      %v2261 = vld [vmem:[%s2248 + $0x30] sm:$0xf]
      %v2262 = vld [vmem:[%s2248 + $0x34] sm:$0xf]
      %v2263 = vld [vmem:[%s2248 + $0x38] sm:$0xf]
      %v2264 = vld [vmem:[%s2248 + $0x3c] sm:$0xf]
      %v2276 = vunpack.c.l.b16 %v2237
      %v2277 = vunpack.c.l.b16 %v2238
      %v2278 = vunpack.c.l.b16 %v2239
      %v2279 = vunpack.c.l.b16 %v2240
      %v2280 = vunpack.c.l.b16 %v2241
      %v2281 = vunpack.c.l.b16 %v2242
      %v2282 = vunpack.c.l.b16 %v2243
      %v2283 = vunpack.c.l.b16 %v2244
      %v2284 = vunpack.c.l.b16 %v2245
      %v2285 = vunpack.c.l.b16 %v2246
      %v2286 = vunpack.c.l.b16 %v2247
      %v2287 = vpack.c.b16 %v2277, %v2276
      %v2288 = vpack.c.b16 %v2279, %v2278
      %v2289 = vpack.c.b16 %v2281, %v2280
      %v2290 = vpack.c.b16 %v2283, %v2282
      %v2291 = vpack.c.b16 %v2285, %v2284
      %v2292 = vpack.c.b16 %v2286, %v2286
      %vm2293 = vcmask 1044480
      %v2294 = vrot.slane %v2287, 3
      %v2295 = vrot.slane %v2288, 3
      %v2296 = vsel %vm2293, %v2294, %v2295
      %v2297 = vrot.slane %v2289, 3
      %v2298 = vsel %vm2293, %v2295, %v2297
      %v2299 = vrot.slane %v2290, 3
      %v2300 = vsel %vm2293, %v2297, %v2299
      %v2301 = vrot.slane %v2291, 3
      %v2302 = vsel %vm2293, %v2299, %v2301
      %v2303 = vrot.slane %v2292, 3
      %v2304 = vsel %vm2293, %v2301, %v2303
      %v2326 = vunpack.c.l.b16 %v2249
      %v2327 = vunpack.c.l.b16 %v2250
      %v2328 = vunpack.c.l.b16 %v2251
      %v2329 = vunpack.c.l.b16 %v2252
      %v2330 = vunpack.c.l.b16 %v2253
      %v2331 = vunpack.c.l.b16 %v2254
      %v2332 = vunpack.c.l.b16 %v2255
      %v2333 = vunpack.c.l.b16 %v2256
      %v2334 = vunpack.c.l.b16 %v2257
      %v2335 = vunpack.c.l.b16 %v2258
      %v2336 = vunpack.c.l.b16 %v2259
      %v2337 = vunpack.c.l.b16 %v2260
      %v2338 = vunpack.c.l.b16 %v2261
      %v2339 = vunpack.c.l.b16 %v2262
      %v2340 = vunpack.c.l.b16 %v2263
      %v2341 = vunpack.c.l.b16 %v2264
      %v2342 = vpack.c.b16 %v2327, %v2326
      %v2343 = vpack.c.b16 %v2329, %v2328
      %v2344 = vpack.c.b16 %v2331, %v2330
      %v2345 = vpack.c.b16 %v2333, %v2332
      %v2346 = vpack.c.b16 %v2335, %v2334
      %v2347 = vpack.c.b16 %v2337, %v2336
      %v2348 = vpack.c.b16 %v2339, %v2338
      %v2349 = vpack.c.b16 %v2341, %v2340
      %2358 = vmatprep.subr.bf16.mxu0 0
      %2359 = vmatpush1.bf16.msra.mxu0 %v2342
      %2360 = vmatprep.subr.bf16.mxu0 0
      %2361 = vmatpush1.bf16.msra.mxu0 %v2343
      %2362 = vmatprep.subr.bf16.mxu0 0
      %2363 = vmatpush1.bf16.msra.mxu0 %v2344
      %2364 = vmatprep.subr.bf16.mxu0 0
      %2365 = vmatpush1.bf16.msra.mxu0 %v2345
      %2366 = vmatprep.subr.bf16.mxu0 0
      %2367 = vmatpush1.bf16.msra.mxu0 %v2346
      %2368 = vmatprep.subr.bf16.mxu0 0
      %2369 = vmatpush1.bf16.msra.mxu0 %v2347
      %2370 = vmatprep.subr.bf16.mxu0 0
      %2371 = vmatpush1.bf16.msra.mxu0 %v2348
      %2372 = vmatprep.subr.bf16.mxu0 0
      %2373 = vmatpush1.bf16.msra.mxu0 %v2349
      %2374 = vmatprep.subr.bf16.mxu0 0
      %2375 = vmatpush1.bf16.msra.mxu0 0
      %2376 = vmatprep.subr.bf16.mxu0 0
      %2377 = vmatpush1.bf16.msra.mxu0 0
      %2378 = vmatprep.subr.bf16.mxu0 0
      %2379 = vmatpush1.bf16.msra.mxu0 0
      %2380 = vmatprep.subr.bf16.mxu0 0
      %2381 = vmatpush1.bf16.msra.mxu0 0
      %2382 = vmatprep.subr.bf16.mxu0 0
      %2383 = vmatpush1.bf16.msra.mxu0 0
      %2384 = vmatprep.subr.bf16.mxu0 0
      %2385 = vmatpush1.bf16.msra.mxu0 0
      %2386 = vmatprep.subr.bf16.mxu0 0
      %2387 = vmatpush1.bf16.msra.mxu0 0
      %2388 = vmatprep.subr.bf16.mxu0 0
      %2389 = vmatpush1.bf16.msra.mxu0 0
      %2390 = vmatprep.mubr.bf16.mxu0 0
      %2391 = vmatmul.mubr.bf16.gmra.mrb[0].mxu0 %v2296
      %v2392 = vpop.f32.mrb[0].mxu0
      %v2393 = vadd.f32 0.0, %v2392
      %v2394 = vpop.f32.mrb[0].mxu0
      %v2395 = vpop.f32.mrb[0].mxu0
      %v2396 = vadd.f32 0.0, %v2395
      %v2397 = vpop.f32.mrb[0].mxu0
      %2398 = vmatprep.mubr.bf16.mxu0 0
      %2399 = vmatmul.mubr.bf16.gmra.mrb[0].mxu0 %v2298
      %v2400 = vpop.f32.mrb[0].mxu0
      %v2401 = vadd.f32 0.0, %v2400
      %v2402 = vpop.f32.mrb[0].mxu0
      %v2403 = vpop.f32.mrb[0].mxu0
      %v2404 = vadd.f32 0.0, %v2403
      %v2405 = vpop.f32.mrb[0].mxu0
      %2406 = vmatprep.mubr.bf16.mxu0 0
      %2407 = vmatmul.mubr.bf16.gmra.mrb[0].mxu0 %v2300
      %v2408 = vpop.f32.mrb[0].mxu0
      %v2409 = vadd.f32 0.0, %v2408
      %v2410 = vpop.f32.mrb[0].mxu0
      %v2411 = vpop.f32.mrb[0].mxu0
      %v2412 = vadd.f32 0.0, %v2411
      %v2413 = vpop.f32.mrb[0].mxu0
      %2414 = vmatprep.mubr.bf16.mxu0 0
      %2415 = vmatmul.mubr.bf16.gmra.mrb[0].mxu0 %v2302
      %v2416 = vpop.f32.mrb[0].mxu0
      %v2417 = vadd.f32 0.0, %v2416
      %v2418 = vpop.f32.mrb[0].mxu0
      %v2419 = vpop.f32.mrb[0].mxu0
      %v2420 = vadd.f32 0.0, %v2419
      %v2421 = vpop.f32.mrb[0].mxu0
      %2422 = vmatprep.mubr.bf16.mxu0 0
      %2423 = vmatmul.mubr.bf16.gmra.mrb[0].mxu0 %v2304
      %v2424 = vpop.f32.mrb[0].mxu0
      %v2425 = vadd.f32 0.0, %v2424
      %v2426 = vpop.f32.mrb[0].mxu0
      %v2427 = vpop.f32.mrb[0].mxu0
      %v2428 = vadd.f32 0.0, %v2427
      %v2429 = vpop.f32.mrb[0].mxu0
      %2430 = vdwg.mxu0
      %v2431 = vadd.f32 %v2227, %v2393
      %v2432 = vadd.f32 %v2228, %v2396
      %v2433 = vadd.f32 %v2229, %v2401
      %v2434 = vadd.f32 %v2230, %v2404
      %v2435 = vadd.f32 %v2231, %v2409
      %v2436 = vadd.f32 %v2232, %v2412
      %v2437 = vadd.f32 %v2233, %v2417
      %v2438 = vadd.f32 %v2234, %v2420
      %v2439 = vadd.f32 %v2235, %v2425
      %v2440 = vadd.f32 %v2236, %v2428
      %2441 = vst [vmem:[#allocation2] sm:$0xff] %v2431
      %2442 = vst [vmem:[#allocation2 + $0x8] sm:$0xff] %v2432
      %2443 = vst [vmem:[#allocation2 + $0x10] sm:$0xff] %v2433
      %2444 = vst [vmem:[#allocation2 + $0x18] sm:$0xff] %v2434
      %2445 = vst [vmem:[#allocation2 + $0x20] sm:$0xff] %v2435
      %2446 = vst [vmem:[#allocation2 + $0x28] sm:$0xff] %v2436
      %2447 = vst [vmem:[#allocation2 + $0x30] sm:$0xff] %v2437
      %2448 = vst [vmem:[#allocation2 + $0x38] sm:$0xff] %v2438
      %2449 = vst [vmem:[#allocation2 + $0x40] sm:$0xff] %v2439
      %2450 = vst [vmem:[#allocation2 + $0x48] sm:$0xff] %v2440
      %v2451 = vld [vmem:[#allocation2] sm:$0xff]
      %v2452 = vld [vmem:[#allocation2 + $0x8] sm:$0xff]
      %v2453 = vld [vmem:[#allocation2 + $0x10] sm:$0xff]
      %v2454 = vld [vmem:[#allocation2 + $0x18] sm:$0xff]
      %v2455 = vld [vmem:[#allocation2 + $0x20] sm:$0xff]
      %v2456 = vld [vmem:[#allocation2 + $0x28] sm:$0xff]
      %v2457 = vld [vmem:[#allocation2 + $0x30] sm:$0xff]
      %v2458 = vld [vmem:[#allocation2 + $0x38] sm:$0xff]
      %v2459 = vld [vmem:[#allocation2 + $0x40] sm:$0xff]
      %v2460 = vld [vmem:[#allocation2 + $0x48] sm:$0xff]
      %v2461 = vld [vmem:[%s2] sm:$0x1]
      %v2463 = vlaneseq
      %v2464 = vshrl.u32 %v2463, 7
      %v2465 = vsub.s32 0, %v2464
      %v2466 = vrot.slane %v2461, %v2465
      %v2468 = vmul.f32 %v2451, %v2466
      %v2469 = vmul.f32 %v2452, %v2466
      %v2470 = vmul.f32 %v2453, %v2466
      %v2471 = vmul.f32 %v2454, %v2466
      %v2472 = vmul.f32 %v2455, %v2466
      %v2473 = vmul.f32 %v2456, %v2466
      %v2474 = vmul.f32 %v2457, %v2466
      %v2475 = vmul.f32 %v2458, %v2466
      %v2476 = vmul.f32 %v2459, %v2466
      %v2477 = vmul.f32 %v2460, %v2466
      %v2478 = vld [vmem:[%s3] sm:$0x1]
      %v2480 = vlaneseq
      %v2481 = vshrl.u32 %v2480, 7
      %v2482 = vsub.s32 0, %v2481
      %v2483 = vrot.slane %v2478, %v2482
      %v2485 = vadd.f32 %v2468, %v2483
      %v2486 = vadd.f32 %v2469, %v2483
      %v2487 = vadd.f32 %v2470, %v2483
      %v2488 = vadd.f32 %v2471, %v2483
      %v2489 = vadd.f32 %v2472, %v2483
      %v2490 = vadd.f32 %v2473, %v2483
      %v2491 = vadd.f32 %v2474, %v2483
      %v2492 = vadd.f32 %v2475, %v2483
      %v2493 = vadd.f32 %v2476, %v2483
      %v2494 = vadd.f32 %v2477, %v2483
      %v2495 = vld [vmem:[%s320] sm:$0xf]
      %v2496 = vld [vmem:[%s320 + $0x4] sm:$0xf]
      %v2497 = vld [vmem:[%s320 + $0x8] sm:$0xf]
      %v2498 = vld [vmem:[%s320 + $0xc] sm:$0xf]
      %v2499 = vld [vmem:[%s320 + $0x10] sm:$0xf]
      %v2500 = vld [vmem:[%s320 + $0x14] sm:$0xf]
      %v2501 = vld [vmem:[%s320 + $0x18] sm:$0xf]
      %v2502 = vld [vmem:[%s320 + $0x1c] sm:$0xf]
      %v2503 = vld [vmem:[%s320 + $0x20] sm:$0xf]
      %v2504 = vld [vmem:[%s320 + $0x24] sm:$0xf]
      %v2505 = vld [vmem:[%s5] sm:$0x3]
      %v2516 = vunpack.c.l.b16 %v2495
      %v2517 = vunpack.c.l.b16 %v2496
      %v2518 = vunpack.c.l.b16 %v2497
      %v2519 = vunpack.c.l.b16 %v2498
      %v2520 = vunpack.c.l.b16 %v2499
      %v2521 = vunpack.c.l.b16 %v2500
      %v2522 = vunpack.c.l.b16 %v2501
      %v2523 = vunpack.c.l.b16 %v2502
      %v2524 = vunpack.c.l.b16 %v2503
      %v2525 = vunpack.c.l.b16 %v2504
      %v2526 = vpack.c.b16 %v2517, %v2516
      %v2527 = vpack.c.b16 %v2519, %v2518
      %v2528 = vpack.c.b16 %v2521, %v2520
      %v2529 = vpack.c.b16 %v2523, %v2522
      %v2530 = vpack.c.b16 %v2525, %v2524
      %vm2531 = vcmask 31744
      %v2533 = vsel %vm2531, %v2526, 0
      %v2536 = vsel %vm2531, %v2527, 0
      %v2539 = vsel %vm2531, %v2528, 0
      %v2542 = vsel %vm2531, %v2529, 0
      %v2545 = vsel %vm2531, %v2530, 0
      %vm2547 = vcmask 1041408
      %v2549 = vsel %vm2547, %v2505, 0
      %2551 = vmatprep.subr.bf16.mxu0 0
      %2552 = vmatpush1.bf16.msra.mxu0 %v2549
      %2553 = vmatprep.subr.bf16.mxu0 0
      %2554 = vmatpush1.bf16.msra.mxu0 0
      %2555 = vmatprep.subr.bf16.mxu0 0
      %2556 = vmatpush1.bf16.msra.mxu0 0
      %2557 = vmatprep.subr.bf16.mxu0 0
      %2558 = vmatpush1.bf16.msra.mxu0 0
      %2559 = vmatprep.subr.bf16.mxu0 0
      %2560 = vmatpush1.bf16.msra.mxu0 0
      %2561 = vmatprep.subr.bf16.mxu0 0
      %2562 = vmatpush1.bf16.msra.mxu0 0
      %2563 = vmatprep.subr.bf16.mxu0 0
      %2564 = vmatpush1.bf16.msra.mxu0 0
      %2565 = vmatprep.subr.bf16.mxu0 0
      %2566 = vmatpush1.bf16.msra.mxu0 0
      %2567 = vmatprep.subr.bf16.mxu0 0
      %2568 = vmatpush1.bf16.msra.mxu0 0
      %2569 = vmatprep.subr.bf16.mxu0 0
      %2570 = vmatpush1.bf16.msra.mxu0 0
      %2571 = vmatprep.subr.bf16.mxu0 0
      %2572 = vmatpush1.bf16.msra.mxu0 0
      %2573 = vmatprep.subr.bf16.mxu0 0
      %2574 = vmatpush1.bf16.msra.mxu0 0
      %2575 = vmatprep.subr.bf16.mxu0 0
      %2576 = vmatpush1.bf16.msra.mxu0 0
      %2577 = vmatprep.subr.bf16.mxu0 0
      %2578 = vmatpush1.bf16.msra.mxu0 0
      %2579 = vmatprep.subr.bf16.mxu0 0
      %2580 = vmatpush1.bf16.msra.mxu0 0
      %2581 = vmatprep.subr.bf16.mxu0 0
      %2582 = vmatpush1.bf16.msra.mxu0 0
      %2583 = vmatprep.mubr.bf16.mxu0 0
      %2584 = vmatmul.mubr.bf16.gmra.mrb[0].mxu0 %v2533
      %v2585 = vpop.f32.mrb[0].mxu0
      %v2586 = vadd.f32 0.0, %v2585
      %v2587 = vpop.f32.mrb[0].mxu0
      %v2588 = vpop.f32.mrb[0].mxu0
      %v2589 = vadd.f32 0.0, %v2588
      %v2590 = vpop.f32.mrb[0].mxu0
      %2591 = vmatprep.mubr.bf16.mxu0 0
      %2592 = vmatmul.mubr.bf16.gmra.mrb[0].mxu0 %v2536
      %v2593 = vpop.f32.mrb[0].mxu0
      %v2594 = vadd.f32 0.0, %v2593
      %v2595 = vpop.f32.mrb[0].mxu0
      %v2596 = vpop.f32.mrb[0].mxu0
      %v2597 = vadd.f32 0.0, %v2596
      %v2598 = vpop.f32.mrb[0].mxu0
      %2599 = vmatprep.mubr.bf16.mxu0 0
      %2600 = vmatmul.mubr.bf16.gmra.mrb[0].mxu0 %v2539
      %v2601 = vpop.f32.mrb[0].mxu0
      %v2602 = vadd.f32 0.0, %v2601
      %v2603 = vpop.f32.mrb[0].mxu0
      %v2604 = vpop.f32.mrb[0].mxu0
      %v2605 = vadd.f32 0.0, %v2604
      %v2606 = vpop.f32.mrb[0].mxu0
      %2607 = vmatprep.mubr.bf16.mxu0 0
      %2608 = vmatmul.mubr.bf16.gmra.mrb[0].mxu0 %v2542
      %v2609 = vpop.f32.mrb[0].mxu0
      %v2610 = vadd.f32 0.0, %v2609
      %v2611 = vpop.f32.mrb[0].mxu0
      %v2612 = vpop.f32.mrb[0].mxu0
      %v2613 = vadd.f32 0.0, %v2612
      %v2614 = vpop.f32.mrb[0].mxu0
      %2615 = vmatprep.mubr.bf16.mxu0 0
      %2616 = vmatmul.mubr.bf16.gmra.mrb[0].mxu0 %v2545
      %v2617 = vpop.f32.mrb[0].mxu0
      %v2618 = vadd.f32 0.0, %v2617
      %v2619 = vpop.f32.mrb[0].mxu0
      %v2620 = vpop.f32.mrb[0].mxu0
      %v2621 = vadd.f32 0.0, %v2620
      %v2622 = vpop.f32.mrb[0].mxu0
      %2623 = vdwg.mxu0
      %v2624 = vld [vmem:[%s6] sm:$0x1]
      %v2626 = vlaneseq
      %v2627 = vshrl.u32 %v2626, 7
      %v2628 = vsub.s32 0, %v2627
      %v2629 = vrot.slane %v2624, %v2628
      %v2631 = vmul.f32 %v2586, %v2629
      %v2632 = vmul.f32 %v2589, %v2629
      %v2633 = vmul.f32 %v2594, %v2629
      %v2634 = vmul.f32 %v2597, %v2629
      %v2635 = vmul.f32 %v2602, %v2629
      %v2636 = vmul.f32 %v2605, %v2629
      %v2637 = vmul.f32 %v2610, %v2629
      %v2638 = vmul.f32 %v2613, %v2629
      %v2639 = vmul.f32 %v2618, %v2629
      %v2640 = vmul.f32 %v2621, %v2629
      %v2641 = vld [vmem:[%s7] sm:$0x1]
      %v2643 = vlaneseq
      %v2644 = vshrl.u32 %v2643, 7
      %v2645 = vsub.s32 0, %v2644
      %v2646 = vrot.slane %v2641, %v2645
      %v2648 = vadd.f32 %v2631, %v2646
      %v2649 = vadd.f32 %v2632, %v2646
      %v2650 = vadd.f32 %v2633, %v2646
      %v2651 = vadd.f32 %v2634, %v2646
      %v2652 = vadd.f32 %v2635, %v2646
      %v2653 = vadd.f32 %v2636, %v2646
      %v2654 = vadd.f32 %v2637, %v2646
      %v2655 = vadd.f32 %v2638, %v2646
      %v2656 = vadd.f32 %v2639, %v2646
      %v2657 = vadd.f32 %v2640, %v2646
      %v2658 = vadd.f32 %v2485, %v2648
      %v2659 = vadd.f32 %v2486, %v2649
      %v2660 = vadd.f32 %v2487, %v2650
      %v2661 = vadd.f32 %v2488, %v2651
      %v2662 = vadd.f32 %v2489, %v2652
      %v2663 = vadd.f32 %v2490, %v2653
      %v2664 = vadd.f32 %v2491, %v2654
      %v2665 = vadd.f32 %v2492, %v2655
      %v2666 = vadd.f32 %v2493, %v2656
      %v2667 = vadd.f32 %v2494, %v2657
      %v2668 = vmax.f32 %v2658, 0.0
      %v2669 = vmax.f32 %v2659, 0.0
      %v2670 = vmax.f32 %v2660, 0.0
      %v2671 = vmax.f32 %v2661, 0.0
      %v2672 = vmax.f32 %v2662, 0.0
      %v2673 = vmax.f32 %v2663, 0.0
      %v2674 = vmax.f32 %v2664, 0.0
      %v2675 = vmax.f32 %v2665, 0.0
      %v2676 = vmax.f32 %v2666, 0.0
      %v2677 = vmax.f32 %v2667, 0.0
      %2678 = vst [vmem:[%s325] sm:$0xff] %v2668
      %2679 = vst [vmem:[%s325 + $0x8] sm:$0xff] %v2669
      %2680 = vst [vmem:[%s325 + $0x10] sm:$0xff] %v2670
      %2681 = vst [vmem:[%s325 + $0x18] sm:$0xff] %v2671
      %2682 = vst [vmem:[%s325 + $0x20] sm:$0xff] %v2672
      %2683 = vst [vmem:[%s325 + $0x28] sm:$0xff] %v2673
      %2684 = vst [vmem:[%s325 + $0x30] sm:$0xff] %v2674
      %2685 = vst [vmem:[%s325 + $0x38] sm:$0xff] %v2675
      %2686 = vst [vmem:[%s325 + $0x40] sm:$0xff] %v2676
      %2687 = vst [vmem:[%s325 + $0x48] sm:$0xff] %v2677
      %p2688 = scmp.lt.s32.totalorder %s19, 1
      %s2689 = scalar_select %p2688, %s19, 1
      %s2690 = smul.addr %s2689, 10
      %s2691 = smul.addr %s2690, 8
      %s2692 = scalar_lea.vmem %s8, %s2691
      // Predicated region
      $region53: #{residual_block_forward.3} parent=51 // pred_check
        %p2693 = pneg %p215
      $region54: #{residual_block_forward.3} parent=51 // pred_check_branch
        %2695 = sbr.rel (%p2693) target = $region56
      $region55: #{residual_block_forward.3} parent=51 // pred_region
        _
      $region56: #{residual_block_forward.3} parent=51 // pred_fallthru
        _
    $region52: #{residual_block_forward.3} parent=5 // pred_fallthru
      _
    %p2696 = scmp.le.s32.totalorder 2, %s14
    // Predicated region
    $region57: #{residual_block_forward.3} parent=5 // pred_check
      %p2697 = pneg %p2696
    $region58: #{residual_block_forward.3} parent=5 // pred_check_branch
      %2699 = sbr.rel (%p2697) target = $region60
    $region59: #{residual_block_forward.3} parent=5 // pred_region
      %s2700 = ssub.s32 %s14, 2
      // Predicated region
      $region61: #{residual_block_forward.3} parent=59 // pred_check
        %p2701 = pneg %p221
      $region62: #{residual_block_forward.3} parent=59 // pred_check_branch
        %2703 = sbr.rel (%p2701) target = $region64
      $region63: #{residual_block_forward.3} parent=59 // pred_region
        %p2704 = scmp.lt.s32.totalorder %s20, 1
        %s2705 = scalar_select %p2704, %s20, 1
        %s2706 = smul.addr %s2705, 10
        %s2707 = smul.addr %s2706, 8
        %s2708 = scalar_lea.vmem %s8, %s2707
      $region64: #{residual_block_forward.3} parent=59 // pred_fallthru
        _
    $region60: #{residual_block_forward.3} parent=5 // pred_fallthru
      _
  $region6: #{residual_block_forward.3} parent=0 // loop_footer
    %s18 = sadd.s32 1, %s14
  $region7: #{residual_block_forward.3} parent=0 // loop_footer_branch
    %13 = sbr.rel target = $region3
  $region8: #{residual_block_forward.3} parent=0 // loop_exit
    _

</llo_original>
